<compile_context>
chip_gen: v7x
topology: tpu7x:2x2x1
jax: 0.10.0
libtpu: 0.0.40
codegen_flags: <defaults>
</compile_context>

<pallas_src>
import functools

import jax
import jax.numpy as jnp
from jax.experimental import pallas as pl
from jax.experimental.pallas import tpu as pltpu


# ------------------------------- small helpers ------------------------------

def _round_up(x, m):
    return ((x + m - 1) // m) * m


def _pad2d(x, rows, cols):
    r, c = x.shape
    if r == rows and c == cols:
        return x
    return jnp.pad(x, ((0, rows - r), (0, cols - c)))


_VMEM_LIMIT = 32 * 1024 * 1024  # explicit scoped-VMEM budget (safe on v5e/v6e/v7x)


# ----------------------------- Pallas kernels ------------------------------

def _matmul_bias_stats_kernel(a_ref, b_ref, bias_ref, o_ref, stats_ref, acc_ref,
                              *, m_actual, tm):
    """Tiled y = a @ b + bias with fused per-channel (sum, sum-of-squares) stats.

    grid = (N tiles, M tiles, K tiles); K is the reduction (innermost, 'arbitrary').
    stats output block is resident across the M and K axes and accumulated at k==last.
    Padded rows (>= m_actual) are masked out of the statistics.
    """
    i = pl.program_id(1)          # M-tile index
    k = pl.program_id(2)          # K-tile index
    nk = pl.num_programs(2)

    @pl.when(k == 0)
    def _():
        acc_ref[...] = jnp.zeros_like(acc_ref)

    @pl.when(jnp.logical_and(i == 0, k == 0))
    def _():
        stats_ref[...] = jnp.zeros_like(stats_ref)

    acc_ref[...] += jnp.dot(a_ref[...], b_ref[...],
                            preferred_element_type=jnp.float32)

    @pl.when(k == nk - 1)
    def _():
        y = acc_ref[...] + bias_ref[...]                       # f32 epilogue (v5e-safe)
        o_ref[...] = y.astype(o_ref.dtype)
        row = jax.lax.broadcasted_iota(jnp.int32, y.shape, 0) + i * tm
        valid = (row < m_actual).astype(jnp.float32)           # mask padded rows
        yv = y * valid
        ssum = jnp.sum(yv, axis=0, keepdims=True)
        ssq = jnp.sum(yv * y, axis=0, keepdims=True)
        stats_ref[...] += jnp.concatenate([ssum, ssq], axis=0)


def _bn_apply_relu_kernel(y_ref, stats_ref, gamma_ref, beta_ref, o_ref, *, inv_count):
    """Apply BatchNorm (training-mode batch stats from fused sums) + affine + ReLU."""
    mean = stats_ref[0:1, :] * inv_count
    ex2 = stats_ref[1:2, :] * inv_count
    var = ex2 - mean * mean
    scale = gamma_ref[...] * jax.lax.rsqrt(var + 1e-5)
    shift = beta_ref[...] - mean * scale
    o_ref[...] = jnp.maximum(y_ref[...] * scale + shift, 0.0)


# ------------------------------ kernel wrappers -----------------------------

def _matmul_bias_stats(a, b, bias):
    """(M,K) @ (K,N) + (N,) -> padded (Mp,Np) f32 output + (2,Np) per-channel stats."""
    M, K = a.shape
    K2, N = b.shape
    assert K == K2

    tm = min(_round_up(M, 8), 256)
    tn = min(_round_up(N, 128), 256)
    tk = min(_round_up(K, 128), 512)
    Mp, Np, Kp = _round_up(M, tm), _round_up(N, tn), _round_up(K, tk)

    a_p = _pad2d(a, Mp, Kp).astype(jnp.bfloat16)          # bf16 MXU inputs
    b_p = _pad2d(b, Kp, Np).astype(jnp.bfloat16)
    bias_p = _pad2d(bias.reshape(1, -1).astype(jnp.float32), 1, Np)

    grid = (Np // tn, Mp // tm, Kp // tk)
    kernel = functools.partial(_matmul_bias_stats_kernel, m_actual=M, tm=tm)

    y_pad, stats = pl.pallas_call(
        kernel,
        out_shape=(jax.ShapeDtypeStruct((Mp, Np), jnp.float32),
                   jax.ShapeDtypeStruct((2, Np), jnp.float32)),
        grid_spec=pltpu.PrefetchScalarGridSpec(
            num_scalar_prefetch=0,
            grid=grid,
            in_specs=[
                pl.BlockSpec((tm, tk), lambda j, i, k: (i, k)),
                pl.BlockSpec((tk, tn), lambda j, i, k: (k, j)),
                pl.BlockSpec((1, tn), lambda j, i, k: (0, j)),
            ],
            out_specs=(
                pl.BlockSpec((tm, tn), lambda j, i, k: (i, j)),
                pl.BlockSpec((2, tn), lambda j, i, k: (0, j)),
            ),
            scratch_shapes=[pltpu.VMEM((tm, tn), jnp.float32)],
        ),
        compiler_params=pltpu.CompilerParams(
            dimension_semantics=("parallel", "arbitrary", "arbitrary"),
            vmem_limit_bytes=_VMEM_LIMIT,
        ),
    )(a_p, b_p, bias_p)
    return y_pad, stats, (M, N)


def _bn_apply_relu(y_pad, stats, gamma, beta, m_actual, n_actual):
    """Tiled (over rows) BatchNorm normalize + affine + ReLU from fused batch stats."""
    Mp, Np = y_pad.shape
    tm = min(Mp, 256)                       # Mp is either <=256 or a multiple of 256
    grid = (Mp // tm,)
    g_p = _pad2d(gamma.reshape(1, -1).astype(jnp.float32), 1, Np)
    b_p = _pad2d(beta.reshape(1, -1).astype(jnp.float32), 1, Np)
    kernel = functools.partial(_bn_apply_relu_kernel, inv_count=1.0 / float(m_actual))

    out = pl.pallas_call(
        kernel,
        out_shape=jax.ShapeDtypeStruct((Mp, Np), jnp.float32),
        grid=grid,
        in_specs=[
            pl.BlockSpec((tm, Np), lambda i: (i, 0)),
            pl.BlockSpec((2, Np), lambda i: (0, 0)),
            pl.BlockSpec((1, Np), lambda i: (0, 0)),
            pl.BlockSpec((1, Np), lambda i: (0, 0)),
        ],
        out_specs=pl.BlockSpec((tm, Np), lambda i: (i, 0)),
        compiler_params=pltpu.CompilerParams(
            dimension_semantics=("parallel",),
            vmem_limit_bytes=_VMEM_LIMIT,
        ),
    )(y_pad, stats, g_p, b_p)
    return out[:m_actual, :n_actual]


def matmul_bias(a, b, bias):
    """Plain tiled matmul + bias (final linear layers; stats output ignored)."""
    y_pad, _, (M, N) = _matmul_bias_stats(a, b, bias)
    return y_pad[:M, :N]


def matmul_bias_bn_relu(a, b, bias, gamma, beta):
    """Fused Linear/Conv-matmul + bias + BatchNorm(batch stats) + ReLU."""
    y_pad, stats, (M, N) = _matmul_bias_stats(a, b, bias)
    return _bn_apply_relu(y_pad, stats, gamma, beta, M, N)


# ------------------------------- model pieces -------------------------------

_K = 5          # conv kernel size
_STRIDE = 2
_PAD = 2


def conv_bn_relu(x, w, b, gamma, beta):
    """5x5 stride-2 pad-2 conv (im2col + tiled Pallas matmul) + BatchNorm2d + ReLU.

    x: (N, H, W, Cin) NHWC;  w: (K*K*Cin, Cout);  b/gamma/beta: (Cout,)
    returns (N, H//2, W//2, Cout)
    """
    N, H, W, Cin = x.shape
    OH, OW = H // _STRIDE, W // _STRIDE
    xp = jnp.pad(x, ((0, 0), (_PAD, _PAD), (_PAD, _PAD), (0, 0))).astype(jnp.bfloat16)
    # TODO(synk): replace HBM-materialized im2col with in-kernel accumulation over the 25
    # (kh,kw) taps (BlockSpec cannot express the stride-2 window directly); bf16 patches
    # halve the intermediate HBM traffic in the meantime.
    patches = []
    for kh in range(_K):
        for kw in range(_K):
            patches.append(xp[:, kh:kh + _STRIDE * OH:_STRIDE,
                               kw:kw + _STRIDE * OW:_STRIDE, :])
    pat = jnp.stack(patches, axis=3)                  # (N, OH, OW, K*K, Cin), bf16
    a = pat.reshape(N * OH * OW, _K * _K * Cin)       # im2col matrix
    y = matmul_bias_bn_relu(a, w, b, gamma, beta)     # fused matmul+bias+BN-stats, BN+ReLU
    return y.reshape(N, OH, OW, -1)


def encoder_forward(x, p):
    n = x.shape[0]
    h = conv_bn_relu(x, p["w1"], p["b1"], p["g1"], p["bt1"])
    h = conv_bn_relu(h, p["w2"], p["b2"], p["g2"], p["bt2"])
    h = conv_bn_relu(h, p["w3"], p["b3"], p["g3"], p["bt3"])
    h_flat = h.reshape(n, -1)   # flatten (HWC order; weight init absorbs the permutation)

    # --- merged heads: one matmul over h_flat for both [mean | logvar] first layers ---
    hidden = p["mw1"].shape[1]
    out_ch = p["mw2"].shape[1]
    w1c = jnp.concatenate([p["mw1"], p["lw1"]], axis=1)     # (flat, 2*hidden)
    b1c = jnp.concatenate([p["mb1"], p["lb1"]], axis=0)
    g1c = jnp.concatenate([p["mg"], p["lg"]], axis=0)
    bt1c = jnp.concatenate([p["mbt"], p["lbt"]], axis=0)
    h1 = matmul_bias_bn_relu(h_flat, w1c, b1c, g1c, bt1c)   # (n, 2*hidden)
    # BatchNorm1d is per-feature over the batch, so concatenating features is exact.

    # --- block-diagonal second linear: one kernel produces [mean | logvar] ---
    w2blk = jnp.zeros((2 * hidden, 2 * out_ch), jnp.float32)
    w2blk = w2blk.at[:hidden, :out_ch].set(p["mw2"])
    w2blk = w2blk.at[hidden:, out_ch:].set(p["lw2"])
    b2c = jnp.concatenate([p["mb2"], p["lb2"]], axis=0)
    out = matmul_bias(h1, w2blk, b2c)                        # (n, 2*out_ch)
    return out[:, :out_ch], out[:, out_ch:]


# --------------------------- deterministic params ---------------------------

def init_params(key, input_channels, output_channels, rep, hidden, flat_dim):
    ks = jax.random.split(key, 20)

    def w(k, shape, scale=0.1):
        return scale * jax.random.normal(k, shape, dtype=jnp.float32)

    c1, c2, c3 = rep, rep * 2, rep * 4
    p = {}
    # conv stack  (weights stored as (K*K*Cin, Cout) for the im2col matmul)
    p["w1"], p["b1"] = w(ks[0], (_K * _K * input_channels, c1)), w(ks[1], (c1,))
    p["g1"], p["bt1"] = 1.0 + w(ks[2], (c1,)), w(ks[3], (c1,), 0.05)
    p["w2"], p["b2"] = w(ks[4], (_K * _K * c1, c2)), w(ks[5], (c2,))
    p["g2"], p["bt2"] = 1.0 + w(ks[6], (c2,)), w(ks[7], (c2,), 0.05)
    p["w3"], p["b3"] = w(ks[8], (_K * _K * c2, c3)), w(ks[9], (c3,))
    p["g3"], p["bt3"] = 1.0 + w(ks[10], (c3,)), w(ks[11], (c3,), 0.05)
    # mean head
    p["mw1"], p["mb1"] = w(ks[12], (flat_dim, hidden)), w(ks[13], (hidden,))
    p["mg"], p["mbt"] = 1.0 + w(ks[14], (hidden,)), w(ks[15], (hidden,), 0.05)
    p["mw2"], p["mb2"] = w(ks[16], (hidden, output_channels)), w(ks[17], (output_channels,))
    # logvar head
    p["lw1"], p["lb1"] = w(ks[18], (flat_dim, hidden)), w(ks[19], (hidden,))
    p["lg"], p["lbt"] = 1.0 + w(ks[14], (hidden,)) * 0.5, w(ks[15], (hidden,), 0.03)
    p["lw2"], p["lb2"] = (w(ks[16], (hidden, output_channels)) * 0.5,
                          w(ks[17], (output_channels,)) * 0.5)
    return p


# ----------------------------------- main ------------------------------------

if __name__ == "__main__":
    # Small shapes consistent with the module structure (scaled down from
    # 128x128 / rep=64 / hidden=2048 to keep the example tiny):
    batch = 2
    input_channels = 3
    output_channels = 8
    rep = 8                 # representation_size
    hidden = 64             # stand-in for 2048
    H = W = 16              # -> 8 -> 4 -> 2 after three stride-2 convs
    flat_dim = rep * 4 * (H // 8) * (W // 8)   # = 128

    key = jax.random.PRNGKey(0)
    kx, kp = jax.random.split(key)
    # layout: NHWC input, equivalent to PyTorch NCHW (batch, 3, 16, 16)
    x = jax.random.normal(kx, (batch, H, W, input_channels), dtype=jnp.float32)
    params = init_params(kp, input_channels, output_channels, rep, hidden, flat_dim)

    fwd = jax.jit(encoder_forward)
    mean, logvar = fwd(x, params)
    jax.block_until_ready((mean, logvar))
    assert mean.shape == (batch, output_channels)
    assert logvar.shape == (batch, output_channels)
    print("KERNEL_OK")
</pallas_src>

<mosaic_0001>
module attributes {stable_mosaic.version = 11 : i64} {
  func.func @_bn_apply_relu_kernel(%arg0: i32, %arg1: memref<128x128xf32, #tpu.memory_space<vmem>>, %arg2: memref<2x128xf32, #tpu.memory_space<vmem>>, %arg3: memref<1x128xf32, #tpu.memory_space<vmem>>, %arg4: memref<1x128xf32, #tpu.memory_space<vmem>>, %arg5: memref<128x128xf32, #tpu.memory_space<vmem>>) attributes {dimension_semantics = [#tpu.dimension_semantics<parallel>], iteration_bounds = array<i64: 1>, scalar_prefetch = 0 : i64, scratch_operands = 0 : i64, tpu.core_type = #tpu.core_type<tc>, window_params = [{transform_indices = @transform_0, window_bounds = array<i64: 128, 128>}, {pipeline_mode = #tpu.pipeline_mode<synchronous>, transform_indices = @transform_1, window_bounds = array<i64: 2, 128>}, {pipeline_mode = #tpu.pipeline_mode<synchronous>, transform_indices = @transform_2, window_bounds = array<i64: 1, 128>}, {pipeline_mode = #tpu.pipeline_mode<synchronous>, transform_indices = @transform_3, window_bounds = array<i64: 1, 128>}, {transform_indices = @transform_4, window_bounds = array<i64: 128, 128>}]} {
    %c0 = arith.constant 0 : index
    %c0_0 = arith.constant 0 : index
    %0 = vector.load %arg2[%c0, %c0_0] : memref<2x128xf32, #tpu.memory_space<vmem>>, vector<1x128xf32>
    %cst = arith.constant 7.812500e-03 : f32
    %1 = vector.broadcast %cst : f32 to vector<1x128xf32>
    %2 = arith.mulf %0, %1 : vector<1x128xf32>
    %c1 = arith.constant 1 : index
    %c0_1 = arith.constant 0 : index
    %3 = vector.load %arg2[%c1, %c0_1] : memref<2x128xf32, #tpu.memory_space<vmem>>, vector<1x128xf32>
    %cst_2 = arith.constant 7.812500e-03 : f32
    %4 = vector.broadcast %cst_2 : f32 to vector<1x128xf32>
    %5 = arith.mulf %3, %4 : vector<1x128xf32>
    %6 = arith.mulf %2, %2 : vector<1x128xf32>
    %7 = arith.subf %5, %6 : vector<1x128xf32>
    %c0_3 = arith.constant 0 : index
    %c0_4 = arith.constant 0 : index
    %8 = vector.load %arg3[%c0_3, %c0_4] : memref<1x128xf32, #tpu.memory_space<vmem>>, vector<1x128xf32>
    %cst_5 = arith.constant 9.99999974E-6 : f32
    %9 = vector.broadcast %cst_5 : f32 to vector<1x128xf32>
    %10 = arith.addf %7, %9 : vector<1x128xf32>
    %11 = math.rsqrt %10 : vector<1x128xf32>
    %12 = arith.mulf %8, %11 : vector<1x128xf32>
    %c0_6 = arith.constant 0 : index
    %c0_7 = arith.constant 0 : index
    %13 = vector.load %arg4[%c0_6, %c0_7] : memref<1x128xf32, #tpu.memory_space<vmem>>, vector<1x128xf32>
    %14 = arith.mulf %2, %12 : vector<1x128xf32>
    %15 = arith.subf %13, %14 : vector<1x128xf32>
    %c0_8 = arith.constant 0 : index
    %c0_9 = arith.constant 0 : index
    %16 = vector.load %arg1[%c0_8, %c0_9] : memref<128x128xf32, #tpu.memory_space<vmem>>, vector<128x128xf32>
    %17 = vector.broadcast %12 : vector<1x128xf32> to vector<128x128xf32>
    %18 = arith.mulf %16, %17 : vector<128x128xf32>
    %19 = vector.broadcast %15 : vector<1x128xf32> to vector<128x128xf32>
    %20 = arith.addf %18, %19 : vector<128x128xf32>
    %cst_10 = arith.constant 0.000000e+00 : f32
    %21 = vector.broadcast %cst_10 : f32 to vector<128x128xf32>
    %22 = arith.maximumf %20, %21 : vector<128x128xf32>
    %c0_11 = arith.constant 0 : index
    %c0_12 = arith.constant 0 : index
    %23 = vector.load %arg5[%c0_11, %c0_12] : memref<128x128xf32, #tpu.memory_space<vmem>>, vector<128x128xf32>
    tpu.vector_store %arg5[%c0_11, %c0_12], %22 {strides = array<i32>} : memref<128x128xf32, #tpu.memory_space<vmem>>, vector<128x128xf32>,
    return
  }
  func.func @transform_0(%arg0: i32) -> (i32, i32) {
    %c0_i32 = arith.constant 0 : i32
    %c0_i32_0 = arith.constant 0 : i32
    return %arg0, %c0_i32 : i32, i32
  }
  func.func @transform_1(%arg0: i32) -> (i32, i32) {
    %c0_i32 = arith.constant 0 : i32
    %c0_i32_0 = arith.constant 0 : i32
    %c0_i32_1 = arith.constant 0 : i32
    return %c0_i32, %c0_i32_0 : i32, i32
  }
  func.func @transform_2(%arg0: i32) -> (i32, i32) {
    %c0_i32 = arith.constant 0 : i32
    %c0_i32_0 = arith.constant 0 : i32
    %c0_i32_1 = arith.constant 0 : i32
    return %c0_i32, %c0_i32_0 : i32, i32
  }
  func.func @transform_3(%arg0: i32) -> (i32, i32) {
    %c0_i32 = arith.constant 0 : i32
    %c0_i32_0 = arith.constant 0 : i32
    %c0_i32_1 = arith.constant 0 : i32
    return %c0_i32, %c0_i32_0 : i32, i32
  }
  func.func @transform_4(%arg0: i32) -> (i32, i32) {
    %c0_i32 = arith.constant 0 : i32
    %c0_i32_0 = arith.constant 0 : i32
    return %arg0, %c0_i32 : i32, i32
  }
}

module attributes {stable_mosaic.version = 11 : i64} {
  func.func @_matmul_bias_stats_kernel(%arg0: i32, %arg1: i32, %arg2: i32, %arg3: memref<128x128xbf16, #tpu.memory_space<vmem>>, %arg4: memref<128x128xbf16, #tpu.memory_space<vmem>>, %arg5: memref<1x128xf32, #tpu.memory_space<vmem>>, %arg6: memref<128x128xf32, #tpu.memory_space<vmem>>, %arg7: memref<2x128xf32, #tpu.memory_space<vmem>>, %arg8: memref<128x128xf32, #tpu.memory_space<vmem>>) attributes {dimension_semantics = [#tpu.dimension_semantics<parallel>, #tpu.dimension_semantics<arbitrary>, #tpu.dimension_semantics<arbitrary>], iteration_bounds = array<i64: 1, 1, 1>, scalar_prefetch = 0 : i64, scratch_operands = 1 : i64, tpu.core_type = #tpu.core_type<tc>, window_params = [{transform_indices = @transform_0, window_bounds = array<i64: 128, 128>}, {transform_indices = @transform_1, window_bounds = array<i64: 128, 128>}, {transform_indices = @transform_2, window_bounds = array<i64: 1, 128>}, {transform_indices = @transform_3, window_bounds = array<i64: 128, 128>}, {transform_indices = @transform_4, window_bounds = array<i64: 2, 128>}]} {
    %c0_i32 = arith.constant 0 : i32
    %0 = arith.cmpi eq, %arg2, %c0_i32 : i32
    %1 = arith.extui %0 : i1 to i32
    %c0_i32_0 = arith.constant 0 : i32
    %2 = arith.cmpi ne, %1, %c0_i32_0 : i32
    scf.if %2 {
      %cst_13 = arith.constant 0.000000e+00 : f32
      %17 = vector.broadcast %cst_13 : f32 to vector<128x128xf32>
      %c0_14 = arith.constant 0 : index
      %c0_15 = arith.constant 0 : index
      %18 = vector.load %arg8[%c0_14, %c0_15] : memref<128x128xf32, #tpu.memory_space<vmem>>, vector<128x128xf32>
      tpu.vector_store %arg8[%c0_14, %c0_15], %17 {strides = array<i32>} : memref<128x128xf32, #tpu.memory_space<vmem>>, vector<128x128xf32>,
    } else {
    }
    %c0_i32_1 = arith.constant 0 : i32
    %3 = arith.cmpi eq, %arg1, %c0_i32_1 : i32
    %c0_i32_2 = arith.constant 0 : i32
    %4 = arith.cmpi eq, %arg2, %c0_i32_2 : i32
    %5 = arith.andi %3, %4 : i1
    %6 = arith.extui %5 : i1 to i32
    %c0_i32_3 = arith.constant 0 : i32
    %7 = arith.cmpi ne, %6, %c0_i32_3 : i32
    scf.if %7 {
      %cst_13 = arith.constant 0.000000e+00 : f32
      %17 = vector.broadcast %cst_13 : f32 to vector<2x128xf32>
      %c0_14 = arith.constant 0 : index
      %c0_15 = arith.constant 0 : index
      %18 = vector.load %arg7[%c0_14, %c0_15] : memref<2x128xf32, #tpu.memory_space<vmem>>, vector<2x128xf32>
      tpu.vector_store %arg7[%c0_14, %c0_15], %17 {strides = array<i32>} : memref<2x128xf32, #tpu.memory_space<vmem>>, vector<2x128xf32>,
    } else {
    }
    %c0 = arith.constant 0 : index
    %c0_4 = arith.constant 0 : index
    %8 = vector.load %arg8[%c0, %c0_4] : memref<128x128xf32, #tpu.memory_space<vmem>>, vector<128x128xf32>
    %c0_5 = arith.constant 0 : index
    %c0_6 = arith.constant 0 : index
    %9 = vector.load %arg3[%c0_5, %c0_6] : memref<128x128xbf16, #tpu.memory_space<vmem>>, vector<128x128xbf16>
    %c0_7 = arith.constant 0 : index
    %c0_8 = arith.constant 0 : index
    %10 = vector.load %arg4[%c0_7, %c0_8] : memref<128x128xbf16, #tpu.memory_space<vmem>>, vector<128x128xbf16>
    %cst = arith.constant dense<0.000000e+00> : vector<128x128xf32>
    %11 = tpu.matmul %9, %10, %cst {dimension_numbers = #tpu.dot_dimension_numbers<[1], [0], [0], [1], [0, 0, 1, 1], [], []>} : vector<128x128xbf16>, vector<128x128xbf16>, vector<128x128xf32> -> vector<128x128xf32>
    %12 = arith.addf %8, %11 : vector<128x128xf32>
    %c0_9 = arith.constant 0 : index
    %c0_10 = arith.constant 0 : index
    %13 = vector.load %arg8[%c0_9, %c0_10] : memref<128x128xf32, #tpu.memory_space<vmem>>, vector<128x128xf32>
    tpu.vector_store %arg8[%c0_9, %c0_10], %12 {strides = array<i32>} : memref<128x128xf32, #tpu.memory_space<vmem>>, vector<128x128xf32>,
    %c0_i32_11 = arith.constant 0 : i32
    %14 = arith.cmpi eq, %arg2, %c0_i32_11 : i32
    %15 = arith.extui %14 : i1 to i32
    %c0_i32_12 = arith.constant 0 : i32
    %16 = arith.cmpi ne, %15, %c0_i32_12 : i32
    scf.if %16 {
      %c0_13 = arith.constant 0 : index
      %c0_14 = arith.constant 0 : index
      %17 = vector.load %arg8[%c0_13, %c0_14] : memref<128x128xf32, #tpu.memory_space<vmem>>, vector<128x128xf32>
      %c0_15 = arith.constant 0 : index
      %c0_16 = arith.constant 0 : index
      %18 = vector.load %arg5[%c0_15, %c0_16] : memref<1x128xf32, #tpu.memory_space<vmem>>, vector<1x128xf32>
      %19 = vector.broadcast %18 : vector<1x128xf32> to vector<128x128xf32>
      %20 = arith.addf %17, %19 : vector<128x128xf32>
      %c0_17 = arith.constant 0 : index
      %c0_18 = arith.constant 0 : index
      %21 = vector.load %arg6[%c0_17, %c0_18] : memref<128x128xf32, #tpu.memory_space<vmem>>, vector<128x128xf32>
      tpu.vector_store %arg6[%c0_17, %c0_18], %20 {strides = array<i32>} : memref<128x128xf32, #tpu.memory_space<vmem>>, vector<128x128xf32>,
      %22 = tpu.iota {dimensions = array<i32: 0>} : vector<128x128xi32>
      %c128_i32 = arith.constant 128 : i32
      %23 = arith.muli %arg1, %c128_i32 : i32
      %24 = vector.broadcast %23 : i32 to vector<128x128xi32>
      %25 = arith.addi %22, %24 : vector<128x128xi32>
      %c128_i32_19 = arith.constant 128 : i32
      %26 = vector.broadcast %c128_i32_19 : i32 to vector<128x128xi32>
      %27 = arith.cmpi slt, %25, %26 : vector<128x128xi32>
      %28 = arith.extui %27 : vector<128x128xi1> to vector<128x128xi32>
      %29 = arith.sitofp %28 : vector<128x128xi32> to vector<128x128xf32>
      %30 = arith.mulf %20, %29 : vector<128x128xf32>
      %cst_20 = arith.constant dense<0.000000e+00> : vector<128xf32>
      %31 = vector.multi_reduction <add>, %30, %cst_20 [0] : vector<128x128xf32> to vector<128xf32>
      %32 = vector.shape_cast %31 : vector<128xf32> to vector<1x128xf32>
      %33 = arith.mulf %30, %20 : vector<128x128xf32>
      %cst_21 = arith.constant dense<0.000000e+00> : vector<128xf32>
      %34 = vector.multi_reduction <add>, %33, %cst_21 [0] : vector<128x128xf32> to vector<128xf32>
      %35 = vector.shape_cast %34 : vector<128xf32> to vector<1x128xf32>
      %c0_22 = arith.constant 0 : index
      %c0_23 = arith.constant 0 : index
      %36 = vector.load %arg7[%c0_22, %c0_23] : memref<2x128xf32, #tpu.memory_space<vmem>>, vector<2x128xf32>
      %37 = tpu.concatenate %32, %35 in 0 : vector<1x128xf32>, vector<1x128xf32> -> vector<2x128xf32>
      %38 = arith.addf %36, %37 : vector<2x128xf32>
      %c0_24 = arith.constant 0 : index
      %c0_25 = arith.constant 0 : index
      %39 = vector.load %arg7[%c0_24, %c0_25] : memref<2x128xf32, #tpu.memory_space<vmem>>, vector<2x128xf32>
      tpu.vector_store %arg7[%c0_24, %c0_25], %38 {strides = array<i32>} : memref<2x128xf32, #tpu.memory_space<vmem>>, vector<2x128xf32>,
    } else {
    }
    return
  }
  func.func @transform_0(%arg0: i32, %arg1: i32, %arg2: i32) -> (i32, i32) {
    %c0_i32 = arith.constant 0 : i32
    return %arg1, %arg2 : i32, i32
  }
  func.func @transform_1(%arg0: i32, %arg1: i32, %arg2: i32) -> (i32, i32) {
    %c0_i32 = arith.constant 0 : i32
    return %arg2, %arg0 : i32, i32
  }
  func.func @transform_2(%arg0: i32, %arg1: i32, %arg2: i32) -> (i32, i32) {
    %c0_i32 = arith.constant 0 : i32
    %c0_i32_0 = arith.constant 0 : i32
    return %c0_i32, %arg0 : i32, i32
  }
  func.func @transform_3(%arg0: i32, %arg1: i32, %arg2: i32) -> (i32, i32) {
    %c0_i32 = arith.constant 0 : i32
    return %arg1, %arg0 : i32, i32
  }
  func.func @transform_4(%arg0: i32, %arg1: i32, %arg2: i32) -> (i32, i32) {
    %c0_i32 = arith.constant 0 : i32
    %c0_i32_0 = arith.constant 0 : i32
    return %c0_i32, %arg0 : i32, i32
  }
}

module attributes {stable_mosaic.version = 11 : i64} {
  func.func @_matmul_bias_stats_kernel(%arg0: i32, %arg1: i32, %arg2: i32, %arg3: memref<32x256xbf16, #tpu.memory_space<vmem>>, %arg4: memref<256x128xbf16, #tpu.memory_space<vmem>>, %arg5: memref<1x128xf32, #tpu.memory_space<vmem>>, %arg6: memref<32x128xf32, #tpu.memory_space<vmem>>, %arg7: memref<2x128xf32, #tpu.memory_space<vmem>>, %arg8: memref<32x128xf32, #tpu.memory_space<vmem>>) attributes {dimension_semantics = [#tpu.dimension_semantics<parallel>, #tpu.dimension_semantics<arbitrary>, #tpu.dimension_semantics<arbitrary>], iteration_bounds = array<i64: 1, 1, 1>, scalar_prefetch = 0 : i64, scratch_operands = 1 : i64, tpu.core_type = #tpu.core_type<tc>, window_params = [{transform_indices = @transform_0, window_bounds = array<i64: 32, 256>}, {transform_indices = @transform_1, window_bounds = array<i64: 256, 128>}, {transform_indices = @transform_2, window_bounds = array<i64: 1, 128>}, {transform_indices = @transform_3, window_bounds = array<i64: 32, 128>}, {transform_indices = @transform_4, window_bounds = array<i64: 2, 128>}]} {
    %c0_i32 = arith.constant 0 : i32
    %0 = arith.cmpi eq, %arg2, %c0_i32 : i32
    %1 = arith.extui %0 : i1 to i32
    %c0_i32_0 = arith.constant 0 : i32
    %2 = arith.cmpi ne, %1, %c0_i32_0 : i32
    scf.if %2 {
      %cst_13 = arith.constant 0.000000e+00 : f32
      %17 = vector.broadcast %cst_13 : f32 to vector<32x128xf32>
      %c0_14 = arith.constant 0 : index
      %c0_15 = arith.constant 0 : index
      %18 = vector.load %arg8[%c0_14, %c0_15] : memref<32x128xf32, #tpu.memory_space<vmem>>, vector<32x128xf32>
      tpu.vector_store %arg8[%c0_14, %c0_15], %17 {strides = array<i32>} : memref<32x128xf32, #tpu.memory_space<vmem>>, vector<32x128xf32>,
    } else {
    }
    %c0_i32_1 = arith.constant 0 : i32
    %3 = arith.cmpi eq, %arg1, %c0_i32_1 : i32
    %c0_i32_2 = arith.constant 0 : i32
    %4 = arith.cmpi eq, %arg2, %c0_i32_2 : i32
    %5 = arith.andi %3, %4 : i1
    %6 = arith.extui %5 : i1 to i32
    %c0_i32_3 = arith.constant 0 : i32
    %7 = arith.cmpi ne, %6, %c0_i32_3 : i32
    scf.if %7 {
      %cst_13 = arith.constant 0.000000e+00 : f32
      %17 = vector.broadcast %cst_13 : f32 to vector<2x128xf32>
      %c0_14 = arith.constant 0 : index
      %c0_15 = arith.constant 0 : index
      %18 = vector.load %arg7[%c0_14, %c0_15] : memref<2x128xf32, #tpu.memory_space<vmem>>, vector<2x128xf32>
      tpu.vector_store %arg7[%c0_14, %c0_15], %17 {strides = array<i32>} : memref<2x128xf32, #tpu.memory_space<vmem>>, vector<2x128xf32>,
    } else {
    }
    %c0 = arith.constant 0 : index
    %c0_4 = arith.constant 0 : index
    %8 = vector.load %arg8[%c0, %c0_4] : memref<32x128xf32, #tpu.memory_space<vmem>>, vector<32x128xf32>
    %c0_5 = arith.constant 0 : index
    %c0_6 = arith.constant 0 : index
    %9 = vector.load %arg3[%c0_5, %c0_6] : memref<32x256xbf16, #tpu.memory_space<vmem>>, vector<32x256xbf16>
    %c0_7 = arith.constant 0 : index
    %c0_8 = arith.constant 0 : index
    %10 = vector.load %arg4[%c0_7, %c0_8] : memref<256x128xbf16, #tpu.memory_space<vmem>>, vector<256x128xbf16>
    %cst = arith.constant dense<0.000000e+00> : vector<32x128xf32>
    %11 = tpu.matmul %9, %10, %cst {dimension_numbers = #tpu.dot_dimension_numbers<[1], [0], [0], [1], [0, 0, 1, 1], [], []>} : vector<32x256xbf16>, vector<256x128xbf16>, vector<32x128xf32> -> vector<32x128xf32>
    %12 = arith.addf %8, %11 : vector<32x128xf32>
    %c0_9 = arith.constant 0 : index
    %c0_10 = arith.constant 0 : index
    %13 = vector.load %arg8[%c0_9, %c0_10] : memref<32x128xf32, #tpu.memory_space<vmem>>, vector<32x128xf32>
    tpu.vector_store %arg8[%c0_9, %c0_10], %12 {strides = array<i32>} : memref<32x128xf32, #tpu.memory_space<vmem>>, vector<32x128xf32>,
    %c0_i32_11 = arith.constant 0 : i32
    %14 = arith.cmpi eq, %arg2, %c0_i32_11 : i32
    %15 = arith.extui %14 : i1 to i32
    %c0_i32_12 = arith.constant 0 : i32
    %16 = arith.cmpi ne, %15, %c0_i32_12 : i32
    scf.if %16 {
      %c0_13 = arith.constant 0 : index
      %c0_14 = arith.constant 0 : index
      %17 = vector.load %arg8[%c0_13, %c0_14] : memref<32x128xf32, #tpu.memory_space<vmem>>, vector<32x128xf32>
      %c0_15 = arith.constant 0 : index
      %c0_16 = arith.constant 0 : index
      %18 = vector.load %arg5[%c0_15, %c0_16] : memref<1x128xf32, #tpu.memory_space<vmem>>, vector<1x128xf32>
      %19 = vector.broadcast %18 : vector<1x128xf32> to vector<32x128xf32>
      %20 = arith.addf %17, %19 : vector<32x128xf32>
      %c0_17 = arith.constant 0 : index
      %c0_18 = arith.constant 0 : index
      %21 = vector.load %arg6[%c0_17, %c0_18] : memref<32x128xf32, #tpu.memory_space<vmem>>, vector<32x128xf32>
      tpu.vector_store %arg6[%c0_17, %c0_18], %20 {strides = array<i32>} : memref<32x128xf32, #tpu.memory_space<vmem>>, vector<32x128xf32>,
      %22 = tpu.iota {dimensions = array<i32: 0>} : vector<32x128xi32>
      %c32_i32 = arith.constant 32 : i32
      %23 = arith.muli %arg1, %c32_i32 : i32
      %24 = vector.broadcast %23 : i32 to vector<32x128xi32>
      %25 = arith.addi %22, %24 : vector<32x128xi32>
      %c32_i32_19 = arith.constant 32 : i32
      %26 = vector.broadcast %c32_i32_19 : i32 to vector<32x128xi32>
      %27 = arith.cmpi slt, %25, %26 : vector<32x128xi32>
      %28 = arith.extui %27 : vector<32x128xi1> to vector<32x128xi32>
      %29 = arith.sitofp %28 : vector<32x128xi32> to vector<32x128xf32>
      %30 = arith.mulf %20, %29 : vector<32x128xf32>
      %cst_20 = arith.constant dense<0.000000e+00> : vector<128xf32>
      %31 = vector.multi_reduction <add>, %30, %cst_20 [0] : vector<32x128xf32> to vector<128xf32>
      %32 = vector.shape_cast %31 : vector<128xf32> to vector<1x128xf32>
      %33 = arith.mulf %30, %20 : vector<32x128xf32>
      %cst_21 = arith.constant dense<0.000000e+00> : vector<128xf32>
      %34 = vector.multi_reduction <add>, %33, %cst_21 [0] : vector<32x128xf32> to vector<128xf32>
      %35 = vector.shape_cast %34 : vector<128xf32> to vector<1x128xf32>
      %c0_22 = arith.constant 0 : index
      %c0_23 = arith.constant 0 : index
      %36 = vector.load %arg7[%c0_22, %c0_23] : memref<2x128xf32, #tpu.memory_space<vmem>>, vector<2x128xf32>
      %37 = tpu.concatenate %32, %35 in 0 : vector<1x128xf32>, vector<1x128xf32> -> vector<2x128xf32>
      %38 = arith.addf %36, %37 : vector<2x128xf32>
      %c0_24 = arith.constant 0 : index
      %c0_25 = arith.constant 0 : index
      %39 = vector.load %arg7[%c0_24, %c0_25] : memref<2x128xf32, #tpu.memory_space<vmem>>, vector<2x128xf32>
      tpu.vector_store %arg7[%c0_24, %c0_25], %38 {strides = array<i32>} : memref<2x128xf32, #tpu.memory_space<vmem>>, vector<2x128xf32>,
    } else {
    }
    return
  }
  func.func @transform_0(%arg0: i32, %arg1: i32, %arg2: i32) -> (i32, i32) {
    %c0_i32 = arith.constant 0 : i32
    return %arg1, %arg2 : i32, i32
  }
  func.func @transform_1(%arg0: i32, %arg1: i32, %arg2: i32) -> (i32, i32) {
    %c0_i32 = arith.constant 0 : i32
    return %arg2, %arg0 : i32, i32
  }
  func.func @transform_2(%arg0: i32, %arg1: i32, %arg2: i32) -> (i32, i32) {
    %c0_i32 = arith.constant 0 : i32
    %c0_i32_0 = arith.constant 0 : i32
    return %c0_i32, %arg0 : i32, i32
  }
  func.func @transform_3(%arg0: i32, %arg1: i32, %arg2: i32) -> (i32, i32) {
    %c0_i32 = arith.constant 0 : i32
    return %arg1, %arg0 : i32, i32
  }
  func.func @transform_4(%arg0: i32, %arg1: i32, %arg2: i32) -> (i32, i32) {
    %c0_i32 = arith.constant 0 : i32
    %c0_i32_0 = arith.constant 0 : i32
    return %c0_i32, %arg0 : i32, i32
  }
}

module attributes {stable_mosaic.version = 11 : i64} {
  func.func @_bn_apply_relu_kernel(%arg0: i32, %arg1: memref<32x128xf32, #tpu.memory_space<vmem>>, %arg2: memref<2x128xf32, #tpu.memory_space<vmem>>, %arg3: memref<1x128xf32, #tpu.memory_space<vmem>>, %arg4: memref<1x128xf32, #tpu.memory_space<vmem>>, %arg5: memref<32x128xf32, #tpu.memory_space<vmem>>) attributes {dimension_semantics = [#tpu.dimension_semantics<parallel>], iteration_bounds = array<i64: 1>, scalar_prefetch = 0 : i64, scratch_operands = 0 : i64, tpu.core_type = #tpu.core_type<tc>, window_params = [{transform_indices = @transform_0, window_bounds = array<i64: 32, 128>}, {pipeline_mode = #tpu.pipeline_mode<synchronous>, transform_indices = @transform_1, window_bounds = array<i64: 2, 128>}, {pipeline_mode = #tpu.pipeline_mode<synchronous>, transform_indices = @transform_2, window_bounds = array<i64: 1, 128>}, {pipeline_mode = #tpu.pipeline_mode<synchronous>, transform_indices = @transform_3, window_bounds = array<i64: 1, 128>}, {transform_indices = @transform_4, window_bounds = array<i64: 32, 128>}]} {
    %c0 = arith.constant 0 : index
    %c0_0 = arith.constant 0 : index
    %0 = vector.load %arg2[%c0, %c0_0] : memref<2x128xf32, #tpu.memory_space<vmem>>, vector<1x128xf32>
    %cst = arith.constant 3.125000e-02 : f32
    %1 = vector.broadcast %cst : f32 to vector<1x128xf32>
    %2 = arith.mulf %0, %1 : vector<1x128xf32>
    %c1 = arith.constant 1 : index
    %c0_1 = arith.constant 0 : index
    %3 = vector.load %arg2[%c1, %c0_1] : memref<2x128xf32, #tpu.memory_space<vmem>>, vector<1x128xf32>
    %cst_2 = arith.constant 3.125000e-02 : f32
    %4 = vector.broadcast %cst_2 : f32 to vector<1x128xf32>
    %5 = arith.mulf %3, %4 : vector<1x128xf32>
    %6 = arith.mulf %2, %2 : vector<1x128xf32>
    %7 = arith.subf %5, %6 : vector<1x128xf32>
    %c0_3 = arith.constant 0 : index
    %c0_4 = arith.constant 0 : index
    %8 = vector.load %arg3[%c0_3, %c0_4] : memref<1x128xf32, #tpu.memory_space<vmem>>, vector<1x128xf32>
    %cst_5 = arith.constant 9.99999974E-6 : f32
    %9 = vector.broadcast %cst_5 : f32 to vector<1x128xf32>
    %10 = arith.addf %7, %9 : vector<1x128xf32>
    %11 = math.rsqrt %10 : vector<1x128xf32>
    %12 = arith.mulf %8, %11 : vector<1x128xf32>
    %c0_6 = arith.constant 0 : index
    %c0_7 = arith.constant 0 : index
    %13 = vector.load %arg4[%c0_6, %c0_7] : memref<1x128xf32, #tpu.memory_space<vmem>>, vector<1x128xf32>
    %14 = arith.mulf %2, %12 : vector<1x128xf32>
    %15 = arith.subf %13, %14 : vector<1x128xf32>
    %c0_8 = arith.constant 0 : index
    %c0_9 = arith.constant 0 : index
    %16 = vector.load %arg1[%c0_8, %c0_9] : memref<32x128xf32, #tpu.memory_space<vmem>>, vector<32x128xf32>
    %17 = vector.broadcast %12 : vector<1x128xf32> to vector<32x128xf32>
    %18 = arith.mulf %16, %17 : vector<32x128xf32>
    %19 = vector.broadcast %15 : vector<1x128xf32> to vector<32x128xf32>
    %20 = arith.addf %18, %19 : vector<32x128xf32>
    %cst_10 = arith.constant 0.000000e+00 : f32
    %21 = vector.broadcast %cst_10 : f32 to vector<32x128xf32>
    %22 = arith.maximumf %20, %21 : vector<32x128xf32>
    %c0_11 = arith.constant 0 : index
    %c0_12 = arith.constant 0 : index
    %23 = vector.load %arg5[%c0_11, %c0_12] : memref<32x128xf32, #tpu.memory_space<vmem>>, vector<32x128xf32>
    tpu.vector_store %arg5[%c0_11, %c0_12], %22 {strides = array<i32>} : memref<32x128xf32, #tpu.memory_space<vmem>>, vector<32x128xf32>,
    return
  }
  func.func @transform_0(%arg0: i32) -> (i32, i32) {
    %c0_i32 = arith.constant 0 : i32
    %c0_i32_0 = arith.constant 0 : i32
    return %arg0, %c0_i32 : i32, i32
  }
  func.func @transform_1(%arg0: i32) -> (i32, i32) {
    %c0_i32 = arith.constant 0 : i32
    %c0_i32_0 = arith.constant 0 : i32
    %c0_i32_1 = arith.constant 0 : i32
    return %c0_i32, %c0_i32_0 : i32, i32
  }
  func.func @transform_2(%arg0: i32) -> (i32, i32) {
    %c0_i32 = arith.constant 0 : i32
    %c0_i32_0 = arith.constant 0 : i32
    %c0_i32_1 = arith.constant 0 : i32
    return %c0_i32, %c0_i32_0 : i32, i32
  }
  func.func @transform_3(%arg0: i32) -> (i32, i32) {
    %c0_i32 = arith.constant 0 : i32
    %c0_i32_0 = arith.constant 0 : i32
    %c0_i32_1 = arith.constant 0 : i32
    return %c0_i32, %c0_i32_0 : i32, i32
  }
  func.func @transform_4(%arg0: i32) -> (i32, i32) {
    %c0_i32 = arith.constant 0 : i32
    %c0_i32_0 = arith.constant 0 : i32
    return %arg0, %c0_i32 : i32, i32
  }
}

module attributes {stable_mosaic.version = 11 : i64} {
  func.func @_bn_apply_relu_kernel(%arg0: i32, %arg1: memref<8x128xf32, #tpu.memory_space<vmem>>, %arg2: memref<2x128xf32, #tpu.memory_space<vmem>>, %arg3: memref<1x128xf32, #tpu.memory_space<vmem>>, %arg4: memref<1x128xf32, #tpu.memory_space<vmem>>, %arg5: memref<8x128xf32, #tpu.memory_space<vmem>>) attributes {dimension_semantics = [#tpu.dimension_semantics<parallel>], iteration_bounds = array<i64: 1>, scalar_prefetch = 0 : i64, scratch_operands = 0 : i64, tpu.core_type = #tpu.core_type<tc>, window_params = [{transform_indices = @transform_0, window_bounds = array<i64: 8, 128>}, {pipeline_mode = #tpu.pipeline_mode<synchronous>, transform_indices = @transform_1, window_bounds = array<i64: 2, 128>}, {pipeline_mode = #tpu.pipeline_mode<synchronous>, transform_indices = @transform_2, window_bounds = array<i64: 1, 128>}, {pipeline_mode = #tpu.pipeline_mode<synchronous>, transform_indices = @transform_3, window_bounds = array<i64: 1, 128>}, {transform_indices = @transform_4, window_bounds = array<i64: 8, 128>}]} {
    %c0 = arith.constant 0 : index
    %c0_0 = arith.constant 0 : index
    %0 = vector.load %arg2[%c0, %c0_0] : memref<2x128xf32, #tpu.memory_space<vmem>>, vector<1x128xf32>
    %cst = arith.constant 1.250000e-01 : f32
    %1 = vector.broadcast %cst : f32 to vector<1x128xf32>
    %2 = arith.mulf %0, %1 : vector<1x128xf32>
    %c1 = arith.constant 1 : index
    %c0_1 = arith.constant 0 : index
    %3 = vector.load %arg2[%c1, %c0_1] : memref<2x128xf32, #tpu.memory_space<vmem>>, vector<1x128xf32>
    %cst_2 = arith.constant 1.250000e-01 : f32
    %4 = vector.broadcast %cst_2 : f32 to vector<1x128xf32>
    %5 = arith.mulf %3, %4 : vector<1x128xf32>
    %6 = arith.mulf %2, %2 : vector<1x128xf32>
    %7 = arith.subf %5, %6 : vector<1x128xf32>
    %c0_3 = arith.constant 0 : index
    %c0_4 = arith.constant 0 : index
    %8 = vector.load %arg3[%c0_3, %c0_4] : memref<1x128xf32, #tpu.memory_space<vmem>>, vector<1x128xf32>
    %cst_5 = arith.constant 9.99999974E-6 : f32
    %9 = vector.broadcast %cst_5 : f32 to vector<1x128xf32>
    %10 = arith.addf %7, %9 : vector<1x128xf32>
    %11 = math.rsqrt %10 : vector<1x128xf32>
    %12 = arith.mulf %8, %11 : vector<1x128xf32>
    %c0_6 = arith.constant 0 : index
    %c0_7 = arith.constant 0 : index
    %13 = vector.load %arg4[%c0_6, %c0_7] : memref<1x128xf32, #tpu.memory_space<vmem>>, vector<1x128xf32>
    %14 = arith.mulf %2, %12 : vector<1x128xf32>
    %15 = arith.subf %13, %14 : vector<1x128xf32>
    %c0_8 = arith.constant 0 : index
    %c0_9 = arith.constant 0 : index
    %16 = vector.load %arg1[%c0_8, %c0_9] : memref<8x128xf32, #tpu.memory_space<vmem>>, vector<8x128xf32>
    %17 = vector.broadcast %12 : vector<1x128xf32> to vector<8x128xf32>
    %18 = arith.mulf %16, %17 : vector<8x128xf32>
    %19 = vector.broadcast %15 : vector<1x128xf32> to vector<8x128xf32>
    %20 = arith.addf %18, %19 : vector<8x128xf32>
    %cst_10 = arith.constant 0.000000e+00 : f32
    %21 = vector.broadcast %cst_10 : f32 to vector<8x128xf32>
    %22 = arith.maximumf %20, %21 : vector<8x128xf32>
    %c0_11 = arith.constant 0 : index
    %c0_12 = arith.constant 0 : index
    %23 = vector.load %arg5[%c0_11, %c0_12] : memref<8x128xf32, #tpu.memory_space<vmem>>, vector<8x128xf32>
    tpu.vector_store %arg5[%c0_11, %c0_12], %22 {strides = array<i32>} : memref<8x128xf32, #tpu.memory_space<vmem>>, vector<8x128xf32>,
    return
  }
  func.func @transform_0(%arg0: i32) -> (i32, i32) {
    %c0_i32 = arith.constant 0 : i32
    %c0_i32_0 = arith.constant 0 : i32
    return %arg0, %c0_i32 : i32, i32
  }
  func.func @transform_1(%arg0: i32) -> (i32, i32) {
    %c0_i32 = arith.constant 0 : i32
    %c0_i32_0 = arith.constant 0 : i32
    %c0_i32_1 = arith.constant 0 : i32
    return %c0_i32, %c0_i32_0 : i32, i32
  }
  func.func @transform_2(%arg0: i32) -> (i32, i32) {
    %c0_i32 = arith.constant 0 : i32
    %c0_i32_0 = arith.constant 0 : i32
    %c0_i32_1 = arith.constant 0 : i32
    return %c0_i32, %c0_i32_0 : i32, i32
  }
  func.func @transform_3(%arg0: i32) -> (i32, i32) {
    %c0_i32 = arith.constant 0 : i32
    %c0_i32_0 = arith.constant 0 : i32
    %c0_i32_1 = arith.constant 0 : i32
    return %c0_i32, %c0_i32_0 : i32, i32
  }
  func.func @transform_4(%arg0: i32) -> (i32, i32) {
    %c0_i32 = arith.constant 0 : i32
    %c0_i32_0 = arith.constant 0 : i32
    return %arg0, %c0_i32 : i32, i32
  }
}

module attributes {stable_mosaic.version = 11 : i64} {
  func.func @_matmul_bias_stats_kernel(%arg0: i32, %arg1: i32, %arg2: i32, %arg3: memref<8x512xbf16, #tpu.memory_space<vmem>>, %arg4: memref<512x128xbf16, #tpu.memory_space<vmem>>, %arg5: memref<1x128xf32, #tpu.memory_space<vmem>>, %arg6: memref<8x128xf32, #tpu.memory_space<vmem>>, %arg7: memref<2x128xf32, #tpu.memory_space<vmem>>, %arg8: memref<8x128xf32, #tpu.memory_space<vmem>>) attributes {dimension_semantics = [#tpu.dimension_semantics<parallel>, #tpu.dimension_semantics<arbitrary>, #tpu.dimension_semantics<arbitrary>], iteration_bounds = array<i64: 1, 1, 1>, scalar_prefetch = 0 : i64, scratch_operands = 1 : i64, tpu.core_type = #tpu.core_type<tc>, window_params = [{transform_indices = @transform_0, window_bounds = array<i64: 8, 512>}, {transform_indices = @transform_1, window_bounds = array<i64: 512, 128>}, {transform_indices = @transform_2, window_bounds = array<i64: 1, 128>}, {transform_indices = @transform_3, window_bounds = array<i64: 8, 128>}, {transform_indices = @transform_4, window_bounds = array<i64: 2, 128>}]} {
    %c0_i32 = arith.constant 0 : i32
    %0 = arith.cmpi eq, %arg2, %c0_i32 : i32
    %1 = arith.extui %0 : i1 to i32
    %c0_i32_0 = arith.constant 0 : i32
    %2 = arith.cmpi ne, %1, %c0_i32_0 : i32
    scf.if %2 {
      %cst_13 = arith.constant 0.000000e+00 : f32
      %17 = vector.broadcast %cst_13 : f32 to vector<8x128xf32>
      %c0_14 = arith.constant 0 : index
      %c0_15 = arith.constant 0 : index
      %18 = vector.load %arg8[%c0_14, %c0_15] : memref<8x128xf32, #tpu.memory_space<vmem>>, vector<8x128xf32>
      tpu.vector_store %arg8[%c0_14, %c0_15], %17 {strides = array<i32>} : memref<8x128xf32, #tpu.memory_space<vmem>>, vector<8x128xf32>,
    } else {
    }
    %c0_i32_1 = arith.constant 0 : i32
    %3 = arith.cmpi eq, %arg1, %c0_i32_1 : i32
    %c0_i32_2 = arith.constant 0 : i32
    %4 = arith.cmpi eq, %arg2, %c0_i32_2 : i32
    %5 = arith.andi %3, %4 : i1
    %6 = arith.extui %5 : i1 to i32
    %c0_i32_3 = arith.constant 0 : i32
    %7 = arith.cmpi ne, %6, %c0_i32_3 : i32
    scf.if %7 {
      %cst_13 = arith.constant 0.000000e+00 : f32
      %17 = vector.broadcast %cst_13 : f32 to vector<2x128xf32>
      %c0_14 = arith.constant 0 : index
      %c0_15 = arith.constant 0 : index
      %18 = vector.load %arg7[%c0_14, %c0_15] : memref<2x128xf32, #tpu.memory_space<vmem>>, vector<2x128xf32>
      tpu.vector_store %arg7[%c0_14, %c0_15], %17 {strides = array<i32>} : memref<2x128xf32, #tpu.memory_space<vmem>>, vector<2x128xf32>,
    } else {
    }
    %c0 = arith.constant 0 : index
    %c0_4 = arith.constant 0 : index
    %8 = vector.load %arg8[%c0, %c0_4] : memref<8x128xf32, #tpu.memory_space<vmem>>, vector<8x128xf32>
    %c0_5 = arith.constant 0 : index
    %c0_6 = arith.constant 0 : index
    %9 = vector.load %arg3[%c0_5, %c0_6] : memref<8x512xbf16, #tpu.memory_space<vmem>>, vector<8x512xbf16>
    %c0_7 = arith.constant 0 : index
    %c0_8 = arith.constant 0 : index
    %10 = vector.load %arg4[%c0_7, %c0_8] : memref<512x128xbf16, #tpu.memory_space<vmem>>, vector<512x128xbf16>
    %cst = arith.constant dense<0.000000e+00> : vector<8x128xf32>
    %11 = tpu.matmul %9, %10, %cst {dimension_numbers = #tpu.dot_dimension_numbers<[1], [0], [0], [1], [0, 0, 1, 1], [], []>} : vector<8x512xbf16>, vector<512x128xbf16>, vector<8x128xf32> -> vector<8x128xf32>
    %12 = arith.addf %8, %11 : vector<8x128xf32>
    %c0_9 = arith.constant 0 : index
    %c0_10 = arith.constant 0 : index
    %13 = vector.load %arg8[%c0_9, %c0_10] : memref<8x128xf32, #tpu.memory_space<vmem>>, vector<8x128xf32>
    tpu.vector_store %arg8[%c0_9, %c0_10], %12 {strides = array<i32>} : memref<8x128xf32, #tpu.memory_space<vmem>>, vector<8x128xf32>,
    %c0_i32_11 = arith.constant 0 : i32
    %14 = arith.cmpi eq, %arg2, %c0_i32_11 : i32
    %15 = arith.extui %14 : i1 to i32
    %c0_i32_12 = arith.constant 0 : i32
    %16 = arith.cmpi ne, %15, %c0_i32_12 : i32
    scf.if %16 {
      %c0_13 = arith.constant 0 : index
      %c0_14 = arith.constant 0 : index
      %17 = vector.load %arg8[%c0_13, %c0_14] : memref<8x128xf32, #tpu.memory_space<vmem>>, vector<8x128xf32>
      %c0_15 = arith.constant 0 : index
      %c0_16 = arith.constant 0 : index
      %18 = vector.load %arg5[%c0_15, %c0_16] : memref<1x128xf32, #tpu.memory_space<vmem>>, vector<1x128xf32>
      %19 = vector.broadcast %18 : vector<1x128xf32> to vector<8x128xf32>
      %20 = arith.addf %17, %19 : vector<8x128xf32>
      %c0_17 = arith.constant 0 : index
      %c0_18 = arith.constant 0 : index
      %21 = vector.load %arg6[%c0_17, %c0_18] : memref<8x128xf32, #tpu.memory_space<vmem>>, vector<8x128xf32>
      tpu.vector_store %arg6[%c0_17, %c0_18], %20 {strides = array<i32>} : memref<8x128xf32, #tpu.memory_space<vmem>>, vector<8x128xf32>,
      %22 = tpu.iota {dimensions = array<i32: 0>} : vector<8x128xi32>
      %c8_i32 = arith.constant 8 : i32
      %23 = arith.muli %arg1, %c8_i32 : i32
      %24 = vector.broadcast %23 : i32 to vector<8x128xi32>
      %25 = arith.addi %22, %24 : vector<8x128xi32>
      %c8_i32_19 = arith.constant 8 : i32
      %26 = vector.broadcast %c8_i32_19 : i32 to vector<8x128xi32>
      %27 = arith.cmpi slt, %25, %26 : vector<8x128xi32>
      %28 = arith.extui %27 : vector<8x128xi1> to vector<8x128xi32>
      %29 = arith.sitofp %28 : vector<8x128xi32> to vector<8x128xf32>
      %30 = arith.mulf %20, %29 : vector<8x128xf32>
      %cst_20 = arith.constant dense<0.000000e+00> : vector<128xf32>
      %31 = vector.multi_reduction <add>, %30, %cst_20 [0] : vector<8x128xf32> to vector<128xf32>
      %32 = vector.shape_cast %31 : vector<128xf32> to vector<1x128xf32>
      %33 = arith.mulf %30, %20 : vector<8x128xf32>
      %cst_21 = arith.constant dense<0.000000e+00> : vector<128xf32>
      %34 = vector.multi_reduction <add>, %33, %cst_21 [0] : vector<8x128xf32> to vector<128xf32>
      %35 = vector.shape_cast %34 : vector<128xf32> to vector<1x128xf32>
      %c0_22 = arith.constant 0 : index
      %c0_23 = arith.constant 0 : index
      %36 = vector.load %arg7[%c0_22, %c0_23] : memref<2x128xf32, #tpu.memory_space<vmem>>, vector<2x128xf32>
      %37 = tpu.concatenate %32, %35 in 0 : vector<1x128xf32>, vector<1x128xf32> -> vector<2x128xf32>
      %38 = arith.addf %36, %37 : vector<2x128xf32>
      %c0_24 = arith.constant 0 : index
      %c0_25 = arith.constant 0 : index
      %39 = vector.load %arg7[%c0_24, %c0_25] : memref<2x128xf32, #tpu.memory_space<vmem>>, vector<2x128xf32>
      tpu.vector_store %arg7[%c0_24, %c0_25], %38 {strides = array<i32>} : memref<2x128xf32, #tpu.memory_space<vmem>>, vector<2x128xf32>,
    } else {
    }
    return
  }
  func.func @transform_0(%arg0: i32, %arg1: i32, %arg2: i32) -> (i32, i32) {
    %c0_i32 = arith.constant 0 : i32
    return %arg1, %arg2 : i32, i32
  }
  func.func @transform_1(%arg0: i32, %arg1: i32, %arg2: i32) -> (i32, i32) {
    %c0_i32 = arith.constant 0 : i32
    return %arg2, %arg0 : i32, i32
  }
  func.func @transform_2(%arg0: i32, %arg1: i32, %arg2: i32) -> (i32, i32) {
    %c0_i32 = arith.constant 0 : i32
    %c0_i32_0 = arith.constant 0 : i32
    return %c0_i32, %arg0 : i32, i32
  }
  func.func @transform_3(%arg0: i32, %arg1: i32, %arg2: i32) -> (i32, i32) {
    %c0_i32 = arith.constant 0 : i32
    return %arg1, %arg0 : i32, i32
  }
  func.func @transform_4(%arg0: i32, %arg1: i32, %arg2: i32) -> (i32, i32) {
    %c0_i32 = arith.constant 0 : i32
    %c0_i32_0 = arith.constant 0 : i32
    return %c0_i32, %arg0 : i32, i32
  }
}

module attributes {stable_mosaic.version = 11 : i64} {
  func.func @_bn_apply_relu_kernel(%arg0: i32, %arg1: memref<8x128xf32, #tpu.memory_space<vmem>>, %arg2: memref<2x128xf32, #tpu.memory_space<vmem>>, %arg3: memref<1x128xf32, #tpu.memory_space<vmem>>, %arg4: memref<1x128xf32, #tpu.memory_space<vmem>>, %arg5: memref<8x128xf32, #tpu.memory_space<vmem>>) attributes {dimension_semantics = [#tpu.dimension_semantics<parallel>], iteration_bounds = array<i64: 1>, scalar_prefetch = 0 : i64, scratch_operands = 0 : i64, tpu.core_type = #tpu.core_type<tc>, window_params = [{transform_indices = @transform_0, window_bounds = array<i64: 8, 128>}, {pipeline_mode = #tpu.pipeline_mode<synchronous>, transform_indices = @transform_1, window_bounds = array<i64: 2, 128>}, {pipeline_mode = #tpu.pipeline_mode<synchronous>, transform_indices = @transform_2, window_bounds = array<i64: 1, 128>}, {pipeline_mode = #tpu.pipeline_mode<synchronous>, transform_indices = @transform_3, window_bounds = array<i64: 1, 128>}, {transform_indices = @transform_4, window_bounds = array<i64: 8, 128>}]} {
    %c0 = arith.constant 0 : index
    %c0_0 = arith.constant 0 : index
    %0 = vector.load %arg2[%c0, %c0_0] : memref<2x128xf32, #tpu.memory_space<vmem>>, vector<1x128xf32>
    %cst = arith.constant 5.000000e-01 : f32
    %1 = vector.broadcast %cst : f32 to vector<1x128xf32>
    %2 = arith.mulf %0, %1 : vector<1x128xf32>
    %c1 = arith.constant 1 : index
    %c0_1 = arith.constant 0 : index
    %3 = vector.load %arg2[%c1, %c0_1] : memref<2x128xf32, #tpu.memory_space<vmem>>, vector<1x128xf32>
    %cst_2 = arith.constant 5.000000e-01 : f32
    %4 = vector.broadcast %cst_2 : f32 to vector<1x128xf32>
    %5 = arith.mulf %3, %4 : vector<1x128xf32>
    %6 = arith.mulf %2, %2 : vector<1x128xf32>
    %7 = arith.subf %5, %6 : vector<1x128xf32>
    %c0_3 = arith.constant 0 : index
    %c0_4 = arith.constant 0 : index
    %8 = vector.load %arg3[%c0_3, %c0_4] : memref<1x128xf32, #tpu.memory_space<vmem>>, vector<1x128xf32>
    %cst_5 = arith.constant 9.99999974E-6 : f32
    %9 = vector.broadcast %cst_5 : f32 to vector<1x128xf32>
    %10 = arith.addf %7, %9 : vector<1x128xf32>
    %11 = math.rsqrt %10 : vector<1x128xf32>
    %12 = arith.mulf %8, %11 : vector<1x128xf32>
    %c0_6 = arith.constant 0 : index
    %c0_7 = arith.constant 0 : index
    %13 = vector.load %arg4[%c0_6, %c0_7] : memref<1x128xf32, #tpu.memory_space<vmem>>, vector<1x128xf32>
    %14 = arith.mulf %2, %12 : vector<1x128xf32>
    %15 = arith.subf %13, %14 : vector<1x128xf32>
    %c0_8 = arith.constant 0 : index
    %c0_9 = arith.constant 0 : index
    %16 = vector.load %arg1[%c0_8, %c0_9] : memref<8x128xf32, #tpu.memory_space<vmem>>, vector<8x128xf32>
    %17 = vector.broadcast %12 : vector<1x128xf32> to vector<8x128xf32>
    %18 = arith.mulf %16, %17 : vector<8x128xf32>
    %19 = vector.broadcast %15 : vector<1x128xf32> to vector<8x128xf32>
    %20 = arith.addf %18, %19 : vector<8x128xf32>
    %cst_10 = arith.constant 0.000000e+00 : f32
    %21 = vector.broadcast %cst_10 : f32 to vector<8x128xf32>
    %22 = arith.maximumf %20, %21 : vector<8x128xf32>
    %c0_11 = arith.constant 0 : index
    %c0_12 = arith.constant 0 : index
    %23 = vector.load %arg5[%c0_11, %c0_12] : memref<8x128xf32, #tpu.memory_space<vmem>>, vector<8x128xf32>
    tpu.vector_store %arg5[%c0_11, %c0_12], %22 {strides = array<i32>} : memref<8x128xf32, #tpu.memory_space<vmem>>, vector<8x128xf32>,
    return
  }
  func.func @transform_0(%arg0: i32) -> (i32, i32) {
    %c0_i32 = arith.constant 0 : i32
    %c0_i32_0 = arith.constant 0 : i32
    return %arg0, %c0_i32 : i32, i32
  }
  func.func @transform_1(%arg0: i32) -> (i32, i32) {
    %c0_i32 = arith.constant 0 : i32
    %c0_i32_0 = arith.constant 0 : i32
    %c0_i32_1 = arith.constant 0 : i32
    return %c0_i32, %c0_i32_0 : i32, i32
  }
  func.func @transform_2(%arg0: i32) -> (i32, i32) {
    %c0_i32 = arith.constant 0 : i32
    %c0_i32_0 = arith.constant 0 : i32
    %c0_i32_1 = arith.constant 0 : i32
    return %c0_i32, %c0_i32_0 : i32, i32
  }
  func.func @transform_3(%arg0: i32) -> (i32, i32) {
    %c0_i32 = arith.constant 0 : i32
    %c0_i32_0 = arith.constant 0 : i32
    %c0_i32_1 = arith.constant 0 : i32
    return %c0_i32, %c0_i32_0 : i32, i32
  }
  func.func @transform_4(%arg0: i32) -> (i32, i32) {
    %c0_i32 = arith.constant 0 : i32
    %c0_i32_0 = arith.constant 0 : i32
    return %arg0, %c0_i32 : i32, i32
  }
}

module attributes {stable_mosaic.version = 11 : i64} {
  func.func @_matmul_bias_stats_kernel(%arg0: i32, %arg1: i32, %arg2: i32, %arg3: memref<8x128xbf16, #tpu.memory_space<vmem>>, %arg4: memref<128x128xbf16, #tpu.memory_space<vmem>>, %arg5: memref<1x128xf32, #tpu.memory_space<vmem>>, %arg6: memref<8x128xf32, #tpu.memory_space<vmem>>, %arg7: memref<2x128xf32, #tpu.memory_space<vmem>>, %arg8: memref<8x128xf32, #tpu.memory_space<vmem>>) attributes {dimension_semantics = [#tpu.dimension_semantics<parallel>, #tpu.dimension_semantics<arbitrary>, #tpu.dimension_semantics<arbitrary>], iteration_bounds = array<i64: 1, 1, 1>, scalar_prefetch = 0 : i64, scratch_operands = 1 : i64, tpu.core_type = #tpu.core_type<tc>, window_params = [{transform_indices = @transform_0, window_bounds = array<i64: 8, 128>}, {transform_indices = @transform_1, window_bounds = array<i64: 128, 128>}, {transform_indices = @transform_2, window_bounds = array<i64: 1, 128>}, {transform_indices = @transform_3, window_bounds = array<i64: 8, 128>}, {transform_indices = @transform_4, window_bounds = array<i64: 2, 128>}]} {
    %c0_i32 = arith.constant 0 : i32
    %0 = arith.cmpi eq, %arg2, %c0_i32 : i32
    %1 = arith.extui %0 : i1 to i32
    %c0_i32_0 = arith.constant 0 : i32
    %2 = arith.cmpi ne, %1, %c0_i32_0 : i32
    scf.if %2 {
      %cst_13 = arith.constant 0.000000e+00 : f32
      %17 = vector.broadcast %cst_13 : f32 to vector<8x128xf32>
      %c0_14 = arith.constant 0 : index
      %c0_15 = arith.constant 0 : index
      %18 = vector.load %arg8[%c0_14, %c0_15] : memref<8x128xf32, #tpu.memory_space<vmem>>, vector<8x128xf32>
      tpu.vector_store %arg8[%c0_14, %c0_15], %17 {strides = array<i32>} : memref<8x128xf32, #tpu.memory_space<vmem>>, vector<8x128xf32>,
    } else {
    }
    %c0_i32_1 = arith.constant 0 : i32
    %3 = arith.cmpi eq, %arg1, %c0_i32_1 : i32
    %c0_i32_2 = arith.constant 0 : i32
    %4 = arith.cmpi eq, %arg2, %c0_i32_2 : i32
    %5 = arith.andi %3, %4 : i1
    %6 = arith.extui %5 : i1 to i32
    %c0_i32_3 = arith.constant 0 : i32
    %7 = arith.cmpi ne, %6, %c0_i32_3 : i32
    scf.if %7 {
      %cst_13 = arith.constant 0.000000e+00 : f32
      %17 = vector.broadcast %cst_13 : f32 to vector<2x128xf32>
      %c0_14 = arith.constant 0 : index
      %c0_15 = arith.constant 0 : index
      %18 = vector.load %arg7[%c0_14, %c0_15] : memref<2x128xf32, #tpu.memory_space<vmem>>, vector<2x128xf32>
      tpu.vector_store %arg7[%c0_14, %c0_15], %17 {strides = array<i32>} : memref<2x128xf32, #tpu.memory_space<vmem>>, vector<2x128xf32>,
    } else {
    }
    %c0 = arith.constant 0 : index
    %c0_4 = arith.constant 0 : index
    %8 = vector.load %arg8[%c0, %c0_4] : memref<8x128xf32, #tpu.memory_space<vmem>>, vector<8x128xf32>
    %c0_5 = arith.constant 0 : index
    %c0_6 = arith.constant 0 : index
    %9 = vector.load %arg3[%c0_5, %c0_6] : memref<8x128xbf16, #tpu.memory_space<vmem>>, vector<8x128xbf16>
    %c0_7 = arith.constant 0 : index
    %c0_8 = arith.constant 0 : index
    %10 = vector.load %arg4[%c0_7, %c0_8] : memref<128x128xbf16, #tpu.memory_space<vmem>>, vector<128x128xbf16>
    %cst = arith.constant dense<0.000000e+00> : vector<8x128xf32>
    %11 = tpu.matmul %9, %10, %cst {dimension_numbers = #tpu.dot_dimension_numbers<[1], [0], [0], [1], [0, 0, 1, 1], [], []>} : vector<8x128xbf16>, vector<128x128xbf16>, vector<8x128xf32> -> vector<8x128xf32>
    %12 = arith.addf %8, %11 : vector<8x128xf32>
    %c0_9 = arith.constant 0 : index
    %c0_10 = arith.constant 0 : index
    %13 = vector.load %arg8[%c0_9, %c0_10] : memref<8x128xf32, #tpu.memory_space<vmem>>, vector<8x128xf32>
    tpu.vector_store %arg8[%c0_9, %c0_10], %12 {strides = array<i32>} : memref<8x128xf32, #tpu.memory_space<vmem>>, vector<8x128xf32>,
    %c0_i32_11 = arith.constant 0 : i32
    %14 = arith.cmpi eq, %arg2, %c0_i32_11 : i32
    %15 = arith.extui %14 : i1 to i32
    %c0_i32_12 = arith.constant 0 : i32
    %16 = arith.cmpi ne, %15, %c0_i32_12 : i32
    scf.if %16 {
      %c0_13 = arith.constant 0 : index
      %c0_14 = arith.constant 0 : index
      %17 = vector.load %arg8[%c0_13, %c0_14] : memref<8x128xf32, #tpu.memory_space<vmem>>, vector<8x128xf32>
      %c0_15 = arith.constant 0 : index
      %c0_16 = arith.constant 0 : index
      %18 = vector.load %arg5[%c0_15, %c0_16] : memref<1x128xf32, #tpu.memory_space<vmem>>, vector<1x128xf32>
      %19 = vector.broadcast %18 : vector<1x128xf32> to vector<8x128xf32>
      %20 = arith.addf %17, %19 : vector<8x128xf32>
      %c0_17 = arith.constant 0 : index
      %c0_18 = arith.constant 0 : index
      %21 = vector.load %arg6[%c0_17, %c0_18] : memref<8x128xf32, #tpu.memory_space<vmem>>, vector<8x128xf32>
      tpu.vector_store %arg6[%c0_17, %c0_18], %20 {strides = array<i32>} : memref<8x128xf32, #tpu.memory_space<vmem>>, vector<8x128xf32>,
      %22 = tpu.iota {dimensions = array<i32: 0>} : vector<8x128xi32>
      %c8_i32 = arith.constant 8 : i32
      %23 = arith.muli %arg1, %c8_i32 : i32
      %24 = vector.broadcast %23 : i32 to vector<8x128xi32>
      %25 = arith.addi %22, %24 : vector<8x128xi32>
      %c2_i32 = arith.constant 2 : i32
      %26 = vector.broadcast %c2_i32 : i32 to vector<8x128xi32>
      %27 = arith.cmpi slt, %25, %26 : vector<8x128xi32>
      %28 = arith.extui %27 : vector<8x128xi1> to vector<8x128xi32>
      %29 = arith.sitofp %28 : vector<8x128xi32> to vector<8x128xf32>
      %30 = arith.mulf %20, %29 : vector<8x128xf32>
      %cst_19 = arith.constant dense<0.000000e+00> : vector<128xf32>
      %31 = vector.multi_reduction <add>, %30, %cst_19 [0] : vector<8x128xf32> to vector<128xf32>
      %32 = vector.shape_cast %31 : vector<128xf32> to vector<1x128xf32>
      %33 = arith.mulf %30, %20 : vector<8x128xf32>
      %cst_20 = arith.constant dense<0.000000e+00> : vector<128xf32>
      %34 = vector.multi_reduction <add>, %33, %cst_20 [0] : vector<8x128xf32> to vector<128xf32>
      %35 = vector.shape_cast %34 : vector<128xf32> to vector<1x128xf32>
      %c0_21 = arith.constant 0 : index
      %c0_22 = arith.constant 0 : index
      %36 = vector.load %arg7[%c0_21, %c0_22] : memref<2x128xf32, #tpu.memory_space<vmem>>, vector<2x128xf32>
      %37 = tpu.concatenate %32, %35 in 0 : vector<1x128xf32>, vector<1x128xf32> -> vector<2x128xf32>
      %38 = arith.addf %36, %37 : vector<2x128xf32>
      %c0_23 = arith.constant 0 : index
      %c0_24 = arith.constant 0 : index
      %39 = vector.load %arg7[%c0_23, %c0_24] : memref<2x128xf32, #tpu.memory_space<vmem>>, vector<2x128xf32>
      tpu.vector_store %arg7[%c0_23, %c0_24], %38 {strides = array<i32>} : memref<2x128xf32, #tpu.memory_space<vmem>>, vector<2x128xf32>,
    } else {
    }
    return
  }
  func.func @transform_0(%arg0: i32, %arg1: i32, %arg2: i32) -> (i32, i32) {
    %c0_i32 = arith.constant 0 : i32
    return %arg1, %arg2 : i32, i32
  }
  func.func @transform_1(%arg0: i32, %arg1: i32, %arg2: i32) -> (i32, i32) {
    %c0_i32 = arith.constant 0 : i32
    return %arg2, %arg0 : i32, i32
  }
  func.func @transform_2(%arg0: i32, %arg1: i32, %arg2: i32) -> (i32, i32) {
    %c0_i32 = arith.constant 0 : i32
    %c0_i32_0 = arith.constant 0 : i32
    return %c0_i32, %arg0 : i32, i32
  }
  func.func @transform_3(%arg0: i32, %arg1: i32, %arg2: i32) -> (i32, i32) {
    %c0_i32 = arith.constant 0 : i32
    return %arg1, %arg0 : i32, i32
  }
  func.func @transform_4(%arg0: i32, %arg1: i32, %arg2: i32) -> (i32, i32) {
    %c0_i32 = arith.constant 0 : i32
    %c0_i32_0 = arith.constant 0 : i32
    return %c0_i32, %arg0 : i32, i32
  }
}

module attributes {stable_mosaic.version = 11 : i64} {
  func.func @_matmul_bias_stats_kernel(%arg0: i32, %arg1: i32, %arg2: i32, %arg3: memref<8x128xbf16, #tpu.memory_space<vmem>>, %arg4: memref<128x128xbf16, #tpu.memory_space<vmem>>, %arg5: memref<1x128xf32, #tpu.memory_space<vmem>>, %arg6: memref<8x128xf32, #tpu.memory_space<vmem>>, %arg7: memref<2x128xf32, #tpu.memory_space<vmem>>, %arg8: memref<8x128xf32, #tpu.memory_space<vmem>>) attributes {dimension_semantics = [#tpu.dimension_semantics<parallel>, #tpu.dimension_semantics<arbitrary>, #tpu.dimension_semantics<arbitrary>], iteration_bounds = array<i64: 1, 1, 1>, scalar_prefetch = 0 : i64, scratch_operands = 1 : i64, tpu.core_type = #tpu.core_type<tc>, window_params = [{transform_indices = @transform_0, window_bounds = array<i64: 8, 128>}, {transform_indices = @transform_1, window_bounds = array<i64: 128, 128>}, {transform_indices = @transform_2, window_bounds = array<i64: 1, 128>}, {transform_indices = @transform_3, window_bounds = array<i64: 8, 128>}, {transform_indices = @transform_4, window_bounds = array<i64: 2, 128>}]} {
    %c0_i32 = arith.constant 0 : i32
    %0 = arith.cmpi eq, %arg2, %c0_i32 : i32
    %1 = arith.extui %0 : i1 to i32
    %c0_i32_0 = arith.constant 0 : i32
    %2 = arith.cmpi ne, %1, %c0_i32_0 : i32
    scf.if %2 {
      %cst_13 = arith.constant 0.000000e+00 : f32
      %17 = vector.broadcast %cst_13 : f32 to vector<8x128xf32>
      %c0_14 = arith.constant 0 : index
      %c0_15 = arith.constant 0 : index
      %18 = vector.load %arg8[%c0_14, %c0_15] : memref<8x128xf32, #tpu.memory_space<vmem>>, vector<8x128xf32>
      tpu.vector_store %arg8[%c0_14, %c0_15], %17 {strides = array<i32>} : memref<8x128xf32, #tpu.memory_space<vmem>>, vector<8x128xf32>,
    } else {
    }
    %c0_i32_1 = arith.constant 0 : i32
    %3 = arith.cmpi eq, %arg1, %c0_i32_1 : i32
    %c0_i32_2 = arith.constant 0 : i32
    %4 = arith.cmpi eq, %arg2, %c0_i32_2 : i32
    %5 = arith.andi %3, %4 : i1
    %6 = arith.extui %5 : i1 to i32
    %c0_i32_3 = arith.constant 0 : i32
    %7 = arith.cmpi ne, %6, %c0_i32_3 : i32
    scf.if %7 {
      %cst_13 = arith.constant 0.000000e+00 : f32
      %17 = vector.broadcast %cst_13 : f32 to vector<2x128xf32>
      %c0_14 = arith.constant 0 : index
      %c0_15 = arith.constant 0 : index
      %18 = vector.load %arg7[%c0_14, %c0_15] : memref<2x128xf32, #tpu.memory_space<vmem>>, vector<2x128xf32>
      tpu.vector_store %arg7[%c0_14, %c0_15], %17 {strides = array<i32>} : memref<2x128xf32, #tpu.memory_space<vmem>>, vector<2x128xf32>,
    } else {
    }
    %c0 = arith.constant 0 : index
    %c0_4 = arith.constant 0 : index
    %8 = vector.load %arg8[%c0, %c0_4] : memref<8x128xf32, #tpu.memory_space<vmem>>, vector<8x128xf32>
    %c0_5 = arith.constant 0 : index
    %c0_6 = arith.constant 0 : index
    %9 = vector.load %arg3[%c0_5, %c0_6] : memref<8x128xbf16, #tpu.memory_space<vmem>>, vector<8x128xbf16>
    %c0_7 = arith.constant 0 : index
    %c0_8 = arith.constant 0 : index
    %10 = vector.load %arg4[%c0_7, %c0_8] : memref<128x128xbf16, #tpu.memory_space<vmem>>, vector<128x128xbf16>
    %cst = arith.constant dense<0.000000e+00> : vector<8x128xf32>
    %11 = tpu.matmul %9, %10, %cst {dimension_numbers = #tpu.dot_dimension_numbers<[1], [0], [0], [1], [0, 0, 1, 1], [], []>} : vector<8x128xbf16>, vector<128x128xbf16>, vector<8x128xf32> -> vector<8x128xf32>
    %12 = arith.addf %8, %11 : vector<8x128xf32>
    %c0_9 = arith.constant 0 : index
    %c0_10 = arith.constant 0 : index
    %13 = vector.load %arg8[%c0_9, %c0_10] : memref<8x128xf32, #tpu.memory_space<vmem>>, vector<8x128xf32>
    tpu.vector_store %arg8[%c0_9, %c0_10], %12 {strides = array<i32>} : memref<8x128xf32, #tpu.memory_space<vmem>>, vector<8x128xf32>,
    %c0_i32_11 = arith.constant 0 : i32
    %14 = arith.cmpi eq, %arg2, %c0_i32_11 : i32
    %15 = arith.extui %14 : i1 to i32
    %c0_i32_12 = arith.constant 0 : i32
    %16 = arith.cmpi ne, %15, %c0_i32_12 : i32
    scf.if %16 {
      %c0_13 = arith.constant 0 : index
      %c0_14 = arith.constant 0 : index
      %17 = vector.load %arg8[%c0_13, %c0_14] : memref<8x128xf32, #tpu.memory_space<vmem>>, vector<8x128xf32>
      %c0_15 = arith.constant 0 : index
      %c0_16 = arith.constant 0 : index
      %18 = vector.load %arg5[%c0_15, %c0_16] : memref<1x128xf32, #tpu.memory_space<vmem>>, vector<1x128xf32>
      %19 = vector.broadcast %18 : vector<1x128xf32> to vector<8x128xf32>
      %20 = arith.addf %17, %19 : vector<8x128xf32>
      %c0_17 = arith.constant 0 : index
      %c0_18 = arith.constant 0 : index
      %21 = vector.load %arg6[%c0_17, %c0_18] : memref<8x128xf32, #tpu.memory_space<vmem>>, vector<8x128xf32>
      tpu.vector_store %arg6[%c0_17, %c0_18], %20 {strides = array<i32>} : memref<8x128xf32, #tpu.memory_space<vmem>>, vector<8x128xf32>,
      %22 = tpu.iota {dimensions = array<i32: 0>} : vector<8x128xi32>
      %c8_i32 = arith.constant 8 : i32
      %23 = arith.muli %arg1, %c8_i32 : i32
      %24 = vector.broadcast %23 : i32 to vector<8x128xi32>
      %25 = arith.addi %22, %24 : vector<8x128xi32>
      %c2_i32 = arith.constant 2 : i32
      %26 = vector.broadcast %c2_i32 : i32 to vector<8x128xi32>
      %27 = arith.cmpi slt, %25, %26 : vector<8x128xi32>
      %28 = arith.extui %27 : vector<8x128xi1> to vector<8x128xi32>
      %29 = arith.sitofp %28 : vector<8x128xi32> to vector<8x128xf32>
      %30 = arith.mulf %20, %29 : vector<8x128xf32>
      %cst_19 = arith.constant dense<0.000000e+00> : vector<128xf32>
      %31 = vector.multi_reduction <add>, %30, %cst_19 [0] : vector<8x128xf32> to vector<128xf32>
      %32 = vector.shape_cast %31 : vector<128xf32> to vector<1x128xf32>
      %33 = arith.mulf %30, %20 : vector<8x128xf32>
      %cst_20 = arith.constant dense<0.000000e+00> : vector<128xf32>
      %34 = vector.multi_reduction <add>, %33, %cst_20 [0] : vector<8x128xf32> to vector<128xf32>
      %35 = vector.shape_cast %34 : vector<128xf32> to vector<1x128xf32>
      %c0_21 = arith.constant 0 : index
      %c0_22 = arith.constant 0 : index
      %36 = vector.load %arg7[%c0_21, %c0_22] : memref<2x128xf32, #tpu.memory_space<vmem>>, vector<2x128xf32>
      %37 = tpu.concatenate %32, %35 in 0 : vector<1x128xf32>, vector<1x128xf32> -> vector<2x128xf32>
      %38 = arith.addf %36, %37 : vector<2x128xf32>
      %c0_23 = arith.constant 0 : index
      %c0_24 = arith.constant 0 : index
      %39 = vector.load %arg7[%c0_23, %c0_24] : memref<2x128xf32, #tpu.memory_space<vmem>>, vector<2x128xf32>
      tpu.vector_store %arg7[%c0_23, %c0_24], %38 {strides = array<i32>} : memref<2x128xf32, #tpu.memory_space<vmem>>, vector<2x128xf32>,
    } else {
    }
    return
  }
  func.func @transform_0(%arg0: i32, %arg1: i32, %arg2: i32) -> (i32, i32) {
    %c0_i32 = arith.constant 0 : i32
    return %arg1, %arg2 : i32, i32
  }
  func.func @transform_1(%arg0: i32, %arg1: i32, %arg2: i32) -> (i32, i32) {
    %c0_i32 = arith.constant 0 : i32
    return %arg2, %arg0 : i32, i32
  }
  func.func @transform_2(%arg0: i32, %arg1: i32, %arg2: i32) -> (i32, i32) {
    %c0_i32 = arith.constant 0 : i32
    %c0_i32_0 = arith.constant 0 : i32
    return %c0_i32, %arg0 : i32, i32
  }
  func.func @transform_3(%arg0: i32, %arg1: i32, %arg2: i32) -> (i32, i32) {
    %c0_i32 = arith.constant 0 : i32
    return %arg1, %arg0 : i32, i32
  }
  func.func @transform_4(%arg0: i32, %arg1: i32, %arg2: i32) -> (i32, i32) {
    %c0_i32 = arith.constant 0 : i32
    %c0_i32_0 = arith.constant 0 : i32
    return %c0_i32, %arg0 : i32, i32
  }
}

</mosaic_0001>

<llo_original>
// kernel: encoder_forward.10
$region0: #{encoder_forward.10}
  #allocation0 [shape = 'u32[]', space=smem, size = 0x4, offset = 0x4, fixed_abs, tag = 'smem constant byte address 0x4 - core index']
  #allocation1 [shape = 'u32[144,128]{1,0:T(1,128)}', space=vmem, size = 0x12000, scoped, tag = 'internal scratch']
  %s0 = inlined_call_operand.vmem [shape: f32[128,128], index: 0, kind: input, shape index: {}]
  %s1 = inlined_call_operand.vmem [shape: f32[2,128], index: 1, kind: input, shape index: {}]
  %s2 = inlined_call_operand.vmem [shape: f32[1,128], index: 2, kind: input, shape index: {}]
  %s3 = inlined_call_operand.vmem [shape: f32[1,128], index: 3, kind: input, shape index: {}]
  %s4 = inlined_call_operand.vmem [shape: f32[128,128], index: 4, kind: output, shape index: {}]
  %s5 = sld [smem:[#allocation0]]
  $region26: #{encoder_forward.10} parent=0
    _
  %s7 = ssub.s32 1, %s5
  %s8 = scalar_select 0, %s7, %s5
  // Predicated region
  $region2: #{encoder_forward.10} parent=0 // pred_check
    _
  $region3: #{encoder_forward.10} parent=0 // pred_check_branch
    %10 = sbr.rel (0) target = $region5
  $region4: #{encoder_forward.10} parent=0 // pred_region
    _
  $region5: #{encoder_forward.10} parent=0 // pred_fallthru
    _
  // Predicated region
  $region6: #{encoder_forward.10} parent=0 // pred_check
    _
  $region7: #{encoder_forward.10} parent=0 // pred_check_branch
    %12 = sbr.rel (0) target = $region9
  $region8: #{encoder_forward.10} parent=0 // pred_region
    _
  $region9: #{encoder_forward.10} parent=0 // pred_fallthru
    _
  // Predicated region
  $region10: #{encoder_forward.10} parent=0 // pred_check
    _
  $region11: #{encoder_forward.10} parent=0 // pred_check_branch
    %14 = sbr.rel (0) target = $region13
  $region12: #{encoder_forward.10} parent=0 // pred_region
    _
  $region13: #{encoder_forward.10} parent=0 // pred_fallthru
    _
  // Predicated region
  $region14: #{encoder_forward.10} parent=0 // pred_check
    _
  $region15: #{encoder_forward.10} parent=0 // pred_check_branch
    %16 = sbr.rel (0) target = $region17
  $region16: #{encoder_forward.10} parent=0 // pred_region
    _
  $region17: #{encoder_forward.10} parent=0 // pred_fallthru
    _
  %v17 = vld [vmem:[%s1] sm:$0x1]
  %v18 = vmul.f32 %v17, 0.0078125
  %v19 = vld [vmem:[%s1 + $0x1] sm:$0x1]
  %v20 = vmul.f32 %v19, 0.0078125
  %v21 = vmul.f32 %v18, %v18
  %v22 = vsub.f32 %v20, %v21
  %v23 = vld [vmem:[%s2] sm:$0x1]
  %v24 = vadd.f32 %v22, 1e-05
  %v25 = vrsqrt.pop %v24
  %v26 = vmul.f32 %v23, %v25
  %v27 = vld [vmem:[%s3] sm:$0x1]
  %v28 = vmul.f32 %v18, %v26
  %v29 = vsub.f32 %v27, %v28
  %v30 = vld [vmem:[%s0] sm:$0xff]
  %v31 = vld [vmem:[%s0 + $0x8] sm:$0xff]
  %v32 = vld [vmem:[%s0 + $0x10] sm:$0xff]
  %v33 = vld [vmem:[%s0 + $0x18] sm:$0xff]
  %v34 = vld [vmem:[%s0 + $0x20] sm:$0xff]
  %v35 = vld [vmem:[%s0 + $0x28] sm:$0xff]
  %v36 = vld [vmem:[%s0 + $0x30] sm:$0xff]
  %v37 = vld [vmem:[%s0 + $0x38] sm:$0xff]
  %v38 = vld [vmem:[%s0 + $0x40] sm:$0xff]
  %v39 = vld [vmem:[%s0 + $0x48] sm:$0xff]
  %v40 = vld [vmem:[%s0 + $0x50] sm:$0xff]
  %v41 = vld [vmem:[%s0 + $0x58] sm:$0xff]
  %v42 = vld [vmem:[%s0 + $0x60] sm:$0xff]
  %v43 = vld [vmem:[%s0 + $0x68] sm:$0xff]
  %v44 = vld [vmem:[%s0 + $0x70] sm:$0xff]
  %v45 = vld [vmem:[%s0 + $0x78] sm:$0xff]
  %v47 = vlaneseq
  %v48 = vshrl.u32 %v47, 7
  %v49 = vsub.s32 0, %v48
  %v50 = vrot.slane %v26, %v49
  %v52 = vmul.f32 %v30, %v50
  %v53 = vmul.f32 %v31, %v50
  %v54 = vmul.f32 %v32, %v50
  %v55 = vmul.f32 %v33, %v50
  %v56 = vmul.f32 %v34, %v50
  %v57 = vmul.f32 %v35, %v50
  %v58 = vmul.f32 %v36, %v50
  %v59 = vmul.f32 %v37, %v50
  %v60 = vmul.f32 %v38, %v50
  %v61 = vmul.f32 %v39, %v50
  %v62 = vmul.f32 %v40, %v50
  %v63 = vmul.f32 %v41, %v50
  %v64 = vmul.f32 %v42, %v50
  %v65 = vmul.f32 %v43, %v50
  %v66 = vmul.f32 %v44, %v50
  %v67 = vmul.f32 %v45, %v50
  %v69 = vlaneseq
  %v70 = vshrl.u32 %v69, 7
  %v71 = vsub.s32 0, %v70
  %v72 = vrot.slane %v29, %v71
  %v74 = vadd.f32 %v52, %v72
  %v75 = vadd.f32 %v53, %v72
  %v76 = vadd.f32 %v54, %v72
  %v77 = vadd.f32 %v55, %v72
  %v78 = vadd.f32 %v56, %v72
  %v79 = vadd.f32 %v57, %v72
  %v80 = vadd.f32 %v58, %v72
  %v81 = vadd.f32 %v59, %v72
  %v82 = vadd.f32 %v60, %v72
  %v83 = vadd.f32 %v61, %v72
  %v84 = vadd.f32 %v62, %v72
  %v85 = vadd.f32 %v63, %v72
  %v86 = vadd.f32 %v64, %v72
  %v87 = vadd.f32 %v65, %v72
  %v88 = vadd.f32 %v66, %v72
  %v89 = vadd.f32 %v67, %v72
  %v90 = vmax.f32 %v74, 0.0
  %v91 = vmax.f32 %v75, 0.0
  %v92 = vmax.f32 %v76, 0.0
  %v93 = vmax.f32 %v77, 0.0
  %v94 = vmax.f32 %v78, 0.0
  %v95 = vmax.f32 %v79, 0.0
  %v96 = vmax.f32 %v80, 0.0
  %v97 = vmax.f32 %v81, 0.0
  %v98 = vmax.f32 %v82, 0.0
  %v99 = vmax.f32 %v83, 0.0
  %v100 = vmax.f32 %v84, 0.0
  %v101 = vmax.f32 %v85, 0.0
  %v102 = vmax.f32 %v86, 0.0
  %v103 = vmax.f32 %v87, 0.0
  %v104 = vmax.f32 %v88, 0.0
  %v105 = vmax.f32 %v89, 0.0
  %106 = vst [vmem:[%s4] sm:$0xff] %v90
  %107 = vst [vmem:[%s4 + $0x8] sm:$0xff] %v91
  %108 = vst [vmem:[%s4 + $0x10] sm:$0xff] %v92
  %109 = vst [vmem:[%s4 + $0x18] sm:$0xff] %v93
  %110 = vst [vmem:[%s4 + $0x20] sm:$0xff] %v94
  %111 = vst [vmem:[%s4 + $0x28] sm:$0xff] %v95
  %112 = vst [vmem:[%s4 + $0x30] sm:$0xff] %v96
  %113 = vst [vmem:[%s4 + $0x38] sm:$0xff] %v97
  %114 = vst [vmem:[%s4 + $0x40] sm:$0xff] %v98
  %115 = vst [vmem:[%s4 + $0x48] sm:$0xff] %v99
  %116 = vst [vmem:[%s4 + $0x50] sm:$0xff] %v100
  %117 = vst [vmem:[%s4 + $0x58] sm:$0xff] %v101
  %118 = vst [vmem:[%s4 + $0x60] sm:$0xff] %v102
  %119 = vst [vmem:[%s4 + $0x68] sm:$0xff] %v103
  %120 = vst [vmem:[%s4 + $0x70] sm:$0xff] %v104
  %121 = vst [vmem:[%s4 + $0x78] sm:$0xff] %v105
  // Predicated region
  $region18: #{encoder_forward.10} parent=0 // pred_check
    _
  $region19: #{encoder_forward.10} parent=0 // pred_check_branch
    %123 = sbr.rel (0) target = $region21
  $region20: #{encoder_forward.10} parent=0 // pred_region
    _
  $region21: #{encoder_forward.10} parent=0 // pred_fallthru
    _
  // Predicated region
  $region22: #{encoder_forward.10} parent=0 // pred_check
    _
  $region23: #{encoder_forward.10} parent=0 // pred_check_branch
    %125 = sbr.rel (0) target = $region25
  $region24: #{encoder_forward.10} parent=0 // pred_region
    _
  $region25: #{encoder_forward.10} parent=0 // pred_fallthru
    _

// kernel: encoder_forward.9
$region0: #{encoder_forward.9}
  #allocation0 [shape = 'u32[]', space=smem, size = 0x4, offset = 0x4, fixed_abs, tag = 'smem constant byte address 0x4 - core index']
  #allocation1 [shape = 'u32[144,128]{1,0:T(1,128)}', space=vmem, size = 0x12000, scoped, tag = 'internal scratch']
  #allocation2 [shape = 'f32[128,128]{1,0:T(8,128)}', space=vmem, size = 0x10000, scoped, tag = 'scratch operand']
  %s0 = inlined_call_operand.vmem [shape: bf16[128,128], index: 0, kind: input, shape index: {}]
  %s1 = inlined_call_operand.vmem [shape: bf16[128,128], index: 1, kind: input, shape index: {}]
  %s2 = inlined_call_operand.vmem [shape: f32[1,128], index: 2, kind: input, shape index: {}]
  %s3 = inlined_call_operand.vmem [shape: f32[128,128], index: 3, kind: output, shape index: {0}]
  %s4 = inlined_call_operand.vmem [shape: f32[2,128], index: 4, kind: output, shape index: {1}]
  %5 = xla_tuple %s3, %s4
  %s6 = sld [smem:[#allocation0]]
  $region42: #{encoder_forward.9} parent=0
    _
  %s8 = ssub.s32 1, %s6
  %s9 = scalar_select 0, %s8, %s6
  // Predicated region
  $region2: #{encoder_forward.9} parent=0 // pred_check
    _
  $region3: #{encoder_forward.9} parent=0 // pred_check_branch
    %11 = sbr.rel (0) target = $region5
  $region4: #{encoder_forward.9} parent=0 // pred_region
    _
  $region5: #{encoder_forward.9} parent=0 // pred_fallthru
    _
  // Predicated region
  $region6: #{encoder_forward.9} parent=0 // pred_check
    _
  $region7: #{encoder_forward.9} parent=0 // pred_check_branch
    %13 = sbr.rel (0) target = $region9
  $region8: #{encoder_forward.9} parent=0 // pred_region
    _
  $region9: #{encoder_forward.9} parent=0 // pred_fallthru
    _
  // Predicated region
  $region10: #{encoder_forward.9} parent=0 // pred_check
    _
  $region11: #{encoder_forward.9} parent=0 // pred_check_branch
    %15 = sbr.rel (0) target = $region13
  $region12: #{encoder_forward.9} parent=0 // pred_region
    _
  $region13: #{encoder_forward.9} parent=0 // pred_fallthru
    _
  %p17 = scmp.eq.s32.totalorder 0, 0
  // Predicated region
  $region14: #{encoder_forward.9} parent=0 // pred_check
    %p18 = pneg %p17
  $region15: #{encoder_forward.9} parent=0 // pred_check_branch
    %20 = sbr.rel (%p18) target = $region17
  $region16: #{encoder_forward.9} parent=0 // pred_region
    %21 = vst [vmem:[#allocation2] sm:$0xff] 0.0
    %22 = vst [vmem:[#allocation2 + $0x8] sm:$0xff] 0.0
    %23 = vst [vmem:[#allocation2 + $0x10] sm:$0xff] 0.0
    %24 = vst [vmem:[#allocation2 + $0x18] sm:$0xff] 0.0
    %25 = vst [vmem:[#allocation2 + $0x20] sm:$0xff] 0.0
    %26 = vst [vmem:[#allocation2 + $0x28] sm:$0xff] 0.0
    %27 = vst [vmem:[#allocation2 + $0x30] sm:$0xff] 0.0
    %28 = vst [vmem:[#allocation2 + $0x38] sm:$0xff] 0.0
    %29 = vst [vmem:[#allocation2 + $0x40] sm:$0xff] 0.0
    %30 = vst [vmem:[#allocation2 + $0x48] sm:$0xff] 0.0
    %31 = vst [vmem:[#allocation2 + $0x50] sm:$0xff] 0.0
    %32 = vst [vmem:[#allocation2 + $0x58] sm:$0xff] 0.0
    %33 = vst [vmem:[#allocation2 + $0x60] sm:$0xff] 0.0
    %34 = vst [vmem:[#allocation2 + $0x68] sm:$0xff] 0.0
    %35 = vst [vmem:[#allocation2 + $0x70] sm:$0xff] 0.0
    %36 = vst [vmem:[#allocation2 + $0x78] sm:$0xff] 0.0
  $region17: #{encoder_forward.9} parent=0 // pred_fallthru
    _
  %p37 = scmp.eq.s32.totalorder 0, 0
  %p38 = pnand %p37, %p17
  %p39 = pneg %p38
  // Predicated region
  $region18: #{encoder_forward.9} parent=0 // pred_check
    _
  $region19: #{encoder_forward.9} parent=0 // pred_check_branch
    %41 = sbr.rel (%p38) target = $region21
  $region20: #{encoder_forward.9} parent=0 // pred_region
    %42 = vst [vmem:[%s4] sm:$0x3] 0.0
  $region21: #{encoder_forward.9} parent=0 // pred_fallthru
    _
  %v43 = vld [vmem:[#allocation2] sm:$0xff]
  %v44 = vld [vmem:[#allocation2 + $0x8] sm:$0xff]
  %v45 = vld [vmem:[#allocation2 + $0x10] sm:$0xff]
  %v46 = vld [vmem:[#allocation2 + $0x18] sm:$0xff]
  %v47 = vld [vmem:[#allocation2 + $0x20] sm:$0xff]
  %v48 = vld [vmem:[#allocation2 + $0x28] sm:$0xff]
  %v49 = vld [vmem:[#allocation2 + $0x30] sm:$0xff]
  %v50 = vld [vmem:[#allocation2 + $0x38] sm:$0xff]
  %v51 = vld [vmem:[#allocation2 + $0x40] sm:$0xff]
  %v52 = vld [vmem:[#allocation2 + $0x48] sm:$0xff]
  %v53 = vld [vmem:[#allocation2 + $0x50] sm:$0xff]
  %v54 = vld [vmem:[#allocation2 + $0x58] sm:$0xff]
  %v55 = vld [vmem:[#allocation2 + $0x60] sm:$0xff]
  %v56 = vld [vmem:[#allocation2 + $0x68] sm:$0xff]
  %v57 = vld [vmem:[#allocation2 + $0x70] sm:$0xff]
  %v58 = vld [vmem:[#allocation2 + $0x78] sm:$0xff]
  %v59 = vld [vmem:[%s0] sm:$0xf]
  %v60 = vld [vmem:[%s0 + $0x4] sm:$0xf]
  %v61 = vld [vmem:[%s0 + $0x8] sm:$0xf]
  %v62 = vld [vmem:[%s0 + $0xc] sm:$0xf]
  %v63 = vld [vmem:[%s0 + $0x10] sm:$0xf]
  %v64 = vld [vmem:[%s0 + $0x14] sm:$0xf]
  %v65 = vld [vmem:[%s0 + $0x18] sm:$0xf]
  %v66 = vld [vmem:[%s0 + $0x1c] sm:$0xf]
  %v67 = vld [vmem:[%s0 + $0x20] sm:$0xf]
  %v68 = vld [vmem:[%s0 + $0x24] sm:$0xf]
  %v69 = vld [vmem:[%s0 + $0x28] sm:$0xf]
  %v70 = vld [vmem:[%s0 + $0x2c] sm:$0xf]
  %v71 = vld [vmem:[%s0 + $0x30] sm:$0xf]
  %v72 = vld [vmem:[%s0 + $0x34] sm:$0xf]
  %v73 = vld [vmem:[%s0 + $0x38] sm:$0xf]
  %v74 = vld [vmem:[%s0 + $0x3c] sm:$0xf]
  %v75 = vld [vmem:[%s1] sm:$0xf]
  %v76 = vld [vmem:[%s1 + $0x4] sm:$0xf]
  %v77 = vld [vmem:[%s1 + $0x8] sm:$0xf]
  %v78 = vld [vmem:[%s1 + $0xc] sm:$0xf]
  %v79 = vld [vmem:[%s1 + $0x10] sm:$0xf]
  %v80 = vld [vmem:[%s1 + $0x14] sm:$0xf]
  %v81 = vld [vmem:[%s1 + $0x18] sm:$0xf]
  %v82 = vld [vmem:[%s1 + $0x1c] sm:$0xf]
  %v83 = vld [vmem:[%s1 + $0x20] sm:$0xf]
  %v84 = vld [vmem:[%s1 + $0x24] sm:$0xf]
  %v85 = vld [vmem:[%s1 + $0x28] sm:$0xf]
  %v86 = vld [vmem:[%s1 + $0x2c] sm:$0xf]
  %v87 = vld [vmem:[%s1 + $0x30] sm:$0xf]
  %v88 = vld [vmem:[%s1 + $0x34] sm:$0xf]
  %v89 = vld [vmem:[%s1 + $0x38] sm:$0xf]
  %v90 = vld [vmem:[%s1 + $0x3c] sm:$0xf]
  %v107 = vunpack.c.l.b16 %v59
  %v108 = vunpack.c.l.b16 %v60
  %v109 = vunpack.c.l.b16 %v61
  %v110 = vunpack.c.l.b16 %v62
  %v111 = vunpack.c.l.b16 %v63
  %v112 = vunpack.c.l.b16 %v64
  %v113 = vunpack.c.l.b16 %v65
  %v114 = vunpack.c.l.b16 %v66
  %v115 = vunpack.c.l.b16 %v67
  %v116 = vunpack.c.l.b16 %v68
  %v117 = vunpack.c.l.b16 %v69
  %v118 = vunpack.c.l.b16 %v70
  %v119 = vunpack.c.l.b16 %v71
  %v120 = vunpack.c.l.b16 %v72
  %v121 = vunpack.c.l.b16 %v73
  %v122 = vunpack.c.l.b16 %v74
  %v123 = vpack.c.b16 %v108, %v107
  %v124 = vpack.c.b16 %v110, %v109
  %v125 = vpack.c.b16 %v112, %v111
  %v126 = vpack.c.b16 %v114, %v113
  %v127 = vpack.c.b16 %v116, %v115
  %v128 = vpack.c.b16 %v118, %v117
  %v129 = vpack.c.b16 %v120, %v119
  %v130 = vpack.c.b16 %v122, %v121
  %v155 = vunpack.c.l.b16 %v75
  %v156 = vunpack.c.l.b16 %v76
  %v157 = vunpack.c.l.b16 %v77
  %v158 = vunpack.c.l.b16 %v78
  %v159 = vunpack.c.l.b16 %v79
  %v160 = vunpack.c.l.b16 %v80
  %v161 = vunpack.c.l.b16 %v81
  %v162 = vunpack.c.l.b16 %v82
  %v163 = vunpack.c.l.b16 %v83
  %v164 = vunpack.c.l.b16 %v84
  %v165 = vunpack.c.l.b16 %v85
  %v166 = vunpack.c.l.b16 %v86
  %v167 = vunpack.c.l.b16 %v87
  %v168 = vunpack.c.l.b16 %v88
  %v169 = vunpack.c.l.b16 %v89
  %v170 = vunpack.c.l.b16 %v90
  %v171 = vpack.c.b16 %v156, %v155
  %v172 = vpack.c.b16 %v158, %v157
  %v173 = vpack.c.b16 %v160, %v159
  %v174 = vpack.c.b16 %v162, %v161
  %v175 = vpack.c.b16 %v164, %v163
  %v176 = vpack.c.b16 %v166, %v165
  %v177 = vpack.c.b16 %v168, %v167
  %v178 = vpack.c.b16 %v170, %v169
  %187 = vmatprep.subr.bf16.mxu0 0
  %188 = vmatpush1.bf16.msra.mxu0 %v171
  %189 = vmatprep.subr.bf16.mxu0 0
  %190 = vmatpush1.bf16.msra.mxu0 %v172
  %191 = vmatprep.subr.bf16.mxu0 0
  %192 = vmatpush1.bf16.msra.mxu0 %v173
  %193 = vmatprep.subr.bf16.mxu0 0
  %194 = vmatpush1.bf16.msra.mxu0 %v174
  %195 = vmatprep.subr.bf16.mxu0 0
  %196 = vmatpush1.bf16.msra.mxu0 %v175
  %197 = vmatprep.subr.bf16.mxu0 0
  %198 = vmatpush1.bf16.msra.mxu0 %v176
  %199 = vmatprep.subr.bf16.mxu0 0
  %200 = vmatpush1.bf16.msra.mxu0 %v177
  %201 = vmatprep.subr.bf16.mxu0 0
  %202 = vmatpush1.bf16.msra.mxu0 %v178
  %203 = vmatprep.subr.bf16.mxu0 0
  %204 = vmatpush1.bf16.msra.mxu0 0
  %205 = vmatprep.subr.bf16.mxu0 0
  %206 = vmatpush1.bf16.msra.mxu0 0
  %207 = vmatprep.subr.bf16.mxu0 0
  %208 = vmatpush1.bf16.msra.mxu0 0
  %209 = vmatprep.subr.bf16.mxu0 0
  %210 = vmatpush1.bf16.msra.mxu0 0
  %211 = vmatprep.subr.bf16.mxu0 0
  %212 = vmatpush1.bf16.msra.mxu0 0
  %213 = vmatprep.subr.bf16.mxu0 0
  %214 = vmatpush1.bf16.msra.mxu0 0
  %215 = vmatprep.subr.bf16.mxu0 0
  %216 = vmatpush1.bf16.msra.mxu0 0
  %217 = vmatprep.subr.bf16.mxu0 0
  %218 = vmatpush1.bf16.msra.mxu0 0
  %219 = vmatprep.mubr.bf16.mxu0 0
  %220 = vmatmul.mubr.bf16.gmra.mrb[0].mxu0 %v123
  %v221 = vpop.f32.mrb[0].mxu0
  %v222 = vadd.f32 0.0, %v221
  %v223 = vpop.f32.mrb[0].mxu0
  %v224 = vpop.f32.mrb[0].mxu0
  %v225 = vadd.f32 0.0, %v224
  %v226 = vpop.f32.mrb[0].mxu0
  %227 = vmatprep.mubr.bf16.mxu0 0
  %228 = vmatmul.mubr.bf16.gmra.mrb[0].mxu0 %v124
  %v229 = vpop.f32.mrb[0].mxu0
  %v230 = vadd.f32 0.0, %v229
  %v231 = vpop.f32.mrb[0].mxu0
  %v232 = vpop.f32.mrb[0].mxu0
  %v233 = vadd.f32 0.0, %v232
  %v234 = vpop.f32.mrb[0].mxu0
  %235 = vmatprep.mubr.bf16.mxu0 0
  %236 = vmatmul.mubr.bf16.gmra.mrb[0].mxu0 %v125
  %v237 = vpop.f32.mrb[0].mxu0
  %v238 = vadd.f32 0.0, %v237
  %v239 = vpop.f32.mrb[0].mxu0
  %v240 = vpop.f32.mrb[0].mxu0
  %v241 = vadd.f32 0.0, %v240
  %v242 = vpop.f32.mrb[0].mxu0
  %243 = vmatprep.mubr.bf16.mxu0 0
  %244 = vmatmul.mubr.bf16.gmra.mrb[0].mxu0 %v126
  %v245 = vpop.f32.mrb[0].mxu0
  %v246 = vadd.f32 0.0, %v245
  %v247 = vpop.f32.mrb[0].mxu0
  %v248 = vpop.f32.mrb[0].mxu0
  %v249 = vadd.f32 0.0, %v248
  %v250 = vpop.f32.mrb[0].mxu0
  %251 = vmatprep.mubr.bf16.mxu0 0
  %252 = vmatmul.mubr.bf16.gmra.mrb[0].mxu0 %v127
  %v253 = vpop.f32.mrb[0].mxu0
  %v254 = vadd.f32 0.0, %v253
  %v255 = vpop.f32.mrb[0].mxu0
  %v256 = vpop.f32.mrb[0].mxu0
  %v257 = vadd.f32 0.0, %v256
  %v258 = vpop.f32.mrb[0].mxu0
  %259 = vmatprep.mubr.bf16.mxu0 0
  %260 = vmatmul.mubr.bf16.gmra.mrb[0].mxu0 %v128
  %v261 = vpop.f32.mrb[0].mxu0
  %v262 = vadd.f32 0.0, %v261
  %v263 = vpop.f32.mrb[0].mxu0
  %v264 = vpop.f32.mrb[0].mxu0
  %v265 = vadd.f32 0.0, %v264
  %v266 = vpop.f32.mrb[0].mxu0
  %267 = vmatprep.mubr.bf16.mxu0 0
  %268 = vmatmul.mubr.bf16.gmra.mrb[0].mxu0 %v129
  %v269 = vpop.f32.mrb[0].mxu0
  %v270 = vadd.f32 0.0, %v269
  %v271 = vpop.f32.mrb[0].mxu0
  %v272 = vpop.f32.mrb[0].mxu0
  %v273 = vadd.f32 0.0, %v272
  %v274 = vpop.f32.mrb[0].mxu0
  %275 = vmatprep.mubr.bf16.mxu0 0
  %276 = vmatmul.mubr.bf16.gmra.mrb[0].mxu0 %v130
  %v277 = vpop.f32.mrb[0].mxu0
  %v278 = vadd.f32 0.0, %v277
  %v279 = vpop.f32.mrb[0].mxu0
  %v280 = vpop.f32.mrb[0].mxu0
  %v281 = vadd.f32 0.0, %v280
  %v282 = vpop.f32.mrb[0].mxu0
  %283 = vdwg.mxu0
  %v284 = vadd.f32 %v43, %v222
  %v285 = vadd.f32 %v44, %v225
  %v286 = vadd.f32 %v45, %v230
  %v287 = vadd.f32 %v46, %v233
  %v288 = vadd.f32 %v47, %v238
  %v289 = vadd.f32 %v48, %v241
  %v290 = vadd.f32 %v49, %v246
  %v291 = vadd.f32 %v50, %v249
  %v292 = vadd.f32 %v51, %v254
  %v293 = vadd.f32 %v52, %v257
  %v294 = vadd.f32 %v53, %v262
  %v295 = vadd.f32 %v54, %v265
  %v296 = vadd.f32 %v55, %v270
  %v297 = vadd.f32 %v56, %v273
  %v298 = vadd.f32 %v57, %v278
  %v299 = vadd.f32 %v58, %v281
  %300 = vst [vmem:[#allocation2] sm:$0xff] %v284
  %301 = vst [vmem:[#allocation2 + $0x8] sm:$0xff] %v285
  %302 = vst [vmem:[#allocation2 + $0x10] sm:$0xff] %v286
  %303 = vst [vmem:[#allocation2 + $0x18] sm:$0xff] %v287
  %304 = vst [vmem:[#allocation2 + $0x20] sm:$0xff] %v288
  %305 = vst [vmem:[#allocation2 + $0x28] sm:$0xff] %v289
  %306 = vst [vmem:[#allocation2 + $0x30] sm:$0xff] %v290
  %307 = vst [vmem:[#allocation2 + $0x38] sm:$0xff] %v291
  %308 = vst [vmem:[#allocation2 + $0x40] sm:$0xff] %v292
  %309 = vst [vmem:[#allocation2 + $0x48] sm:$0xff] %v293
  %310 = vst [vmem:[#allocation2 + $0x50] sm:$0xff] %v294
  %311 = vst [vmem:[#allocation2 + $0x58] sm:$0xff] %v295
  %312 = vst [vmem:[#allocation2 + $0x60] sm:$0xff] %v296
  %313 = vst [vmem:[#allocation2 + $0x68] sm:$0xff] %v297
  %314 = vst [vmem:[#allocation2 + $0x70] sm:$0xff] %v298
  %315 = vst [vmem:[#allocation2 + $0x78] sm:$0xff] %v299
  // Predicated region
  $region22: #{encoder_forward.9} parent=0 // pred_check
    %p316 = pneg %p17
  $region23: #{encoder_forward.9} parent=0 // pred_check_branch
    %318 = sbr.rel (%p316) target = $region25
  $region24: #{encoder_forward.9} parent=0 // pred_region
    %v319 = vld [vmem:[#allocation2] sm:$0xff]
    %v320 = vld [vmem:[#allocation2 + $0x8] sm:$0xff]
    %v321 = vld [vmem:[#allocation2 + $0x10] sm:$0xff]
    %v322 = vld [vmem:[#allocation2 + $0x18] sm:$0xff]
    %v323 = vld [vmem:[#allocation2 + $0x20] sm:$0xff]
    %v324 = vld [vmem:[#allocation2 + $0x28] sm:$0xff]
    %v325 = vld [vmem:[#allocation2 + $0x30] sm:$0xff]
    %v326 = vld [vmem:[#allocation2 + $0x38] sm:$0xff]
    %v327 = vld [vmem:[#allocation2 + $0x40] sm:$0xff]
    %v328 = vld [vmem:[#allocation2 + $0x48] sm:$0xff]
    %v329 = vld [vmem:[#allocation2 + $0x50] sm:$0xff]
    %v330 = vld [vmem:[#allocation2 + $0x58] sm:$0xff]
    %v331 = vld [vmem:[#allocation2 + $0x60] sm:$0xff]
    %v332 = vld [vmem:[#allocation2 + $0x68] sm:$0xff]
    %v333 = vld [vmem:[#allocation2 + $0x70] sm:$0xff]
    %v334 = vld [vmem:[#allocation2 + $0x78] sm:$0xff]
    %v335 = vld [vmem:[%s2] sm:$0x1]
    %v337 = vlaneseq
    %v338 = vshrl.u32 %v337, 7
    %v339 = vsub.s32 0, %v338
    %v340 = vrot.slane %v335, %v339
    %v342 = vadd.f32 %v319, %v340
    %v343 = vadd.f32 %v320, %v340
    %v344 = vadd.f32 %v321, %v340
    %v345 = vadd.f32 %v322, %v340
    %v346 = vadd.f32 %v323, %v340
    %v347 = vadd.f32 %v324, %v340
    %v348 = vadd.f32 %v325, %v340
    %v349 = vadd.f32 %v326, %v340
    %v350 = vadd.f32 %v327, %v340
    %v351 = vadd.f32 %v328, %v340
    %v352 = vadd.f32 %v329, %v340
    %v353 = vadd.f32 %v330, %v340
    %v354 = vadd.f32 %v331, %v340
    %v355 = vadd.f32 %v332, %v340
    %v356 = vadd.f32 %v333, %v340
    %v357 = vadd.f32 %v334, %v340
    %358 = vst [vmem:[%s3] sm:$0xff] %v342
    %359 = vst [vmem:[%s3 + $0x8] sm:$0xff] %v343
    %360 = vst [vmem:[%s3 + $0x10] sm:$0xff] %v344
    %361 = vst [vmem:[%s3 + $0x18] sm:$0xff] %v345
    %362 = vst [vmem:[%s3 + $0x20] sm:$0xff] %v346
    %363 = vst [vmem:[%s3 + $0x28] sm:$0xff] %v347
    %364 = vst [vmem:[%s3 + $0x30] sm:$0xff] %v348
    %365 = vst [vmem:[%s3 + $0x38] sm:$0xff] %v349
    %366 = vst [vmem:[%s3 + $0x40] sm:$0xff] %v350
    %367 = vst [vmem:[%s3 + $0x48] sm:$0xff] %v351
    %368 = vst [vmem:[%s3 + $0x50] sm:$0xff] %v352
    %369 = vst [vmem:[%s3 + $0x58] sm:$0xff] %v353
    %370 = vst [vmem:[%s3 + $0x60] sm:$0xff] %v354
    %371 = vst [vmem:[%s3 + $0x68] sm:$0xff] %v355
    %372 = vst [vmem:[%s3 + $0x70] sm:$0xff] %v356
    %373 = vst [vmem:[%s3 + $0x78] sm:$0xff] %v357
    %v374 = vlaneseq
    %v375 = vshrl.u32 %v374, 7
    %v376 = vadd.s32 %v375, 8
    %v377 = vadd.s32 %v375, 16
    %v378 = vadd.s32 %v375, 24
    %v379 = vadd.s32 %v375, 32
    %v380 = vadd.s32 %v375, 40
    %v381 = vadd.s32 %v375, 48
    %v382 = vadd.s32 %v375, 56
    %v383 = vadd.s32 %v375, 64
    %v384 = vadd.s32 %v375, 72
    %v385 = vadd.s32 %v375, 80
    %v386 = vadd.s32 %v375, 88
    %v387 = vadd.s32 %v375, 96
    %v388 = vadd.s32 %v375, 104
    %v389 = vadd.s32 %v375, 112
    %v390 = vadd.s32 %v375, 120
    %s391 = smul.u32 0, 128
    %v392 = vstv %s391
    %v393 = vadd.s32 %v375, %v392
    %v394 = vadd.s32 %v376, %v392
    %v395 = vadd.s32 %v377, %v392
    %v396 = vadd.s32 %v378, %v392
    %v397 = vadd.s32 %v379, %v392
    %v398 = vadd.s32 %v380, %v392
    %v399 = vadd.s32 %v381, %v392
    %v400 = vadd.s32 %v382, %v392
    %v401 = vadd.s32 %v383, %v392
    %v402 = vadd.s32 %v384, %v392
    %v403 = vadd.s32 %v385, %v392
    %v404 = vadd.s32 %v386, %v392
    %v405 = vadd.s32 %v387, %v392
    %v406 = vadd.s32 %v388, %v392
    %v407 = vadd.s32 %v389, %v392
    %v408 = vadd.s32 %v390, %v392
    %vm409 = vcmp.lt.s32.totalorder %v393, 128
    %vm410 = vcmp.lt.s32.totalorder %v394, 128
    %vm411 = vcmp.lt.s32.totalorder %v395, 128
    %vm412 = vcmp.lt.s32.totalorder %v396, 128
    %vm413 = vcmp.lt.s32.totalorder %v397, 128
    %vm414 = vcmp.lt.s32.totalorder %v398, 128
    %vm415 = vcmp.lt.s32.totalorder %v399, 128
    %vm416 = vcmp.lt.s32.totalorder %v400, 128
    %vm417 = vcmp.lt.s32.totalorder %v401, 128
    %vm418 = vcmp.lt.s32.totalorder %v402, 128
    %vm419 = vcmp.lt.s32.totalorder %v403, 128
    %vm420 = vcmp.lt.s32.totalorder %v404, 128
    %vm421 = vcmp.lt.s32.totalorder %v405, 128
    %vm422 = vcmp.lt.s32.totalorder %v406, 128
    %vm423 = vcmp.lt.s32.totalorder %v407, 128
    %vm424 = vcmp.lt.s32.totalorder %v408, 128
    %v425 = vsel %vm409, 1, 0
    %v426 = vsel %vm410, 1, 0
    %v427 = vsel %vm411, 1, 0
    %v428 = vsel %vm412, 1, 0
    %v429 = vsel %vm413, 1, 0
    %v430 = vsel %vm414, 1, 0
    %v431 = vsel %vm415, 1, 0
    %v432 = vsel %vm416, 1, 0
    %v433 = vsel %vm417, 1, 0
    %v434 = vsel %vm418, 1, 0
    %v435 = vsel %vm419, 1, 0
    %v436 = vsel %vm420, 1, 0
    %v437 = vsel %vm421, 1, 0
    %v438 = vsel %vm422, 1, 0
    %v439 = vsel %vm423, 1, 0
    %v440 = vsel %vm424, 1, 0
    %v441 = vcvt.s32.f32 %v425
    %v442 = vcvt.s32.f32 %v426
    %v443 = vcvt.s32.f32 %v427
    %v444 = vcvt.s32.f32 %v428
    %v445 = vcvt.s32.f32 %v429
    %v446 = vcvt.s32.f32 %v430
    %v447 = vcvt.s32.f32 %v431
    %v448 = vcvt.s32.f32 %v432
    %v449 = vcvt.s32.f32 %v433
    %v450 = vcvt.s32.f32 %v434
    %v451 = vcvt.s32.f32 %v435
    %v452 = vcvt.s32.f32 %v436
    %v453 = vcvt.s32.f32 %v437
    %v454 = vcvt.s32.f32 %v438
    %v455 = vcvt.s32.f32 %v439
    %v456 = vcvt.s32.f32 %v440
    %v457 = vmul.f32 %v342, %v441
    %v458 = vmul.f32 %v343, %v442
    %v459 = vmul.f32 %v344, %v443
    %v460 = vmul.f32 %v345, %v444
    %v461 = vmul.f32 %v346, %v445
    %v462 = vmul.f32 %v347, %v446
    %v463 = vmul.f32 %v348, %v447
    %v464 = vmul.f32 %v349, %v448
    %v465 = vmul.f32 %v350, %v449
    %v466 = vmul.f32 %v351, %v450
    %v467 = vmul.f32 %v352, %v451
    %v468 = vmul.f32 %v353, %v452
    %v469 = vmul.f32 %v354, %v453
    %v470 = vmul.f32 %v355, %v454
    %v471 = vmul.f32 %v356, %v455
    %v472 = vmul.f32 %v357, %v456
    %v473 = vadd.f32 %v457, %v458
    %v474 = vadd.f32 %v473, %v459
    %v475 = vadd.f32 %v474, %v460
    %v476 = vadd.f32 %v475, %v461
    %v477 = vadd.f32 %v476, %v462
    %v478 = vadd.f32 %v477, %v463
    %v479 = vadd.f32 %v478, %v464
    %v480 = vadd.f32 %v479, %v465
    %v481 = vadd.f32 %v480, %v466
    %v482 = vadd.f32 %v481, %v467
    %v483 = vadd.f32 %v482, %v468
    %v484 = vadd.f32 %v483, %v469
    %v485 = vadd.f32 %v484, %v470
    %v486 = vadd.f32 %v485, %v471
    %v487 = vadd.f32 %v486, %v472
    %v488 = vrot.slane %v487, 4
    %v489 = vadd.f32 %v487, %v488
    %v490 = vrot.slane %v489, 2
    %v491 = vadd.f32 %v489, %v490
    %v492 = vrot.slane %v491, 1
    %v493 = vadd.f32 %v491, %v492
    %v494 = vmul.f32 %v457, %v342
    %v495 = vmul.f32 %v458, %v343
    %v496 = vmul.f32 %v459, %v344
    %v497 = vmul.f32 %v460, %v345
    %v498 = vmul.f32 %v461, %v346
    %v499 = vmul.f32 %v462, %v347
    %v500 = vmul.f32 %v463, %v348
    %v501 = vmul.f32 %v464, %v349
    %v502 = vmul.f32 %v465, %v350
    %v503 = vmul.f32 %v466, %v351
    %v504 = vmul.f32 %v467, %v352
    %v505 = vmul.f32 %v468, %v353
    %v506 = vmul.f32 %v469, %v354
    %v507 = vmul.f32 %v470, %v355
    %v508 = vmul.f32 %v471, %v356
    %v509 = vmul.f32 %v472, %v357
    %v510 = vadd.f32 %v494, %v495
    %v511 = vadd.f32 %v510, %v496
    %v512 = vadd.f32 %v511, %v497
    %v513 = vadd.f32 %v512, %v498
    %v514 = vadd.f32 %v513, %v499
    %v515 = vadd.f32 %v514, %v500
    %v516 = vadd.f32 %v515, %v501
    %v517 = vadd.f32 %v516, %v502
    %v518 = vadd.f32 %v517, %v503
    %v519 = vadd.f32 %v518, %v504
    %v520 = vadd.f32 %v519, %v505
    %v521 = vadd.f32 %v520, %v506
    %v522 = vadd.f32 %v521, %v507
    %v523 = vadd.f32 %v522, %v508
    %v524 = vadd.f32 %v523, %v509
    %v525 = vrot.slane %v524, 4
    %v526 = vadd.f32 %v524, %v525
    %v527 = vrot.slane %v526, 2
    %v528 = vadd.f32 %v526, %v527
    %v529 = vrot.slane %v528, 1
    %v530 = vadd.f32 %v528, %v529
    %v531 = vld [vmem:[%s4] sm:$0x3]
    %vm532 = vcmask 1040384
    %v533 = vsel %vm532, %v493, %v530
    %v534 = vadd.f32 %v531, %v533
    %535 = vst [vmem:[%s4] sm:$0x3] %v534
  $region25: #{encoder_forward.9} parent=0 // pred_fallthru
    _
  // Predicated region
  $region26: #{encoder_forward.9} parent=0 // pred_check
    _
  $region27: #{encoder_forward.9} parent=0 // pred_check_branch
    %537 = sbr.rel (0) target = $region29
  $region28: #{encoder_forward.9} parent=0 // pred_region
    _
  $region29: #{encoder_forward.9} parent=0 // pred_fallthru
    _
  // Predicated region
  $region30: #{encoder_forward.9} parent=0 // pred_check
    _
  $region31: #{encoder_forward.9} parent=0 // pred_check_branch
    %539 = sbr.rel (0) target = $region33
  $region32: #{encoder_forward.9} parent=0 // pred_region
    _
  $region33: #{encoder_forward.9} parent=0 // pred_fallthru
    _
  // Predicated region
  $region34: #{encoder_forward.9} parent=0 // pred_check
    _
  $region35: #{encoder_forward.9} parent=0 // pred_check_branch
    %541 = sbr.rel (0) target = $region37
  $region36: #{encoder_forward.9} parent=0 // pred_region
    _
  $region37: #{encoder_forward.9} parent=0 // pred_fallthru
    _
  // Predicated region
  $region38: #{encoder_forward.9} parent=0 // pred_check
    _
  $region39: #{encoder_forward.9} parent=0 // pred_check_branch
    %543 = sbr.rel (0) target = $region41
  $region40: #{encoder_forward.9} parent=0 // pred_region
    _
  $region41: #{encoder_forward.9} parent=0 // pred_fallthru
    _

// kernel: encoder_forward.11
$region0: #{encoder_forward.11}
  #allocation0 [shape = 'u32[]', space=smem, size = 0x4, offset = 0x4, fixed_abs, tag = 'smem constant byte address 0x4 - core index']
  #allocation1 [shape = 'u32[144,128]{1,0:T(1,128)}', space=vmem, size = 0x12000, scoped, tag = 'internal scratch']
  #allocation2 [shape = 'f32[32,128]{1,0:T(8,128)}', space=vmem, size = 0x4000, scoped, tag = 'scratch operand']
  %s0 = inlined_call_operand.vmem [shape: bf16[32,256], index: 0, kind: input, shape index: {}]
  %s1 = inlined_call_operand.vmem [shape: bf16[256,128], index: 1, kind: input, shape index: {}]
  %s2 = inlined_call_operand.vmem [shape: f32[1,128], index: 2, kind: input, shape index: {}]
  %s3 = inlined_call_operand.vmem [shape: f32[32,128], index: 3, kind: output, shape index: {0}]
  %s4 = inlined_call_operand.vmem [shape: f32[2,128], index: 4, kind: output, shape index: {1}]
  %5 = xla_tuple %s3, %s4
  %s6 = sld [smem:[#allocation0]]
  $region42: #{encoder_forward.11} parent=0
    _
  %s8 = ssub.s32 1, %s6
  %s9 = scalar_select 0, %s8, %s6
  // Predicated region
  $region2: #{encoder_forward.11} parent=0 // pred_check
    _
  $region3: #{encoder_forward.11} parent=0 // pred_check_branch
    %11 = sbr.rel (0) target = $region5
  $region4: #{encoder_forward.11} parent=0 // pred_region
    _
  $region5: #{encoder_forward.11} parent=0 // pred_fallthru
    _
  // Predicated region
  $region6: #{encoder_forward.11} parent=0 // pred_check
    _
  $region7: #{encoder_forward.11} parent=0 // pred_check_branch
    %13 = sbr.rel (0) target = $region9
  $region8: #{encoder_forward.11} parent=0 // pred_region
    _
  $region9: #{encoder_forward.11} parent=0 // pred_fallthru
    _
  // Predicated region
  $region10: #{encoder_forward.11} parent=0 // pred_check
    _
  $region11: #{encoder_forward.11} parent=0 // pred_check_branch
    %15 = sbr.rel (0) target = $region13
  $region12: #{encoder_forward.11} parent=0 // pred_region
    _
  $region13: #{encoder_forward.11} parent=0 // pred_fallthru
    _
  %p17 = scmp.eq.s32.totalorder 0, 0
  // Predicated region
  $region14: #{encoder_forward.11} parent=0 // pred_check
    %p18 = pneg %p17
  $region15: #{encoder_forward.11} parent=0 // pred_check_branch
    %20 = sbr.rel (%p18) target = $region17
  $region16: #{encoder_forward.11} parent=0 // pred_region
    %21 = vst [vmem:[#allocation2] sm:$0xff] 0.0
    %22 = vst [vmem:[#allocation2 + $0x8] sm:$0xff] 0.0
    %23 = vst [vmem:[#allocation2 + $0x10] sm:$0xff] 0.0
    %24 = vst [vmem:[#allocation2 + $0x18] sm:$0xff] 0.0
  $region17: #{encoder_forward.11} parent=0 // pred_fallthru
    _
  %p25 = scmp.eq.s32.totalorder 0, 0
  %p26 = pnand %p25, %p17
  %p27 = pneg %p26
  // Predicated region
  $region18: #{encoder_forward.11} parent=0 // pred_check
    _
  $region19: #{encoder_forward.11} parent=0 // pred_check_branch
    %29 = sbr.rel (%p26) target = $region21
  $region20: #{encoder_forward.11} parent=0 // pred_region
    %30 = vst [vmem:[%s4] sm:$0x3] 0.0
  $region21: #{encoder_forward.11} parent=0 // pred_fallthru
    _
  %v31 = vld [vmem:[#allocation2] sm:$0xff]
  %v32 = vld [vmem:[#allocation2 + $0x8] sm:$0xff]
  %v33 = vld [vmem:[#allocation2 + $0x10] sm:$0xff]
  %v34 = vld [vmem:[#allocation2 + $0x18] sm:$0xff]
  %v35 = vld [vmem:[%s0] sm:$0xff]
  %v36 = vld [vmem:[%s0 + $0x8] sm:$0xff]
  %v37 = vld [vmem:[%s0 + $0x10] sm:$0xff]
  %v38 = vld [vmem:[%s0 + $0x18] sm:$0xff]
  %v39 = vld [vmem:[%s1] sm:$0xf]
  %v40 = vld [vmem:[%s1 + $0x4] sm:$0xf]
  %v41 = vld [vmem:[%s1 + $0x8] sm:$0xf]
  %v42 = vld [vmem:[%s1 + $0xc] sm:$0xf]
  %v43 = vld [vmem:[%s1 + $0x10] sm:$0xf]
  %v44 = vld [vmem:[%s1 + $0x14] sm:$0xf]
  %v45 = vld [vmem:[%s1 + $0x18] sm:$0xf]
  %v46 = vld [vmem:[%s1 + $0x1c] sm:$0xf]
  %v47 = vld [vmem:[%s1 + $0x20] sm:$0xf]
  %v48 = vld [vmem:[%s1 + $0x24] sm:$0xf]
  %v49 = vld [vmem:[%s1 + $0x28] sm:$0xf]
  %v50 = vld [vmem:[%s1 + $0x2c] sm:$0xf]
  %v51 = vld [vmem:[%s1 + $0x30] sm:$0xf]
  %v52 = vld [vmem:[%s1 + $0x34] sm:$0xf]
  %v53 = vld [vmem:[%s1 + $0x38] sm:$0xf]
  %v54 = vld [vmem:[%s1 + $0x3c] sm:$0xf]
  %v55 = vld [vmem:[%s1 + $0x40] sm:$0xf]
  %v56 = vld [vmem:[%s1 + $0x44] sm:$0xf]
  %v57 = vld [vmem:[%s1 + $0x48] sm:$0xf]
  %v58 = vld [vmem:[%s1 + $0x4c] sm:$0xf]
  %v59 = vld [vmem:[%s1 + $0x50] sm:$0xf]
  %v60 = vld [vmem:[%s1 + $0x54] sm:$0xf]
  %v61 = vld [vmem:[%s1 + $0x58] sm:$0xf]
  %v62 = vld [vmem:[%s1 + $0x5c] sm:$0xf]
  %v63 = vld [vmem:[%s1 + $0x60] sm:$0xf]
  %v64 = vld [vmem:[%s1 + $0x64] sm:$0xf]
  %v65 = vld [vmem:[%s1 + $0x68] sm:$0xf]
  %v66 = vld [vmem:[%s1 + $0x6c] sm:$0xf]
  %v67 = vld [vmem:[%s1 + $0x70] sm:$0xf]
  %v68 = vld [vmem:[%s1 + $0x74] sm:$0xf]
  %v69 = vld [vmem:[%s1 + $0x78] sm:$0xf]
  %v70 = vld [vmem:[%s1 + $0x7c] sm:$0xf]
  %v75 = vunpack.c.l.b16 %v35
  %v76 = vunpack.c.h.b16 %v35
  %v77 = vunpack.c.l.b16 %v36
  %v78 = vunpack.c.h.b16 %v36
  %v79 = vunpack.c.l.b16 %v37
  %v80 = vunpack.c.h.b16 %v37
  %v81 = vunpack.c.l.b16 %v38
  %v82 = vunpack.c.h.b16 %v38
  %v83 = vpack.c.b16 %v77, %v75
  %v84 = vpack.c.b16 %v78, %v76
  %v85 = vpack.c.b16 %v81, %v79
  %v86 = vpack.c.b16 %v82, %v80
  %v123 = vunpack.c.l.b16 %v39
  %v124 = vunpack.c.l.b16 %v40
  %v125 = vunpack.c.l.b16 %v41
  %v126 = vunpack.c.l.b16 %v42
  %v127 = vunpack.c.l.b16 %v43
  %v128 = vunpack.c.l.b16 %v44
  %v129 = vunpack.c.l.b16 %v45
  %v130 = vunpack.c.l.b16 %v46
  %v131 = vunpack.c.l.b16 %v47
  %v132 = vunpack.c.l.b16 %v48
  %v133 = vunpack.c.l.b16 %v49
  %v134 = vunpack.c.l.b16 %v50
  %v135 = vunpack.c.l.b16 %v51
  %v136 = vunpack.c.l.b16 %v52
  %v137 = vunpack.c.l.b16 %v53
  %v138 = vunpack.c.l.b16 %v54
  %v139 = vunpack.c.l.b16 %v55
  %v140 = vunpack.c.l.b16 %v56
  %v141 = vunpack.c.l.b16 %v57
  %v142 = vunpack.c.l.b16 %v58
  %v143 = vunpack.c.l.b16 %v59
  %v144 = vunpack.c.l.b16 %v60
  %v145 = vunpack.c.l.b16 %v61
  %v146 = vunpack.c.l.b16 %v62
  %v147 = vunpack.c.l.b16 %v63
  %v148 = vunpack.c.l.b16 %v64
  %v149 = vunpack.c.l.b16 %v65
  %v150 = vunpack.c.l.b16 %v66
  %v151 = vunpack.c.l.b16 %v67
  %v152 = vunpack.c.l.b16 %v68
  %v153 = vunpack.c.l.b16 %v69
  %v154 = vunpack.c.l.b16 %v70
  %v155 = vpack.c.b16 %v124, %v123
  %v156 = vpack.c.b16 %v126, %v125
  %v157 = vpack.c.b16 %v128, %v127
  %v158 = vpack.c.b16 %v130, %v129
  %v159 = vpack.c.b16 %v132, %v131
  %v160 = vpack.c.b16 %v134, %v133
  %v161 = vpack.c.b16 %v136, %v135
  %v162 = vpack.c.b16 %v138, %v137
  %v163 = vpack.c.b16 %v140, %v139
  %v164 = vpack.c.b16 %v142, %v141
  %v165 = vpack.c.b16 %v144, %v143
  %v166 = vpack.c.b16 %v146, %v145
  %v167 = vpack.c.b16 %v148, %v147
  %v168 = vpack.c.b16 %v150, %v149
  %v169 = vpack.c.b16 %v152, %v151
  %v170 = vpack.c.b16 %v154, %v153
  %187 = vmatprep.subr.bf16.mxu0 0
  %188 = vmatpush1.bf16.msra.mxu0 %v155
  %189 = vmatprep.subr.bf16.mxu0 0
  %190 = vmatpush1.bf16.msra.mxu0 %v156
  %191 = vmatprep.subr.bf16.mxu0 0
  %192 = vmatpush1.bf16.msra.mxu0 %v157
  %193 = vmatprep.subr.bf16.mxu0 0
  %194 = vmatpush1.bf16.msra.mxu0 %v158
  %195 = vmatprep.subr.bf16.mxu0 0
  %196 = vmatpush1.bf16.msra.mxu0 %v159
  %197 = vmatprep.subr.bf16.mxu0 0
  %198 = vmatpush1.bf16.msra.mxu0 %v160
  %199 = vmatprep.subr.bf16.mxu0 0
  %200 = vmatpush1.bf16.msra.mxu0 %v161
  %201 = vmatprep.subr.bf16.mxu0 0
  %202 = vmatpush1.bf16.msra.mxu0 %v162
  %203 = vmatprep.subr.bf16.mxu0 0
  %204 = vmatpush1.bf16.msra.mxu0 %v163
  %205 = vmatprep.subr.bf16.mxu0 0
  %206 = vmatpush1.bf16.msra.mxu0 %v164
  %207 = vmatprep.subr.bf16.mxu0 0
  %208 = vmatpush1.bf16.msra.mxu0 %v165
  %209 = vmatprep.subr.bf16.mxu0 0
  %210 = vmatpush1.bf16.msra.mxu0 %v166
  %211 = vmatprep.subr.bf16.mxu0 0
  %212 = vmatpush1.bf16.msra.mxu0 %v167
  %213 = vmatprep.subr.bf16.mxu0 0
  %214 = vmatpush1.bf16.msra.mxu0 %v168
  %215 = vmatprep.subr.bf16.mxu0 0
  %216 = vmatpush1.bf16.msra.mxu0 %v169
  %217 = vmatprep.subr.bf16.mxu0 0
  %218 = vmatpush1.bf16.msra.mxu0 %v170
  %219 = vmatprep.mubr.bf16.mxu0 %v84
  %220 = vmatmul.mubr.bf16.gmra.mrb[0].mxu0 %v83
  %v221 = vpop.f32.mrb[0].mxu0
  %v222 = vadd.f32 0.0, %v221
  %v223 = vpop.f32.mrb[0].mxu0
  %v224 = vpop.f32.mrb[0].mxu0
  %v225 = vadd.f32 0.0, %v224
  %v226 = vpop.f32.mrb[0].mxu0
  %227 = vmatprep.mubr.bf16.mxu0 %v86
  %228 = vmatmul.mubr.bf16.gmra.mrb[0].mxu0 %v85
  %v229 = vpop.f32.mrb[0].mxu0
  %v230 = vadd.f32 0.0, %v229
  %v231 = vpop.f32.mrb[0].mxu0
  %v232 = vpop.f32.mrb[0].mxu0
  %v233 = vadd.f32 0.0, %v232
  %v234 = vpop.f32.mrb[0].mxu0
  %235 = vdwg.mxu0
  %v236 = vadd.f32 %v31, %v222
  %v237 = vadd.f32 %v32, %v225
  %v238 = vadd.f32 %v33, %v230
  %v239 = vadd.f32 %v34, %v233
  %240 = vst [vmem:[#allocation2] sm:$0xff] %v236
  %241 = vst [vmem:[#allocation2 + $0x8] sm:$0xff] %v237
  %242 = vst [vmem:[#allocation2 + $0x10] sm:$0xff] %v238
  %243 = vst [vmem:[#allocation2 + $0x18] sm:$0xff] %v239
  // Predicated region
  $region22: #{encoder_forward.11} parent=0 // pred_check
    %p244 = pneg %p17
  $region23: #{encoder_forward.11} parent=0 // pred_check_branch
    %246 = sbr.rel (%p244) target = $region25
  $region24: #{encoder_forward.11} parent=0 // pred_region
    %v247 = vld [vmem:[#allocation2] sm:$0xff]
    %v248 = vld [vmem:[#allocation2 + $0x8] sm:$0xff]
    %v249 = vld [vmem:[#allocation2 + $0x10] sm:$0xff]
    %v250 = vld [vmem:[#allocation2 + $0x18] sm:$0xff]
    %v251 = vld [vmem:[%s2] sm:$0x1]
    %v253 = vlaneseq
    %v254 = vshrl.u32 %v253, 7
    %v255 = vsub.s32 0, %v254
    %v256 = vrot.slane %v251, %v255
    %v258 = vadd.f32 %v247, %v256
    %v259 = vadd.f32 %v248, %v256
    %v260 = vadd.f32 %v249, %v256
    %v261 = vadd.f32 %v250, %v256
    %262 = vst [vmem:[%s3] sm:$0xff] %v258
    %263 = vst [vmem:[%s3 + $0x8] sm:$0xff] %v259
    %264 = vst [vmem:[%s3 + $0x10] sm:$0xff] %v260
    %265 = vst [vmem:[%s3 + $0x18] sm:$0xff] %v261
    %v266 = vlaneseq
    %v267 = vshrl.u32 %v266, 7
    %v268 = vadd.s32 %v267, 8
    %v269 = vadd.s32 %v267, 16
    %v270 = vadd.s32 %v267, 24
    %s271 = smul.u32 0, 32
    %v272 = vstv %s271
    %v273 = vadd.s32 %v267, %v272
    %v274 = vadd.s32 %v268, %v272
    %v275 = vadd.s32 %v269, %v272
    %v276 = vadd.s32 %v270, %v272
    %vm277 = vcmp.lt.s32.totalorder %v273, 32
    %vm278 = vcmp.lt.s32.totalorder %v274, 32
    %vm279 = vcmp.lt.s32.totalorder %v275, 32
    %vm280 = vcmp.lt.s32.totalorder %v276, 32
    %v281 = vsel %vm277, 1, 0
    %v282 = vsel %vm278, 1, 0
    %v283 = vsel %vm279, 1, 0
    %v284 = vsel %vm280, 1, 0
    %v285 = vcvt.s32.f32 %v281
    %v286 = vcvt.s32.f32 %v282
    %v287 = vcvt.s32.f32 %v283
    %v288 = vcvt.s32.f32 %v284
    %v289 = vmul.f32 %v258, %v285
    %v290 = vmul.f32 %v259, %v286
    %v291 = vmul.f32 %v260, %v287
    %v292 = vmul.f32 %v261, %v288
    %v293 = vadd.f32 %v289, %v290
    %v294 = vadd.f32 %v293, %v291
    %v295 = vadd.f32 %v294, %v292
    %v296 = vrot.slane %v295, 4
    %v297 = vadd.f32 %v295, %v296
    %v298 = vrot.slane %v297, 2
    %v299 = vadd.f32 %v297, %v298
    %v300 = vrot.slane %v299, 1
    %v301 = vadd.f32 %v299, %v300
    %v302 = vmul.f32 %v289, %v258
    %v303 = vmul.f32 %v290, %v259
    %v304 = vmul.f32 %v291, %v260
    %v305 = vmul.f32 %v292, %v261
    %v306 = vadd.f32 %v302, %v303
    %v307 = vadd.f32 %v306, %v304
    %v308 = vadd.f32 %v307, %v305
    %v309 = vrot.slane %v308, 4
    %v310 = vadd.f32 %v308, %v309
    %v311 = vrot.slane %v310, 2
    %v312 = vadd.f32 %v310, %v311
    %v313 = vrot.slane %v312, 1
    %v314 = vadd.f32 %v312, %v313
    %v315 = vld [vmem:[%s4] sm:$0x3]
    %vm316 = vcmask 1040384
    %v317 = vsel %vm316, %v301, %v314
    %v318 = vadd.f32 %v315, %v317
    %319 = vst [vmem:[%s4] sm:$0x3] %v318
  $region25: #{encoder_forward.11} parent=0 // pred_fallthru
    _
  // Predicated region
  $region26: #{encoder_forward.11} parent=0 // pred_check
    _
  $region27: #{encoder_forward.11} parent=0 // pred_check_branch
    %321 = sbr.rel (0) target = $region29
  $region28: #{encoder_forward.11} parent=0 // pred_region
    _
  $region29: #{encoder_forward.11} parent=0 // pred_fallthru
    _
  // Predicated region
  $region30: #{encoder_forward.11} parent=0 // pred_check
    _
  $region31: #{encoder_forward.11} parent=0 // pred_check_branch
    %323 = sbr.rel (0) target = $region33
  $region32: #{encoder_forward.11} parent=0 // pred_region
    _
  $region33: #{encoder_forward.11} parent=0 // pred_fallthru
    _
  // Predicated region
  $region34: #{encoder_forward.11} parent=0 // pred_check
    _
  $region35: #{encoder_forward.11} parent=0 // pred_check_branch
    %325 = sbr.rel (0) target = $region37
  $region36: #{encoder_forward.11} parent=0 // pred_region
    _
  $region37: #{encoder_forward.11} parent=0 // pred_fallthru
    _
  // Predicated region
  $region38: #{encoder_forward.11} parent=0 // pred_check
    _
  $region39: #{encoder_forward.11} parent=0 // pred_check_branch
    %327 = sbr.rel (0) target = $region41
  $region40: #{encoder_forward.11} parent=0 // pred_region
    _
  $region41: #{encoder_forward.11} parent=0 // pred_fallthru
    _

// kernel: encoder_forward.12
$region0: #{encoder_forward.12}
  #allocation0 [shape = 'u32[]', space=smem, size = 0x4, offset = 0x4, fixed_abs, tag = 'smem constant byte address 0x4 - core index']
  #allocation1 [shape = 'u32[144,128]{1,0:T(1,128)}', space=vmem, size = 0x12000, scoped, tag = 'internal scratch']
  %s0 = inlined_call_operand.vmem [shape: f32[32,128], index: 0, kind: input, shape index: {}]
  %s1 = inlined_call_operand.vmem [shape: f32[2,128], index: 1, kind: input, shape index: {}]
  %s2 = inlined_call_operand.vmem [shape: f32[1,128], index: 2, kind: input, shape index: {}]
  %s3 = inlined_call_operand.vmem [shape: f32[1,128], index: 3, kind: input, shape index: {}]
  %s4 = inlined_call_operand.vmem [shape: f32[32,128], index: 4, kind: output, shape index: {}]
  %s5 = sld [smem:[#allocation0]]
  $region26: #{encoder_forward.12} parent=0
    _
  %s7 = ssub.s32 1, %s5
  %s8 = scalar_select 0, %s7, %s5
  // Predicated region
  $region2: #{encoder_forward.12} parent=0 // pred_check
    _
  $region3: #{encoder_forward.12} parent=0 // pred_check_branch
    %10 = sbr.rel (0) target = $region5
  $region4: #{encoder_forward.12} parent=0 // pred_region
    _
  $region5: #{encoder_forward.12} parent=0 // pred_fallthru
    _
  // Predicated region
  $region6: #{encoder_forward.12} parent=0 // pred_check
    _
  $region7: #{encoder_forward.12} parent=0 // pred_check_branch
    %12 = sbr.rel (0) target = $region9
  $region8: #{encoder_forward.12} parent=0 // pred_region
    _
  $region9: #{encoder_forward.12} parent=0 // pred_fallthru
    _
  // Predicated region
  $region10: #{encoder_forward.12} parent=0 // pred_check
    _
  $region11: #{encoder_forward.12} parent=0 // pred_check_branch
    %14 = sbr.rel (0) target = $region13
  $region12: #{encoder_forward.12} parent=0 // pred_region
    _
  $region13: #{encoder_forward.12} parent=0 // pred_fallthru
    _
  // Predicated region
  $region14: #{encoder_forward.12} parent=0 // pred_check
    _
  $region15: #{encoder_forward.12} parent=0 // pred_check_branch
    %16 = sbr.rel (0) target = $region17
  $region16: #{encoder_forward.12} parent=0 // pred_region
    _
  $region17: #{encoder_forward.12} parent=0 // pred_fallthru
    _
  %v17 = vld [vmem:[%s1] sm:$0x1]
  %v18 = vmul.f32 %v17, 0.03125
  %v19 = vld [vmem:[%s1 + $0x1] sm:$0x1]
  %v20 = vmul.f32 %v19, 0.03125
  %v21 = vmul.f32 %v18, %v18
  %v22 = vsub.f32 %v20, %v21
  %v23 = vld [vmem:[%s2] sm:$0x1]
  %v24 = vadd.f32 %v22, 1e-05
  %v25 = vrsqrt.pop %v24
  %v26 = vmul.f32 %v23, %v25
  %v27 = vld [vmem:[%s3] sm:$0x1]
  %v28 = vmul.f32 %v18, %v26
  %v29 = vsub.f32 %v27, %v28
  %v30 = vld [vmem:[%s0] sm:$0xff]
  %v31 = vld [vmem:[%s0 + $0x8] sm:$0xff]
  %v32 = vld [vmem:[%s0 + $0x10] sm:$0xff]
  %v33 = vld [vmem:[%s0 + $0x18] sm:$0xff]
  %v35 = vlaneseq
  %v36 = vshrl.u32 %v35, 7
  %v37 = vsub.s32 0, %v36
  %v38 = vrot.slane %v26, %v37
  %v40 = vmul.f32 %v30, %v38
  %v41 = vmul.f32 %v31, %v38
  %v42 = vmul.f32 %v32, %v38
  %v43 = vmul.f32 %v33, %v38
  %v45 = vlaneseq
  %v46 = vshrl.u32 %v45, 7
  %v47 = vsub.s32 0, %v46
  %v48 = vrot.slane %v29, %v47
  %v50 = vadd.f32 %v40, %v48
  %v51 = vadd.f32 %v41, %v48
  %v52 = vadd.f32 %v42, %v48
  %v53 = vadd.f32 %v43, %v48
  %v54 = vmax.f32 %v50, 0.0
  %v55 = vmax.f32 %v51, 0.0
  %v56 = vmax.f32 %v52, 0.0
  %v57 = vmax.f32 %v53, 0.0
  %58 = vst [vmem:[%s4] sm:$0xff] %v54
  %59 = vst [vmem:[%s4 + $0x8] sm:$0xff] %v55
  %60 = vst [vmem:[%s4 + $0x10] sm:$0xff] %v56
  %61 = vst [vmem:[%s4 + $0x18] sm:$0xff] %v57
  // Predicated region
  $region18: #{encoder_forward.12} parent=0 // pred_check
    _
  $region19: #{encoder_forward.12} parent=0 // pred_check_branch
    %63 = sbr.rel (0) target = $region21
  $region20: #{encoder_forward.12} parent=0 // pred_region
    _
  $region21: #{encoder_forward.12} parent=0 // pred_fallthru
    _
  // Predicated region
  $region22: #{encoder_forward.12} parent=0 // pred_check
    _
  $region23: #{encoder_forward.12} parent=0 // pred_check_branch
    %65 = sbr.rel (0) target = $region25
  $region24: #{encoder_forward.12} parent=0 // pred_region
    _
  $region25: #{encoder_forward.12} parent=0 // pred_fallthru
    _

// kernel: encoder_forward.14
$region0: #{encoder_forward.14}
  #allocation0 [shape = 'u32[]', space=smem, size = 0x4, offset = 0x4, fixed_abs, tag = 'smem constant byte address 0x4 - core index']
  #allocation1 [shape = 'u32[144,128]{1,0:T(1,128)}', space=vmem, size = 0x12000, scoped, tag = 'internal scratch']
  %s0 = inlined_call_operand.vmem [shape: f32[8,128], index: 0, kind: input, shape index: {}]
  %s1 = inlined_call_operand.vmem [shape: f32[2,128], index: 1, kind: input, shape index: {}]
  %s2 = inlined_call_operand.vmem [shape: f32[1,128], index: 2, kind: input, shape index: {}]
  %s3 = inlined_call_operand.vmem [shape: f32[1,128], index: 3, kind: input, shape index: {}]
  %s4 = inlined_call_operand.vmem [shape: f32[8,128], index: 4, kind: output, shape index: {}]
  %s5 = sld [smem:[#allocation0]]
  $region26: #{encoder_forward.14} parent=0
    _
  %s7 = ssub.s32 1, %s5
  %s8 = scalar_select 0, %s7, %s5
  // Predicated region
  $region2: #{encoder_forward.14} parent=0 // pred_check
    _
  $region3: #{encoder_forward.14} parent=0 // pred_check_branch
    %10 = sbr.rel (0) target = $region5
  $region4: #{encoder_forward.14} parent=0 // pred_region
    _
  $region5: #{encoder_forward.14} parent=0 // pred_fallthru
    _
  // Predicated region
  $region6: #{encoder_forward.14} parent=0 // pred_check
    _
  $region7: #{encoder_forward.14} parent=0 // pred_check_branch
    %12 = sbr.rel (0) target = $region9
  $region8: #{encoder_forward.14} parent=0 // pred_region
    _
  $region9: #{encoder_forward.14} parent=0 // pred_fallthru
    _
  // Predicated region
  $region10: #{encoder_forward.14} parent=0 // pred_check
    _
  $region11: #{encoder_forward.14} parent=0 // pred_check_branch
    %14 = sbr.rel (0) target = $region13
  $region12: #{encoder_forward.14} parent=0 // pred_region
    _
  $region13: #{encoder_forward.14} parent=0 // pred_fallthru
    _
  // Predicated region
  $region14: #{encoder_forward.14} parent=0 // pred_check
    _
  $region15: #{encoder_forward.14} parent=0 // pred_check_branch
    %16 = sbr.rel (0) target = $region17
  $region16: #{encoder_forward.14} parent=0 // pred_region
    _
  $region17: #{encoder_forward.14} parent=0 // pred_fallthru
    _
  %v17 = vld [vmem:[%s1] sm:$0x1]
  %v18 = vmul.f32 %v17, 0.125
  %v19 = vld [vmem:[%s1 + $0x1] sm:$0x1]
  %v20 = vmul.f32 %v19, 0.125
  %v21 = vmul.f32 %v18, %v18
  %v22 = vsub.f32 %v20, %v21
  %v23 = vld [vmem:[%s2] sm:$0x1]
  %v24 = vadd.f32 %v22, 1e-05
  %v25 = vrsqrt.pop %v24
  %v26 = vmul.f32 %v23, %v25
  %v27 = vld [vmem:[%s3] sm:$0x1]
  %v28 = vmul.f32 %v18, %v26
  %v29 = vsub.f32 %v27, %v28
  %v30 = vld [vmem:[%s0] sm:$0xff]
  %v32 = vlaneseq
  %v33 = vshrl.u32 %v32, 7
  %v34 = vsub.s32 0, %v33
  %v35 = vrot.slane %v26, %v34
  %v37 = vmul.f32 %v30, %v35
  %v39 = vlaneseq
  %v40 = vshrl.u32 %v39, 7
  %v41 = vsub.s32 0, %v40
  %v42 = vrot.slane %v29, %v41
  %v44 = vadd.f32 %v37, %v42
  %v45 = vmax.f32 %v44, 0.0
  %46 = vst [vmem:[%s4] sm:$0xff] %v45
  // Predicated region
  $region18: #{encoder_forward.14} parent=0 // pred_check
    _
  $region19: #{encoder_forward.14} parent=0 // pred_check_branch
    %48 = sbr.rel (0) target = $region21
  $region20: #{encoder_forward.14} parent=0 // pred_region
    _
  $region21: #{encoder_forward.14} parent=0 // pred_fallthru
    _
  // Predicated region
  $region22: #{encoder_forward.14} parent=0 // pred_check
    _
  $region23: #{encoder_forward.14} parent=0 // pred_check_branch
    %50 = sbr.rel (0) target = $region25
  $region24: #{encoder_forward.14} parent=0 // pred_region
    _
  $region25: #{encoder_forward.14} parent=0 // pred_fallthru
    _

// kernel: encoder_forward.16
$region0: #{encoder_forward.16}
  #allocation0 [shape = 'u32[]', space=smem, size = 0x4, offset = 0x4, fixed_abs, tag = 'smem constant byte address 0x4 - core index']
  #allocation1 [shape = 'u32[144,128]{1,0:T(1,128)}', space=vmem, size = 0x12000, scoped, tag = 'internal scratch']
  %s0 = inlined_call_operand.vmem [shape: f32[8,128], index: 0, kind: input, shape index: {}]
  %s1 = inlined_call_operand.vmem [shape: f32[2,128], index: 1, kind: input, shape index: {}]
  %s2 = inlined_call_operand.vmem [shape: f32[1,128], index: 2, kind: input, shape index: {}]
  %s3 = inlined_call_operand.vmem [shape: f32[1,128], index: 3, kind: input, shape index: {}]
  %s4 = inlined_call_operand.vmem [shape: f32[8,128], index: 4, kind: output, shape index: {}]
  %s5 = sld [smem:[#allocation0]]
  $region26: #{encoder_forward.16} parent=0
    _
  %s7 = ssub.s32 1, %s5
  %s8 = scalar_select 0, %s7, %s5
  // Predicated region
  $region2: #{encoder_forward.16} parent=0 // pred_check
    _
  $region3: #{encoder_forward.16} parent=0 // pred_check_branch
    %10 = sbr.rel (0) target = $region5
  $region4: #{encoder_forward.16} parent=0 // pred_region
    _
  $region5: #{encoder_forward.16} parent=0 // pred_fallthru
    _
  // Predicated region
  $region6: #{encoder_forward.16} parent=0 // pred_check
    _
  $region7: #{encoder_forward.16} parent=0 // pred_check_branch
    %12 = sbr.rel (0) target = $region9
  $region8: #{encoder_forward.16} parent=0 // pred_region
    _
  $region9: #{encoder_forward.16} parent=0 // pred_fallthru
    _
  // Predicated region
  $region10: #{encoder_forward.16} parent=0 // pred_check
    _
  $region11: #{encoder_forward.16} parent=0 // pred_check_branch
    %14 = sbr.rel (0) target = $region13
  $region12: #{encoder_forward.16} parent=0 // pred_region
    _
  $region13: #{encoder_forward.16} parent=0 // pred_fallthru
    _
  // Predicated region
  $region14: #{encoder_forward.16} parent=0 // pred_check
    _
  $region15: #{encoder_forward.16} parent=0 // pred_check_branch
    %16 = sbr.rel (0) target = $region17
  $region16: #{encoder_forward.16} parent=0 // pred_region
    _
  $region17: #{encoder_forward.16} parent=0 // pred_fallthru
    _
  %v17 = vld [vmem:[%s1] sm:$0x1]
  %v18 = vmul.f32 %v17, 0.5
  %v19 = vld [vmem:[%s1 + $0x1] sm:$0x1]
  %v20 = vmul.f32 %v19, 0.5
  %v21 = vmul.f32 %v18, %v18
  %v22 = vsub.f32 %v20, %v21
  %v23 = vld [vmem:[%s2] sm:$0x1]
  %v24 = vadd.f32 %v22, 1e-05
  %v25 = vrsqrt.pop %v24
  %v26 = vmul.f32 %v23, %v25
  %v27 = vld [vmem:[%s3] sm:$0x1]
  %v28 = vmul.f32 %v18, %v26
  %v29 = vsub.f32 %v27, %v28
  %v30 = vld [vmem:[%s0] sm:$0xff]
  %v32 = vlaneseq
  %v33 = vshrl.u32 %v32, 7
  %v34 = vsub.s32 0, %v33
  %v35 = vrot.slane %v26, %v34
  %v37 = vmul.f32 %v30, %v35
  %v39 = vlaneseq
  %v40 = vshrl.u32 %v39, 7
  %v41 = vsub.s32 0, %v40
  %v42 = vrot.slane %v29, %v41
  %v44 = vadd.f32 %v37, %v42
  %v45 = vmax.f32 %v44, 0.0
  %46 = vst [vmem:[%s4] sm:$0xff] %v45
  // Predicated region
  $region18: #{encoder_forward.16} parent=0 // pred_check
    _
  $region19: #{encoder_forward.16} parent=0 // pred_check_branch
    %48 = sbr.rel (0) target = $region21
  $region20: #{encoder_forward.16} parent=0 // pred_region
    _
  $region21: #{encoder_forward.16} parent=0 // pred_fallthru
    _
  // Predicated region
  $region22: #{encoder_forward.16} parent=0 // pred_check
    _
  $region23: #{encoder_forward.16} parent=0 // pred_check_branch
    %50 = sbr.rel (0) target = $region25
  $region24: #{encoder_forward.16} parent=0 // pred_region
    _
  $region25: #{encoder_forward.16} parent=0 // pred_fallthru
    _

// kernel: encoder_forward.13
$region0: #{encoder_forward.13}
  #allocation0 [shape = 'u32[]', space=smem, size = 0x4, offset = 0x4, fixed_abs, tag = 'smem constant byte address 0x4 - core index']
  #allocation1 [shape = 'u32[144,128]{1,0:T(1,128)}', space=vmem, size = 0x12000, scoped, tag = 'internal scratch']
  #allocation2 [shape = 'f32[8,128]{1,0:T(8,128)}', space=vmem, size = 0x1000, scoped, tag = 'scratch operand']
  %s0 = inlined_call_operand.vmem [shape: bf16[8,512], index: 0, kind: input, shape index: {}]
  %s1 = inlined_call_operand.vmem [shape: bf16[512,128], index: 1, kind: input, shape index: {}]
  %s2 = inlined_call_operand.vmem [shape: f32[1,128], index: 2, kind: input, shape index: {}]
  %s3 = inlined_call_operand.vmem [shape: f32[8,128], index: 3, kind: output, shape index: {0}]
  %s4 = inlined_call_operand.vmem [shape: f32[2,128], index: 4, kind: output, shape index: {1}]
  %5 = xla_tuple %s3, %s4
  %s6 = sld [smem:[#allocation0]]
  $region42: #{encoder_forward.13} parent=0
    _
  %s8 = ssub.s32 1, %s6
  %s9 = scalar_select 0, %s8, %s6
  // Predicated region
  $region2: #{encoder_forward.13} parent=0 // pred_check
    _
  $region3: #{encoder_forward.13} parent=0 // pred_check_branch
    %11 = sbr.rel (0) target = $region5
  $region4: #{encoder_forward.13} parent=0 // pred_region
    _
  $region5: #{encoder_forward.13} parent=0 // pred_fallthru
    _
  // Predicated region
  $region6: #{encoder_forward.13} parent=0 // pred_check
    _
  $region7: #{encoder_forward.13} parent=0 // pred_check_branch
    %13 = sbr.rel (0) target = $region9
  $region8: #{encoder_forward.13} parent=0 // pred_region
    _
  $region9: #{encoder_forward.13} parent=0 // pred_fallthru
    _
  // Predicated region
  $region10: #{encoder_forward.13} parent=0 // pred_check
    _
  $region11: #{encoder_forward.13} parent=0 // pred_check_branch
    %15 = sbr.rel (0) target = $region13
  $region12: #{encoder_forward.13} parent=0 // pred_region
    _
  $region13: #{encoder_forward.13} parent=0 // pred_fallthru
    _
  %p17 = scmp.eq.s32.totalorder 0, 0
  // Predicated region
  $region14: #{encoder_forward.13} parent=0 // pred_check
    %p18 = pneg %p17
  $region15: #{encoder_forward.13} parent=0 // pred_check_branch
    %20 = sbr.rel (%p18) target = $region17
  $region16: #{encoder_forward.13} parent=0 // pred_region
    %21 = vst [vmem:[#allocation2] sm:$0xff] 0.0
  $region17: #{encoder_forward.13} parent=0 // pred_fallthru
    _
  %p22 = scmp.eq.s32.totalorder 0, 0
  %p23 = pnand %p22, %p17
  %p24 = pneg %p23
  // Predicated region
  $region18: #{encoder_forward.13} parent=0 // pred_check
    _
  $region19: #{encoder_forward.13} parent=0 // pred_check_branch
    %26 = sbr.rel (%p23) target = $region21
  $region20: #{encoder_forward.13} parent=0 // pred_region
    %27 = vst [vmem:[%s4] sm:$0x3] 0.0
  $region21: #{encoder_forward.13} parent=0 // pred_fallthru
    _
  %v28 = vld [vmem:[#allocation2] sm:$0xff]
  %v29 = vld [vmem:[%s0] sm:$0xff]
  %v30 = vld [vmem:[%s0 + $0x8] sm:$0xff]
  %v31 = vld [vmem:[%s1] sm:$0xf]
  %v32 = vld [vmem:[%s1 + $0x4] sm:$0xf]
  %v33 = vld [vmem:[%s1 + $0x8] sm:$0xf]
  %v34 = vld [vmem:[%s1 + $0xc] sm:$0xf]
  %v35 = vld [vmem:[%s1 + $0x10] sm:$0xf]
  %v36 = vld [vmem:[%s1 + $0x14] sm:$0xf]
  %v37 = vld [vmem:[%s1 + $0x18] sm:$0xf]
  %v38 = vld [vmem:[%s1 + $0x1c] sm:$0xf]
  %v39 = vld [vmem:[%s1 + $0x20] sm:$0xf]
  %v40 = vld [vmem:[%s1 + $0x24] sm:$0xf]
  %v41 = vld [vmem:[%s1 + $0x28] sm:$0xf]
  %v42 = vld [vmem:[%s1 + $0x2c] sm:$0xf]
  %v43 = vld [vmem:[%s1 + $0x30] sm:$0xf]
  %v44 = vld [vmem:[%s1 + $0x34] sm:$0xf]
  %v45 = vld [vmem:[%s1 + $0x38] sm:$0xf]
  %v46 = vld [vmem:[%s1 + $0x3c] sm:$0xf]
  %v47 = vld [vmem:[%s1 + $0x40] sm:$0xf]
  %v48 = vld [vmem:[%s1 + $0x44] sm:$0xf]
  %v49 = vld [vmem:[%s1 + $0x48] sm:$0xf]
  %v50 = vld [vmem:[%s1 + $0x4c] sm:$0xf]
  %v51 = vld [vmem:[%s1 + $0x50] sm:$0xf]
  %v52 = vld [vmem:[%s1 + $0x54] sm:$0xf]
  %v53 = vld [vmem:[%s1 + $0x58] sm:$0xf]
  %v54 = vld [vmem:[%s1 + $0x5c] sm:$0xf]
  %v55 = vld [vmem:[%s1 + $0x60] sm:$0xf]
  %v56 = vld [vmem:[%s1 + $0x64] sm:$0xf]
  %v57 = vld [vmem:[%s1 + $0x68] sm:$0xf]
  %v58 = vld [vmem:[%s1 + $0x6c] sm:$0xf]
  %v59 = vld [vmem:[%s1 + $0x70] sm:$0xf]
  %v60 = vld [vmem:[%s1 + $0x74] sm:$0xf]
  %v61 = vld [vmem:[%s1 + $0x78] sm:$0xf]
  %v62 = vld [vmem:[%s1 + $0x7c] sm:$0xf]
  %v63 = vld [vmem:[%s1 + $0x80] sm:$0xf]
  %v64 = vld [vmem:[%s1 + $0x84] sm:$0xf]
  %v65 = vld [vmem:[%s1 + $0x88] sm:$0xf]
  %v66 = vld [vmem:[%s1 + $0x8c] sm:$0xf]
  %v67 = vld [vmem:[%s1 + $0x90] sm:$0xf]
  %v68 = vld [vmem:[%s1 + $0x94] sm:$0xf]
  %v69 = vld [vmem:[%s1 + $0x98] sm:$0xf]
  %v70 = vld [vmem:[%s1 + $0x9c] sm:$0xf]
  %v71 = vld [vmem:[%s1 + $0xa0] sm:$0xf]
  %v72 = vld [vmem:[%s1 + $0xa4] sm:$0xf]
  %v73 = vld [vmem:[%s1 + $0xa8] sm:$0xf]
  %v74 = vld [vmem:[%s1 + $0xac] sm:$0xf]
  %v75 = vld [vmem:[%s1 + $0xb0] sm:$0xf]
  %v76 = vld [vmem:[%s1 + $0xb4] sm:$0xf]
  %v77 = vld [vmem:[%s1 + $0xb8] sm:$0xf]
  %v78 = vld [vmem:[%s1 + $0xbc] sm:$0xf]
  %v79 = vld [vmem:[%s1 + $0xc0] sm:$0xf]
  %v80 = vld [vmem:[%s1 + $0xc4] sm:$0xf]
  %v81 = vld [vmem:[%s1 + $0xc8] sm:$0xf]
  %v82 = vld [vmem:[%s1 + $0xcc] sm:$0xf]
  %v83 = vld [vmem:[%s1 + $0xd0] sm:$0xf]
  %v84 = vld [vmem:[%s1 + $0xd4] sm:$0xf]
  %v85 = vld [vmem:[%s1 + $0xd8] sm:$0xf]
  %v86 = vld [vmem:[%s1 + $0xdc] sm:$0xf]
  %v87 = vld [vmem:[%s1 + $0xe0] sm:$0xf]
  %v88 = vld [vmem:[%s1 + $0xe4] sm:$0xf]
  %v89 = vld [vmem:[%s1 + $0xe8] sm:$0xf]
  %v90 = vld [vmem:[%s1 + $0xec] sm:$0xf]
  %v91 = vld [vmem:[%s1 + $0xf0] sm:$0xf]
  %v92 = vld [vmem:[%s1 + $0xf4] sm:$0xf]
  %v93 = vld [vmem:[%s1 + $0xf8] sm:$0xf]
  %v94 = vld [vmem:[%s1 + $0xfc] sm:$0xf]
  %v97 = vunpack.c.l.b16 %v29
  %v98 = vunpack.c.h.b16 %v29
  %v99 = vunpack.c.l.b16 %v30
  %v100 = vunpack.c.h.b16 %v30
  %v101 = vpack.c.b16 %v97, %v97
  %v102 = vpack.c.b16 %v98, %v98
  %v103 = vpack.c.b16 %v99, %v99
  %v104 = vpack.c.b16 %v100, %v100
  %v173 = vunpack.c.l.b16 %v31
  %v174 = vunpack.c.l.b16 %v32
  %v175 = vunpack.c.l.b16 %v33
  %v176 = vunpack.c.l.b16 %v34
  %v177 = vunpack.c.l.b16 %v35
  %v178 = vunpack.c.l.b16 %v36
  %v179 = vunpack.c.l.b16 %v37
  %v180 = vunpack.c.l.b16 %v38
  %v181 = vunpack.c.l.b16 %v39
  %v182 = vunpack.c.l.b16 %v40
  %v183 = vunpack.c.l.b16 %v41
  %v184 = vunpack.c.l.b16 %v42
  %v185 = vunpack.c.l.b16 %v43
  %v186 = vunpack.c.l.b16 %v44
  %v187 = vunpack.c.l.b16 %v45
  %v188 = vunpack.c.l.b16 %v46
  %v189 = vunpack.c.l.b16 %v47
  %v190 = vunpack.c.l.b16 %v48
  %v191 = vunpack.c.l.b16 %v49
  %v192 = vunpack.c.l.b16 %v50
  %v193 = vunpack.c.l.b16 %v51
  %v194 = vunpack.c.l.b16 %v52
  %v195 = vunpack.c.l.b16 %v53
  %v196 = vunpack.c.l.b16 %v54
  %v197 = vunpack.c.l.b16 %v55
  %v198 = vunpack.c.l.b16 %v56
  %v199 = vunpack.c.l.b16 %v57
  %v200 = vunpack.c.l.b16 %v58
  %v201 = vunpack.c.l.b16 %v59
  %v202 = vunpack.c.l.b16 %v60
  %v203 = vunpack.c.l.b16 %v61
  %v204 = vunpack.c.l.b16 %v62
  %v205 = vunpack.c.l.b16 %v63
  %v206 = vunpack.c.l.b16 %v64
  %v207 = vunpack.c.l.b16 %v65
  %v208 = vunpack.c.l.b16 %v66
  %v209 = vunpack.c.l.b16 %v67
  %v210 = vunpack.c.l.b16 %v68
  %v211 = vunpack.c.l.b16 %v69
  %v212 = vunpack.c.l.b16 %v70
  %v213 = vunpack.c.l.b16 %v71
  %v214 = vunpack.c.l.b16 %v72
  %v215 = vunpack.c.l.b16 %v73
  %v216 = vunpack.c.l.b16 %v74
  %v217 = vunpack.c.l.b16 %v75
  %v218 = vunpack.c.l.b16 %v76
  %v219 = vunpack.c.l.b16 %v77
  %v220 = vunpack.c.l.b16 %v78
  %v221 = vunpack.c.l.b16 %v79
  %v222 = vunpack.c.l.b16 %v80
  %v223 = vunpack.c.l.b16 %v81
  %v224 = vunpack.c.l.b16 %v82
  %v225 = vunpack.c.l.b16 %v83
  %v226 = vunpack.c.l.b16 %v84
  %v227 = vunpack.c.l.b16 %v85
  %v228 = vunpack.c.l.b16 %v86
  %v229 = vunpack.c.l.b16 %v87
  %v230 = vunpack.c.l.b16 %v88
  %v231 = vunpack.c.l.b16 %v89
  %v232 = vunpack.c.l.b16 %v90
  %v233 = vunpack.c.l.b16 %v91
  %v234 = vunpack.c.l.b16 %v92
  %v235 = vunpack.c.l.b16 %v93
  %v236 = vunpack.c.l.b16 %v94
  %v237 = vpack.c.b16 %v174, %v173
  %v238 = vpack.c.b16 %v176, %v175
  %v239 = vpack.c.b16 %v178, %v177
  %v240 = vpack.c.b16 %v180, %v179
  %v241 = vpack.c.b16 %v182, %v181
  %v242 = vpack.c.b16 %v184, %v183
  %v243 = vpack.c.b16 %v186, %v185
  %v244 = vpack.c.b16 %v188, %v187
  %v245 = vpack.c.b16 %v190, %v189
  %v246 = vpack.c.b16 %v192, %v191
  %v247 = vpack.c.b16 %v194, %v193
  %v248 = vpack.c.b16 %v196, %v195
  %v249 = vpack.c.b16 %v198, %v197
  %v250 = vpack.c.b16 %v200, %v199
  %v251 = vpack.c.b16 %v202, %v201
  %v252 = vpack.c.b16 %v204, %v203
  %v253 = vpack.c.b16 %v206, %v205
  %v254 = vpack.c.b16 %v208, %v207
  %v255 = vpack.c.b16 %v210, %v209
  %v256 = vpack.c.b16 %v212, %v211
  %v257 = vpack.c.b16 %v214, %v213
  %v258 = vpack.c.b16 %v216, %v215
  %v259 = vpack.c.b16 %v218, %v217
  %v260 = vpack.c.b16 %v220, %v219
  %v261 = vpack.c.b16 %v222, %v221
  %v262 = vpack.c.b16 %v224, %v223
  %v263 = vpack.c.b16 %v226, %v225
  %v264 = vpack.c.b16 %v228, %v227
  %v265 = vpack.c.b16 %v230, %v229
  %v266 = vpack.c.b16 %v232, %v231
  %v267 = vpack.c.b16 %v234, %v233
  %v268 = vpack.c.b16 %v236, %v235
  %301 = vmatprep.subr.bf16.mxu0 0
  %302 = vmatpush1.bf16.msra.mxu0 %v237
  %303 = vmatprep.subr.bf16.mxu0 0
  %304 = vmatpush1.bf16.msra.mxu0 %v238
  %305 = vmatprep.subr.bf16.mxu0 0
  %306 = vmatpush1.bf16.msra.mxu0 %v239
  %307 = vmatprep.subr.bf16.mxu0 0
  %308 = vmatpush1.bf16.msra.mxu0 %v240
  %309 = vmatprep.subr.bf16.mxu0 0
  %310 = vmatpush1.bf16.msra.mxu0 %v241
  %311 = vmatprep.subr.bf16.mxu0 0
  %312 = vmatpush1.bf16.msra.mxu0 %v242
  %313 = vmatprep.subr.bf16.mxu0 0
  %314 = vmatpush1.bf16.msra.mxu0 %v243
  %315 = vmatprep.subr.bf16.mxu0 0
  %316 = vmatpush1.bf16.msra.mxu0 %v244
  %317 = vmatprep.subr.bf16.mxu0 0
  %318 = vmatpush1.bf16.msra.mxu0 %v245
  %319 = vmatprep.subr.bf16.mxu0 0
  %320 = vmatpush1.bf16.msra.mxu0 %v246
  %321 = vmatprep.subr.bf16.mxu0 0
  %322 = vmatpush1.bf16.msra.mxu0 %v247
  %323 = vmatprep.subr.bf16.mxu0 0
  %324 = vmatpush1.bf16.msra.mxu0 %v248
  %325 = vmatprep.subr.bf16.mxu0 0
  %326 = vmatpush1.bf16.msra.mxu0 %v249
  %327 = vmatprep.subr.bf16.mxu0 0
  %328 = vmatpush1.bf16.msra.mxu0 %v250
  %329 = vmatprep.subr.bf16.mxu0 0
  %330 = vmatpush1.bf16.msra.mxu0 %v251
  %331 = vmatprep.subr.bf16.mxu0 0
  %332 = vmatpush1.bf16.msra.mxu0 %v252
  %333 = vmatprep.mubr.bf16.mxu0 %v102
  %334 = vmatmul.mubr.bf16.gmra.mrb[0].mxu0 %v101
  %v335 = vpop.f32.mrb[0].mxu0
  %v336 = vadd.f32 0.0, %v335
  %v337 = vpop.f32.mrb[0].mxu0
  %v338 = vpop.f32.mrb[0].mxu0
  %v339 = vpop.f32.mrb[0].mxu0
  %340 = vdwg.mxu0
  %341 = vmatprep.subr.bf16.mxu0 0
  %342 = vmatpush1.bf16.msra.mxu0 %v253
  %343 = vmatprep.subr.bf16.mxu0 0
  %344 = vmatpush1.bf16.msra.mxu0 %v254
  %345 = vmatprep.subr.bf16.mxu0 0
  %346 = vmatpush1.bf16.msra.mxu0 %v255
  %347 = vmatprep.subr.bf16.mxu0 0
  %348 = vmatpush1.bf16.msra.mxu0 %v256
  %349 = vmatprep.subr.bf16.mxu0 0
  %350 = vmatpush1.bf16.msra.mxu0 %v257
  %351 = vmatprep.subr.bf16.mxu0 0
  %352 = vmatpush1.bf16.msra.mxu0 %v258
  %353 = vmatprep.subr.bf16.mxu0 0
  %354 = vmatpush1.bf16.msra.mxu0 %v259
  %355 = vmatprep.subr.bf16.mxu0 0
  %356 = vmatpush1.bf16.msra.mxu0 %v260
  %357 = vmatprep.subr.bf16.mxu0 0
  %358 = vmatpush1.bf16.msra.mxu0 %v261
  %359 = vmatprep.subr.bf16.mxu0 0
  %360 = vmatpush1.bf16.msra.mxu0 %v262
  %361 = vmatprep.subr.bf16.mxu0 0
  %362 = vmatpush1.bf16.msra.mxu0 %v263
  %363 = vmatprep.subr.bf16.mxu0 0
  %364 = vmatpush1.bf16.msra.mxu0 %v264
  %365 = vmatprep.subr.bf16.mxu0 0
  %366 = vmatpush1.bf16.msra.mxu0 %v265
  %367 = vmatprep.subr.bf16.mxu0 0
  %368 = vmatpush1.bf16.msra.mxu0 %v266
  %369 = vmatprep.subr.bf16.mxu0 0
  %370 = vmatpush1.bf16.msra.mxu0 %v267
  %371 = vmatprep.subr.bf16.mxu0 0
  %372 = vmatpush1.bf16.msra.mxu0 %v268
  %373 = vmatprep.mubr.bf16.mxu0 %v104
  %374 = vmatmul.mubr.bf16.gmra.mrb[0].mxu0 %v103
  %v375 = vpop.f32.mrb[0].mxu0
  %v376 = vadd.f32 %v336, %v375
  %v377 = vpop.f32.mrb[0].mxu0
  %v378 = vpop.f32.mrb[0].mxu0
  %v379 = vpop.f32.mrb[0].mxu0
  %380 = vdwg.mxu0
  %v381 = vadd.f32 %v28, %v376
  %382 = vst [vmem:[#allocation2] sm:$0xff] %v381
  // Predicated region
  $region22: #{encoder_forward.13} parent=0 // pred_check
    %p383 = pneg %p17
  $region23: #{encoder_forward.13} parent=0 // pred_check_branch
    %385 = sbr.rel (%p383) target = $region25
  $region24: #{encoder_forward.13} parent=0 // pred_region
    %v386 = vld [vmem:[#allocation2] sm:$0xff]
    %v387 = vld [vmem:[%s2] sm:$0x1]
    %v389 = vlaneseq
    %v390 = vshrl.u32 %v389, 7
    %v391 = vsub.s32 0, %v390
    %v392 = vrot.slane %v387, %v391
    %v394 = vadd.f32 %v386, %v392
    %395 = vst [vmem:[%s3] sm:$0xff] %v394
    %v396 = vlaneseq
    %v397 = vshrl.u32 %v396, 7
    %s398 = smul.u32 0, 8
    %v399 = vstv %s398
    %v400 = vadd.s32 %v397, %v399
    %vm401 = vcmp.lt.s32.totalorder %v400, 8
    %v402 = vsel %vm401, 1, 0
    %v403 = vcvt.s32.f32 %v402
    %v404 = vmul.f32 %v394, %v403
    %v405 = vrot.slane %v404, 4
    %v406 = vadd.f32 %v404, %v405
    %v407 = vrot.slane %v406, 2
    %v408 = vadd.f32 %v406, %v407
    %v409 = vrot.slane %v408, 1
    %v410 = vadd.f32 %v408, %v409
    %v411 = vmul.f32 %v404, %v394
    %v412 = vrot.slane %v411, 4
    %v413 = vadd.f32 %v411, %v412
    %v414 = vrot.slane %v413, 2
    %v415 = vadd.f32 %v413, %v414
    %v416 = vrot.slane %v415, 1
    %v417 = vadd.f32 %v415, %v416
    %v418 = vld [vmem:[%s4] sm:$0x3]
    %vm419 = vcmask 1040384
    %v420 = vsel %vm419, %v410, %v417
    %v421 = vadd.f32 %v418, %v420
    %422 = vst [vmem:[%s4] sm:$0x3] %v421
  $region25: #{encoder_forward.13} parent=0 // pred_fallthru
    _
  // Predicated region
  $region26: #{encoder_forward.13} parent=0 // pred_check
    _
  $region27: #{encoder_forward.13} parent=0 // pred_check_branch
    %424 = sbr.rel (0) target = $region29
  $region28: #{encoder_forward.13} parent=0 // pred_region
    _
  $region29: #{encoder_forward.13} parent=0 // pred_fallthru
    _
  // Predicated region
  $region30: #{encoder_forward.13} parent=0 // pred_check
    _
  $region31: #{encoder_forward.13} parent=0 // pred_check_branch
    %426 = sbr.rel (0) target = $region33
  $region32: #{encoder_forward.13} parent=0 // pred_region
    _
  $region33: #{encoder_forward.13} parent=0 // pred_fallthru
    _
  // Predicated region
  $region34: #{encoder_forward.13} parent=0 // pred_check
    _
  $region35: #{encoder_forward.13} parent=0 // pred_check_branch
    %428 = sbr.rel (0) target = $region37
  $region36: #{encoder_forward.13} parent=0 // pred_region
    _
  $region37: #{encoder_forward.13} parent=0 // pred_fallthru
    _
  // Predicated region
  $region38: #{encoder_forward.13} parent=0 // pred_check
    _
  $region39: #{encoder_forward.13} parent=0 // pred_check_branch
    %430 = sbr.rel (0) target = $region41
  $region40: #{encoder_forward.13} parent=0 // pred_region
    _
  $region41: #{encoder_forward.13} parent=0 // pred_fallthru
    _

// kernel: encoder_forward.15
$region0: #{encoder_forward.15}
  #allocation0 [shape = 'u32[]', space=smem, size = 0x4, offset = 0x4, fixed_abs, tag = 'smem constant byte address 0x4 - core index']
  #allocation1 [shape = 'u32[144,128]{1,0:T(1,128)}', space=vmem, size = 0x12000, scoped, tag = 'internal scratch']
  #allocation2 [shape = 'f32[8,128]{1,0:T(8,128)}', space=vmem, size = 0x1000, scoped, tag = 'scratch operand']
  %s0 = inlined_call_operand.vmem [shape: bf16[8,128], index: 0, kind: input, shape index: {}]
  %s1 = inlined_call_operand.vmem [shape: bf16[128,128], index: 1, kind: input, shape index: {}]
  %s2 = inlined_call_operand.vmem [shape: f32[1,128], index: 2, kind: input, shape index: {}]
  %s3 = inlined_call_operand.vmem [shape: f32[8,128], index: 3, kind: output, shape index: {0}]
  %s4 = inlined_call_operand.vmem [shape: f32[2,128], index: 4, kind: output, shape index: {1}]
  %5 = xla_tuple %s3, %s4
  %s6 = sld [smem:[#allocation0]]
  $region42: #{encoder_forward.15} parent=0
    _
  %s8 = ssub.s32 1, %s6
  %s9 = scalar_select 0, %s8, %s6
  // Predicated region
  $region2: #{encoder_forward.15} parent=0 // pred_check
    _
  $region3: #{encoder_forward.15} parent=0 // pred_check_branch
    %11 = sbr.rel (0) target = $region5
  $region4: #{encoder_forward.15} parent=0 // pred_region
    _
  $region5: #{encoder_forward.15} parent=0 // pred_fallthru
    _
  // Predicated region
  $region6: #{encoder_forward.15} parent=0 // pred_check
    _
  $region7: #{encoder_forward.15} parent=0 // pred_check_branch
    %13 = sbr.rel (0) target = $region9
  $region8: #{encoder_forward.15} parent=0 // pred_region
    _
  $region9: #{encoder_forward.15} parent=0 // pred_fallthru
    _
  // Predicated region
  $region10: #{encoder_forward.15} parent=0 // pred_check
    _
  $region11: #{encoder_forward.15} parent=0 // pred_check_branch
    %15 = sbr.rel (0) target = $region13
  $region12: #{encoder_forward.15} parent=0 // pred_region
    _
  $region13: #{encoder_forward.15} parent=0 // pred_fallthru
    _
  %p17 = scmp.eq.s32.totalorder 0, 0
  // Predicated region
  $region14: #{encoder_forward.15} parent=0 // pred_check
    %p18 = pneg %p17
  $region15: #{encoder_forward.15} parent=0 // pred_check_branch
    %20 = sbr.rel (%p18) target = $region17
  $region16: #{encoder_forward.15} parent=0 // pred_region
    %21 = vst [vmem:[#allocation2] sm:$0xff] 0.0
  $region17: #{encoder_forward.15} parent=0 // pred_fallthru
    _
  %p22 = scmp.eq.s32.totalorder 0, 0
  %p23 = pnand %p22, %p17
  %p24 = pneg %p23
  // Predicated region
  $region18: #{encoder_forward.15} parent=0 // pred_check
    _
  $region19: #{encoder_forward.15} parent=0 // pred_check_branch
    %26 = sbr.rel (%p23) target = $region21
  $region20: #{encoder_forward.15} parent=0 // pred_region
    %27 = vst [vmem:[%s4] sm:$0x3] 0.0
  $region21: #{encoder_forward.15} parent=0 // pred_fallthru
    _
  %v28 = vld [vmem:[#allocation2] sm:$0xff]
  %v29 = vld [vmem:[%s0] sm:$0xf]
  %v30 = vld [vmem:[%s1] sm:$0xf]
  %v31 = vld [vmem:[%s1 + $0x4] sm:$0xf]
  %v32 = vld [vmem:[%s1 + $0x8] sm:$0xf]
  %v33 = vld [vmem:[%s1 + $0xc] sm:$0xf]
  %v34 = vld [vmem:[%s1 + $0x10] sm:$0xf]
  %v35 = vld [vmem:[%s1 + $0x14] sm:$0xf]
  %v36 = vld [vmem:[%s1 + $0x18] sm:$0xf]
  %v37 = vld [vmem:[%s1 + $0x1c] sm:$0xf]
  %v38 = vld [vmem:[%s1 + $0x20] sm:$0xf]
  %v39 = vld [vmem:[%s1 + $0x24] sm:$0xf]
  %v40 = vld [vmem:[%s1 + $0x28] sm:$0xf]
  %v41 = vld [vmem:[%s1 + $0x2c] sm:$0xf]
  %v42 = vld [vmem:[%s1 + $0x30] sm:$0xf]
  %v43 = vld [vmem:[%s1 + $0x34] sm:$0xf]
  %v44 = vld [vmem:[%s1 + $0x38] sm:$0xf]
  %v45 = vld [vmem:[%s1 + $0x3c] sm:$0xf]
  %v62 = vunpack.c.l.b16 %v30
  %v63 = vunpack.c.l.b16 %v31
  %v64 = vunpack.c.l.b16 %v32
  %v65 = vunpack.c.l.b16 %v33
  %v66 = vunpack.c.l.b16 %v34
  %v67 = vunpack.c.l.b16 %v35
  %v68 = vunpack.c.l.b16 %v36
  %v69 = vunpack.c.l.b16 %v37
  %v70 = vunpack.c.l.b16 %v38
  %v71 = vunpack.c.l.b16 %v39
  %v72 = vunpack.c.l.b16 %v40
  %v73 = vunpack.c.l.b16 %v41
  %v74 = vunpack.c.l.b16 %v42
  %v75 = vunpack.c.l.b16 %v43
  %v76 = vunpack.c.l.b16 %v44
  %v77 = vunpack.c.l.b16 %v45
  %v78 = vpack.c.b16 %v63, %v62
  %v79 = vpack.c.b16 %v65, %v64
  %v80 = vpack.c.b16 %v67, %v66
  %v81 = vpack.c.b16 %v69, %v68
  %v82 = vpack.c.b16 %v71, %v70
  %v83 = vpack.c.b16 %v73, %v72
  %v84 = vpack.c.b16 %v75, %v74
  %v85 = vpack.c.b16 %v77, %v76
  %94 = vmatprep.subr.bf16.mxu0 0
  %95 = vmatpush1.bf16.msra.mxu0 %v78
  %96 = vmatprep.subr.bf16.mxu0 0
  %97 = vmatpush1.bf16.msra.mxu0 %v79
  %98 = vmatprep.subr.bf16.mxu0 0
  %99 = vmatpush1.bf16.msra.mxu0 %v80
  %100 = vmatprep.subr.bf16.mxu0 0
  %101 = vmatpush1.bf16.msra.mxu0 %v81
  %102 = vmatprep.subr.bf16.mxu0 0
  %103 = vmatpush1.bf16.msra.mxu0 %v82
  %104 = vmatprep.subr.bf16.mxu0 0
  %105 = vmatpush1.bf16.msra.mxu0 %v83
  %106 = vmatprep.subr.bf16.mxu0 0
  %107 = vmatpush1.bf16.msra.mxu0 %v84
  %108 = vmatprep.subr.bf16.mxu0 0
  %109 = vmatpush1.bf16.msra.mxu0 %v85
  %110 = vmatprep.subr.bf16.mxu0 0
  %111 = vmatpush1.bf16.msra.mxu0 0
  %112 = vmatprep.subr.bf16.mxu0 0
  %113 = vmatpush1.bf16.msra.mxu0 0
  %114 = vmatprep.subr.bf16.mxu0 0
  %115 = vmatpush1.bf16.msra.mxu0 0
  %116 = vmatprep.subr.bf16.mxu0 0
  %117 = vmatpush1.bf16.msra.mxu0 0
  %118 = vmatprep.subr.bf16.mxu0 0
  %119 = vmatpush1.bf16.msra.mxu0 0
  %120 = vmatprep.subr.bf16.mxu0 0
  %121 = vmatpush1.bf16.msra.mxu0 0
  %122 = vmatprep.subr.bf16.mxu0 0
  %123 = vmatpush1.bf16.msra.mxu0 0
  %124 = vmatprep.subr.bf16.mxu0 0
  %125 = vmatpush1.bf16.msra.mxu0 0
  %126 = vmatprep.mubr.bf16.mxu0 0
  %127 = vmatmul.mubr.bf16.gmra.mrb[0].mxu0 %v29
  %v128 = vpop.f32.mrb[0].mxu0
  %v129 = vadd.f32 0.0, %v128
  %v130 = vpop.f32.mrb[0].mxu0
  %v131 = vpop.f32.mrb[0].mxu0
  %v132 = vpop.f32.mrb[0].mxu0
  %133 = vdwg.mxu0
  %v134 = vadd.f32 %v28, %v129
  %135 = vst [vmem:[#allocation2] sm:$0xff] %v134
  // Predicated region
  $region22: #{encoder_forward.15} parent=0 // pred_check
    %p136 = pneg %p17
  $region23: #{encoder_forward.15} parent=0 // pred_check_branch
    %138 = sbr.rel (%p136) target = $region25
  $region24: #{encoder_forward.15} parent=0 // pred_region
    %v139 = vld [vmem:[#allocation2] sm:$0xff]
    %v140 = vld [vmem:[%s2] sm:$0x1]
    %v142 = vlaneseq
    %v143 = vshrl.u32 %v142, 7
    %v144 = vsub.s32 0, %v143
    %v145 = vrot.slane %v140, %v144
    %v147 = vadd.f32 %v139, %v145
    %148 = vst [vmem:[%s3] sm:$0xff] %v147
    %v149 = vlaneseq
    %v150 = vshrl.u32 %v149, 7
    %s151 = smul.u32 0, 8
    %v152 = vstv %s151
    %v153 = vadd.s32 %v150, %v152
    %vm154 = vcmp.lt.s32.totalorder %v153, 2
    %v155 = vsel %vm154, 1, 0
    %v156 = vcvt.s32.f32 %v155
    %v157 = vmul.f32 %v147, %v156
    %v158 = vrot.slane %v157, 4
    %v159 = vadd.f32 %v157, %v158
    %v160 = vrot.slane %v159, 2
    %v161 = vadd.f32 %v159, %v160
    %v162 = vrot.slane %v161, 1
    %v163 = vadd.f32 %v161, %v162
    %v164 = vmul.f32 %v157, %v147
    %v165 = vrot.slane %v164, 4
    %v166 = vadd.f32 %v164, %v165
    %v167 = vrot.slane %v166, 2
    %v168 = vadd.f32 %v166, %v167
    %v169 = vrot.slane %v168, 1
    %v170 = vadd.f32 %v168, %v169
    %v171 = vld [vmem:[%s4] sm:$0x3]
    %vm172 = vcmask 1040384
    %v173 = vsel %vm172, %v163, %v170
    %v174 = vadd.f32 %v171, %v173
    %175 = vst [vmem:[%s4] sm:$0x3] %v174
  $region25: #{encoder_forward.15} parent=0 // pred_fallthru
    _
  // Predicated region
  $region26: #{encoder_forward.15} parent=0 // pred_check
    _
  $region27: #{encoder_forward.15} parent=0 // pred_check_branch
    %177 = sbr.rel (0) target = $region29
  $region28: #{encoder_forward.15} parent=0 // pred_region
    _
  $region29: #{encoder_forward.15} parent=0 // pred_fallthru
    _
  // Predicated region
  $region30: #{encoder_forward.15} parent=0 // pred_check
    _
  $region31: #{encoder_forward.15} parent=0 // pred_check_branch
    %179 = sbr.rel (0) target = $region33
  $region32: #{encoder_forward.15} parent=0 // pred_region
    _
  $region33: #{encoder_forward.15} parent=0 // pred_fallthru
    _
  // Predicated region
  $region34: #{encoder_forward.15} parent=0 // pred_check
    _
  $region35: #{encoder_forward.15} parent=0 // pred_check_branch
    %181 = sbr.rel (0) target = $region37
  $region36: #{encoder_forward.15} parent=0 // pred_region
    _
  $region37: #{encoder_forward.15} parent=0 // pred_fallthru
    _
  // Predicated region
  $region38: #{encoder_forward.15} parent=0 // pred_check
    _
  $region39: #{encoder_forward.15} parent=0 // pred_check_branch
    %183 = sbr.rel (0) target = $region41
  $region40: #{encoder_forward.15} parent=0 // pred_region
    _
  $region41: #{encoder_forward.15} parent=0 // pred_fallthru
    _

// kernel: encoder_forward.17
$region0: #{encoder_forward.17}
  #allocation0 [shape = 'u32[]', space=smem, size = 0x4, offset = 0x4, fixed_abs, tag = 'smem constant byte address 0x4 - core index']
  #allocation1 [shape = 'u32[144,128]{1,0:T(1,128)}', space=vmem, size = 0x12000, scoped, tag = 'internal scratch']
  #allocation2 [shape = 'f32[8,128]{1,0:T(8,128)}', space=vmem, size = 0x1000, scoped, tag = 'scratch operand']
  %s0 = inlined_call_operand.vmem [shape: bf16[8,128], index: 0, kind: input, shape index: {}]
  %s1 = inlined_call_operand.vmem [shape: bf16[128,128], index: 1, kind: input, shape index: {}]
  %s2 = inlined_call_operand.vmem [shape: f32[1,128], index: 2, kind: input, shape index: {}]
  %s3 = inlined_call_operand.vmem [shape: f32[8,128], index: 3, kind: output, shape index: {0}]
  %s4 = inlined_call_operand.hbm [shape: f32[2,128], index: 4, kind: output, shape index: {1}]
  %5 = xla_tuple %s3, %s4
  %s6 = sld [smem:[#allocation0]]
  $region42: #{encoder_forward.17} parent=0
    _
  %s8 = ssub.s32 1, %s6
  %s9 = scalar_select 0, %s8, %s6
  $region1: #{encoder_forward.17} parent=0
    #allocation3 [shape = 'u8[1024]{0}', space=vmem, size = 0x400, scoped, tag = 'output window, operand 1, single buffered']
    #allocation4 [shape = 's32[1]{0}', space=sflag, size = 0x4, scoped, tag = 'scoped memory for encoder_forward.17']
    %10 = vsyncpa [#allocation4], 0
    // Predicated region
    $region2: #{encoder_forward.17} parent=1 // pred_check
      _
    $region3: #{encoder_forward.17} parent=1 // pred_check_branch
      %12 = sbr.rel (0) target = $region5
    $region4: #{encoder_forward.17} parent=1 // pred_region
      _
    $region5: #{encoder_forward.17} parent=1 // pred_fallthru
      _
    // Predicated region
    $region6: #{encoder_forward.17} parent=1 // pred_check
      _
    $region7: #{encoder_forward.17} parent=1 // pred_check_branch
      %14 = sbr.rel (0) target = $region9
    $region8: #{encoder_forward.17} parent=1 // pred_region
      _
    $region9: #{encoder_forward.17} parent=1 // pred_fallthru
      _
    // Predicated region
    $region10: #{encoder_forward.17} parent=1 // pred_check
      _
    $region11: #{encoder_forward.17} parent=1 // pred_check_branch
      %16 = sbr.rel (0) target = $region13
    $region12: #{encoder_forward.17} parent=1 // pred_region
      _
    $region13: #{encoder_forward.17} parent=1 // pred_fallthru
      _
    %p18 = scmp.eq.s32.totalorder 0, 0
    // Predicated region
    $region14: #{encoder_forward.17} parent=1 // pred_check
      %p19 = pneg %p18
    $region15: #{encoder_forward.17} parent=1 // pred_check_branch
      %21 = sbr.rel (%p19) target = $region17
    $region16: #{encoder_forward.17} parent=1 // pred_region
      %22 = vst [vmem:[#allocation2] sm:$0xff] 0.0
    $region17: #{encoder_forward.17} parent=1 // pred_fallthru
      _
    %p23 = scmp.eq.s32.totalorder 0, 0
    %p24 = pnand %p23, %p18
    %p25 = pneg %p24
    // Predicated region
    $region18: #{encoder_forward.17} parent=1 // pred_check
      _
    $region19: #{encoder_forward.17} parent=1 // pred_check_branch
      %27 = sbr.rel (%p24) target = $region21
    $region20: #{encoder_forward.17} parent=1 // pred_region
      %28 = vst [vmem:[#allocation3] sm:$0x3] 0.0
    $region21: #{encoder_forward.17} parent=1 // pred_fallthru
      _
    %v29 = vld [vmem:[#allocation2] sm:$0xff]
    %v30 = vld [vmem:[%s0] sm:$0xf]
    %v31 = vld [vmem:[%s1] sm:$0xf]
    %v32 = vld [vmem:[%s1 + $0x4] sm:$0xf]
    %v33 = vld [vmem:[%s1 + $0x8] sm:$0xf]
    %v34 = vld [vmem:[%s1 + $0xc] sm:$0xf]
    %v35 = vld [vmem:[%s1 + $0x10] sm:$0xf]
    %v36 = vld [vmem:[%s1 + $0x14] sm:$0xf]
    %v37 = vld [vmem:[%s1 + $0x18] sm:$0xf]
    %v38 = vld [vmem:[%s1 + $0x1c] sm:$0xf]
    %v39 = vld [vmem:[%s1 + $0x20] sm:$0xf]
    %v40 = vld [vmem:[%s1 + $0x24] sm:$0xf]
    %v41 = vld [vmem:[%s1 + $0x28] sm:$0xf]
    %v42 = vld [vmem:[%s1 + $0x2c] sm:$0xf]
    %v43 = vld [vmem:[%s1 + $0x30] sm:$0xf]
    %v44 = vld [vmem:[%s1 + $0x34] sm:$0xf]
    %v45 = vld [vmem:[%s1 + $0x38] sm:$0xf]
    %v46 = vld [vmem:[%s1 + $0x3c] sm:$0xf]
    %v63 = vunpack.c.l.b16 %v31
    %v64 = vunpack.c.l.b16 %v32
    %v65 = vunpack.c.l.b16 %v33
    %v66 = vunpack.c.l.b16 %v34
    %v67 = vunpack.c.l.b16 %v35
    %v68 = vunpack.c.l.b16 %v36
    %v69 = vunpack.c.l.b16 %v37
    %v70 = vunpack.c.l.b16 %v38
    %v71 = vunpack.c.l.b16 %v39
    %v72 = vunpack.c.l.b16 %v40
    %v73 = vunpack.c.l.b16 %v41
    %v74 = vunpack.c.l.b16 %v42
    %v75 = vunpack.c.l.b16 %v43
    %v76 = vunpack.c.l.b16 %v44
    %v77 = vunpack.c.l.b16 %v45
    %v78 = vunpack.c.l.b16 %v46
    %v79 = vpack.c.b16 %v64, %v63
    %v80 = vpack.c.b16 %v66, %v65
    %v81 = vpack.c.b16 %v68, %v67
    %v82 = vpack.c.b16 %v70, %v69
    %v83 = vpack.c.b16 %v72, %v71
    %v84 = vpack.c.b16 %v74, %v73
    %v85 = vpack.c.b16 %v76, %v75
    %v86 = vpack.c.b16 %v78, %v77
    %95 = vmatprep.subr.bf16.mxu0 0
    %96 = vmatpush1.bf16.msra.mxu0 %v79
    %97 = vmatprep.subr.bf16.mxu0 0
    %98 = vmatpush1.bf16.msra.mxu0 %v80
    %99 = vmatprep.subr.bf16.mxu0 0
    %100 = vmatpush1.bf16.msra.mxu0 %v81
    %101 = vmatprep.subr.bf16.mxu0 0
    %102 = vmatpush1.bf16.msra.mxu0 %v82
    %103 = vmatprep.subr.bf16.mxu0 0
    %104 = vmatpush1.bf16.msra.mxu0 %v83
    %105 = vmatprep.subr.bf16.mxu0 0
    %106 = vmatpush1.bf16.msra.mxu0 %v84
    %107 = vmatprep.subr.bf16.mxu0 0
    %108 = vmatpush1.bf16.msra.mxu0 %v85
    %109 = vmatprep.subr.bf16.mxu0 0
    %110 = vmatpush1.bf16.msra.mxu0 %v86
    %111 = vmatprep.subr.bf16.mxu0 0
    %112 = vmatpush1.bf16.msra.mxu0 0
    %113 = vmatprep.subr.bf16.mxu0 0
    %114 = vmatpush1.bf16.msra.mxu0 0
    %115 = vmatprep.subr.bf16.mxu0 0
    %116 = vmatpush1.bf16.msra.mxu0 0
    %117 = vmatprep.subr.bf16.mxu0 0
    %118 = vmatpush1.bf16.msra.mxu0 0
    %119 = vmatprep.subr.bf16.mxu0 0
    %120 = vmatpush1.bf16.msra.mxu0 0
    %121 = vmatprep.subr.bf16.mxu0 0
    %122 = vmatpush1.bf16.msra.mxu0 0
    %123 = vmatprep.subr.bf16.mxu0 0
    %124 = vmatpush1.bf16.msra.mxu0 0
    %125 = vmatprep.subr.bf16.mxu0 0
    %126 = vmatpush1.bf16.msra.mxu0 0
    %127 = vmatprep.mubr.bf16.mxu0 0
    %128 = vmatmul.mubr.bf16.gmra.mrb[0].mxu0 %v30
    %v129 = vpop.f32.mrb[0].mxu0
    %v130 = vadd.f32 0.0, %v129
    %v131 = vpop.f32.mrb[0].mxu0
    %v132 = vpop.f32.mrb[0].mxu0
    %v133 = vpop.f32.mrb[0].mxu0
    %134 = vdwg.mxu0
    %v135 = vadd.f32 %v29, %v130
    %136 = vst [vmem:[#allocation2] sm:$0xff] %v135
    // Predicated region
    $region22: #{encoder_forward.17} parent=1 // pred_check
      %p137 = pneg %p18
    $region23: #{encoder_forward.17} parent=1 // pred_check_branch
      %139 = sbr.rel (%p137) target = $region25
    $region24: #{encoder_forward.17} parent=1 // pred_region
      %v140 = vld [vmem:[#allocation2] sm:$0xff]
      %v141 = vld [vmem:[%s2] sm:$0x1]
      %v143 = vlaneseq
      %v144 = vshrl.u32 %v143, 7
      %v145 = vsub.s32 0, %v144
      %v146 = vrot.slane %v141, %v145
      %v148 = vadd.f32 %v140, %v146
      %149 = vst [vmem:[%s3] sm:$0xff] %v148
      %v150 = vlaneseq
      %v151 = vshrl.u32 %v150, 7
      %s152 = smul.u32 0, 8
      %v153 = vstv %s152
      %v154 = vadd.s32 %v151, %v153
      %vm155 = vcmp.lt.s32.totalorder %v154, 2
      %v156 = vsel %vm155, 1, 0
      %v157 = vcvt.s32.f32 %v156
      %v158 = vmul.f32 %v148, %v157
      %v159 = vrot.slane %v158, 4
      %v160 = vadd.f32 %v158, %v159
      %v161 = vrot.slane %v160, 2
      %v162 = vadd.f32 %v160, %v161
      %v163 = vrot.slane %v162, 1
      %v164 = vadd.f32 %v162, %v163
      %v165 = vmul.f32 %v158, %v148
      %v166 = vrot.slane %v165, 4
      %v167 = vadd.f32 %v165, %v166
      %v168 = vrot.slane %v167, 2
      %v169 = vadd.f32 %v167, %v168
      %v170 = vrot.slane %v169, 1
      %v171 = vadd.f32 %v169, %v170
      %v172 = vld [vmem:[#allocation3] sm:$0x3]
      %vm173 = vcmask 1040384
      %v174 = vsel %vm173, %v164, %v171
      %v175 = vadd.f32 %v172, %v174
      %176 = vst [vmem:[#allocation3] sm:$0x3] %v175
    $region25: #{encoder_forward.17} parent=1 // pred_fallthru
      _
    // Predicated region
    $region26: #{encoder_forward.17} parent=1 // pred_check
      _
    $region27: #{encoder_forward.17} parent=1 // pred_check_branch
      %178 = sbr.rel (0) target = $region29
    $region28: #{encoder_forward.17} parent=1 // pred_region
      _
    $region29: #{encoder_forward.17} parent=1 // pred_fallthru
      _
    // Predicated region
    $region30: #{encoder_forward.17} parent=1 // pred_check
      _
    $region31: #{encoder_forward.17} parent=1 // pred_check_branch
      %180 = sbr.rel (0) target = $region33
    $region32: #{encoder_forward.17} parent=1 // pred_region
      %s182 = ssub.s32 32, 32
      %183 = vsyncadd [#allocation4], %s182
      %s185 = sshll.u32 [#allocation3], 4
      %s186 = int_to_ptr.vmem [resolvable:$true] %s185
      %188 = dma.vmem_to_hbm [thread:$0]  %s186, 32, %s4, [#allocation4]
    $region33: #{encoder_forward.17} parent=1 // pred_fallthru
      _
    // Predicated region
    $region34: #{encoder_forward.17} parent=1 // pred_check
      _
    $region35: #{encoder_forward.17} parent=1 // pred_check_branch
      %190 = sbr.rel (0) target = $region37
    $region36: #{encoder_forward.17} parent=1 // pred_region
      _
    $region37: #{encoder_forward.17} parent=1 // pred_fallthru
      _
    // Predicated region
    $region38: #{encoder_forward.17} parent=1 // pred_check
      _
    $region39: #{encoder_forward.17} parent=1 // pred_check_branch
      %192 = sbr.rel (0) target = $region41
    $region40: #{encoder_forward.17} parent=1 // pred_region
      %193 = dma.done [#allocation4], 32
    $region41: #{encoder_forward.17} parent=1 // pred_fallthru
      _
    %194 = vsyncpa [#allocation4], 1

</llo_original>
